<compile_context>
chip_gen: v5e
topology: v5e:2x2
jax: 0.10.0
libtpu: 0.0.40
codegen_flags: <defaults>
</compile_context>

<pallas_src>
import jax
import jax.numpy as jnp
from jax import lax
from jax.experimental import pallas as pl
from jax.experimental.pallas import tpu as pltpu

EPS = 1e-5  # PyTorch BatchNorm2d default eps

# Above the 16/32 MiB scoped defaults on v5e/v6e/v7x, below v7x's 64 MiB.
_VMEM_LIMIT = 48 * 1024 * 1024
_COMPILER_PARAMS = pltpu.CompilerParams(
    dimension_semantics=("parallel",),
    vmem_limit_bytes=_VMEM_LIMIT,
)


# ------------------------- in-kernel 3x3 conv helper --------------------------

def _conv3x3_from_pad(pad_ref, w_ref, H, W, C, P, concat):
    """3x3 stride-1 conv reading 9 shifted windows from a zero-padded
    (H+2, W+2, C) bf16 VMEM scratch.

    w_ref: (9*C, P) bf16 with tap t = ky*3 + kx occupying rows [t*C, (t+1)*C).
    Returns the (H*W, P) f32 accumulator.
    """
    if concat:
        # Small C: pack all 9 taps along the lane/K axis -> one big-K matmul.
        wins = []
        for ky in range(3):
            for kx in range(3):
                win = pad_ref[pl.ds(ky, H), pl.ds(kx, W), :]     # (H, W, C) bf16
                wins.append(win.reshape(H * W, C))
        cat = jnp.concatenate(wins, axis=-1)                     # (HW, 9C) bf16
        return jnp.dot(cat, w_ref[...], preferred_element_type=jnp.float32)

    # Large C: 9 per-tap matmuls accumulated in f32 (K=C already fills the MXU).
    acc = jnp.zeros((H * W, P), jnp.float32)
    for ky in range(3):
        for kx in range(3):
            t = ky * 3 + kx
            win = pad_ref[pl.ds(ky, H), pl.ds(kx, W), :].reshape(H * W, C)
            acc = acc + jnp.dot(win, w_ref[pl.ds(t * C, C), :],
                                preferred_element_type=jnp.float32)
    return acc


# ---------------------------------- kernel ------------------------------------

def _make_kernel(H, W, Cin, P, stride, has_proj, concat1, concat2):
    HW = H * W

    def kernel(*refs):
        i = 0
        x_ref = refs[i]; i += 1          # (HW, Cin) f32
        s1_ref = refs[i]; i += 1         # (1, Cin)  f32   bn1 scale
        t1_ref = refs[i]; i += 1         # (1, Cin)  f32   bn1 shift
        w1_ref = refs[i]; i += 1         # (9*Cin, P) bf16 conv1 (bn2 folded)
        b1_ref = refs[i]; i += 1         # (1, P)    f32   conv1 bias (+bn2)
        w2_ref = refs[i]; i += 1         # (9*P, P)  bf16  conv2
        b2_ref = refs[i]; i += 1         # (1, P)    f32   conv2 (+shortcut) bias
        wsc_ref = None
        xs_ref = None
        sel_ref = None
        if has_proj:
            wsc_ref = refs[i]; i += 1    # (Cin, P) bf16   1x1 projection
        if stride != 1:
            xs_ref = refs[i]; i += 1     # (HoWo, Cin) bf16 pre-strided x
            sel_ref = refs[i]; i += 1    # (HoWo, HW) bf16  0/1 row selection
        o_ref = refs[i]; i += 1          # (HW or HoWo, P) f32
        xpad_ref = refs[i]; i += 1       # scratch (H+2, W+2, Cin) bf16
        a2pad_ref = refs[i]; i += 1      # scratch (H+2, W+2, P)   bf16

        # ---- stage 1: a1 = relu(bn1(x)), written into zero-padded scratch ----
        a1 = jnp.maximum(x_ref[...] * s1_ref[...] + t1_ref[...], 0.0)
        a1 = a1.astype(jnp.bfloat16)                              # (HW, Cin)
        xpad_ref[...] = jnp.zeros((H + 2, W + 2, Cin), jnp.bfloat16)
        xpad_ref[pl.ds(1, H), pl.ds(1, W), :] = a1.reshape(H, W, Cin)

        # ---- stage 2: a2 = relu(bn2(conv1(a1)))  (bn2 folded into w1/b1) -----
        # Dropout is identity in eval mode.
        acc1 = _conv3x3_from_pad(xpad_ref, w1_ref, H, W, Cin, P, concat1)
        a2 = jnp.maximum(acc1 + b1_ref[...], 0.0).astype(jnp.bfloat16)
        # Interior-only write keeps the conv2 zero padding exact (border stays 0).
        a2pad_ref[...] = jnp.zeros((H + 2, W + 2, P), jnp.bfloat16)
        a2pad_ref[pl.ds(1, H), pl.ds(1, W), :] = a2.reshape(H, W, P)

        # ---- stage 3: conv2(stride) + shortcut, fused -------------------------
        acc2 = _conv3x3_from_pad(a2pad_ref, w2_ref, H, W, P, P, concat2)

        if stride != 1:
            # TODO(synk): replace the 0/1 selection matmul with strided
            # pl.ds(..., stride) window reads of a2pad (zero-matmul downsample).
            acc_s = jnp.dot(sel_ref[...], acc2.astype(jnp.bfloat16),
                            preferred_element_type=jnp.float32)
            sc = jnp.dot(xs_ref[...], wsc_ref[...],
                         preferred_element_type=jnp.float32)
            o_ref[...] = acc_s + sc + b2_ref[...]
        else:
            if has_proj:
                sc = jnp.dot(x_ref[...].astype(jnp.bfloat16), wsc_ref[...],
                             preferred_element_type=jnp.float32)
            else:
                sc = x_ref[...]                      # identity shortcut (Cin == P)
            o_ref[...] = acc2 + sc + b2_ref[...]

    return kernel


# ------------------------------- glue (plain JAX) ------------------------------

def _fold_bn(gamma, beta, mean, var):
    s = gamma / jnp.sqrt(var + EPS)
    return s, beta - mean * s


def _w_to_rows(w):
    # (O, I, 3, 3) -> (9*I, O); rows of tap t = ky*3+kx are [t*I, (t+1)*I).
    O, I, KH, KW = w.shape
    return jnp.transpose(w, (2, 3, 1, 0)).reshape(KH * KW * I, O)


def _sel_matrix(H, W, stride):
    # (Ho*Wo, H*W) 0/1 matrix selecting strided output rows in-kernel.
    Ho = (H - 1) // stride + 1
    Wo = (W - 1) // stride + 1
    r = jnp.arange(Ho * Wo)
    src = (r // Wo) * stride * W + (r % Wo) * stride
    return (src[:, None] == jnp.arange(H * W)[None, :])


def wide_basic_forward(x_nchw, p, in_planes, planes, stride, tap_concat=None):
    B, C, H, W = x_nchw.shape
    assert C == in_planes
    HW = H * W
    Ho = (H - 1) // stride + 1
    Wo = (W - 1) // stride + 1
    HoWo = Ho * Wo
    P = planes

    x = jnp.transpose(x_nchw, (0, 2, 3, 1)).astype(jnp.float32)   # NHWC
    x3d = x.reshape(B, HW, C)

    # BN folds (inference / running stats).
    s1, sh1 = _fold_bn(p['bn1_gamma'], p['bn1_beta'], p['bn1_mean'], p['bn1_var'])
    s2, sh2 = _fold_bn(p['bn2_gamma'], p['bn2_beta'], p['bn2_mean'], p['bn2_var'])

    # conv1 weights with bn2 folded per output channel; merged bias.
    w1 = (_w_to_rows(p['conv1_w']) * s2[None, :]).astype(jnp.bfloat16)
    b1 = (s2 * p['conv1_b'] + sh2).reshape(1, P).astype(jnp.float32)
    w2 = _w_to_rows(p['conv2_w']).astype(jnp.bfloat16)

    has_proj = 'sc_w' in p
    b2 = (p['conv2_b'] + (p['sc_b'] if has_proj else 0.0))
    b2 = b2.reshape(1, P).astype(jnp.float32)

    if tap_concat is None:
        concat1 = in_planes < 128
        concat2 = planes < 128
    else:
        concat1 = concat2 = bool(tap_concat)

    args = [x3d,
            s1.reshape(1, C).astype(jnp.float32),
            sh1.reshape(1, C).astype(jnp.float32),
            w1, b1, w2, b2]
    in_specs = [
        pl.BlockSpec((None, HW, C), lambda b: (b, 0, 0)),
        pl.BlockSpec((1, C), lambda b: (0, 0)),
        pl.BlockSpec((1, C), lambda b: (0, 0)),
        pl.BlockSpec((9 * C, P), lambda b: (0, 0)),
        pl.BlockSpec((1, P), lambda b: (0, 0)),
        pl.BlockSpec((9 * P, P), lambda b: (0, 0)),
        pl.BlockSpec((1, P), lambda b: (0, 0)),
    ]
    if has_proj:
        wsc = p['sc_w'][:, :, 0, 0].T.astype(jnp.bfloat16)        # (Cin, P)
        args.append(wsc)
        in_specs.append(pl.BlockSpec((C, P), lambda b: (0, 0)))
    if stride != 1:
        # Shortcut input pre-strided in plain JAX (tiny HBM footprint) so the
        # in-kernel selection matmul only touches the conv2 accumulator.
        xs = x[:, ::stride, ::stride, :].reshape(B, HoWo, C).astype(jnp.bfloat16)
        args.append(xs)
        in_specs.append(pl.BlockSpec((None, HoWo, C), lambda b: (b, 0, 0)))
        sel = _sel_matrix(H, W, stride).astype(jnp.bfloat16)
        args.append(sel)
        in_specs.append(pl.BlockSpec((HoWo, HW), lambda b: (0, 0)))

    out3d = pl.pallas_call(
        _make_kernel(H, W, C, P, stride, has_proj, concat1, concat2),
        out_shape=jax.ShapeDtypeStruct((B, HoWo, P), jnp.float32),
        grid=(B,),
        in_specs=in_specs,
        out_specs=pl.BlockSpec((None, HoWo, P), lambda b: (b, 0, 0)),
        scratch_shapes=[pltpu.VMEM((H + 2, W + 2, C), jnp.bfloat16),
                        pltpu.VMEM((H + 2, W + 2, P), jnp.bfloat16)],
        compiler_params=_COMPILER_PARAMS,
    )(*args)

    out = out3d.reshape(B, Ho, Wo, P)
    return jnp.transpose(out, (0, 3, 1, 2))                      # back to NCHW


# --------------------------------- reference -----------------------------------

def ref_forward(x, p, stride):
    def bn(y, g, b, m, v):
        return ((y - m[None, :, None, None]) / jnp.sqrt(v[None, :, None, None] + EPS)
                * g[None, :, None, None] + b[None, :, None, None])

    def conv(y, w, b, s, pad):
        out = lax.conv_general_dilated(
            y, w, (s, s), ((pad, pad), (pad, pad)),
            dimension_numbers=('NCHW', 'OIHW', 'NCHW'))
        return out + b[None, :, None, None]

    a = jax.nn.relu(bn(x, p['bn1_gamma'], p['bn1_beta'], p['bn1_mean'], p['bn1_var']))
    o = conv(a, p['conv1_w'], p['conv1_b'], 1, 1)
    o = jax.nn.relu(bn(o, p['bn2_gamma'], p['bn2_beta'], p['bn2_mean'], p['bn2_var']))
    o = conv(o, p['conv2_w'], p['conv2_b'], stride, 1)
    sc = conv(x, p['sc_w'], p['sc_b'], stride, 0) if 'sc_w' in p else x
    return o + sc


# ----------------------------------- params ------------------------------------

def init_params(key, in_planes, planes, stride):
    ks = jax.random.split(key, 14)
    p = {
        'bn1_gamma': 1.0 + 0.1 * jax.random.normal(ks[0], (in_planes,)),
        'bn1_beta':  0.1 * jax.random.normal(ks[1], (in_planes,)),
        'bn1_mean':  0.1 * jax.random.normal(ks[2], (in_planes,)),
        'bn1_var':   jnp.abs(1.0 + 0.1 * jax.random.normal(ks[3], (in_planes,))),
        'conv1_w':   0.1 * jax.random.normal(ks[4], (planes, in_planes, 3, 3)),
        'conv1_b':   0.05 * jax.random.normal(ks[5], (planes,)),
        'bn2_gamma': 1.0 + 0.1 * jax.random.normal(ks[6], (planes,)),
        'bn2_beta':  0.1 * jax.random.normal(ks[7], (planes,)),
        'bn2_mean':  0.1 * jax.random.normal(ks[8], (planes,)),
        'bn2_var':   jnp.abs(1.0 + 0.1 * jax.random.normal(ks[9], (planes,))),
        'conv2_w':   0.1 * jax.random.normal(ks[10], (planes, planes, 3, 3)),
        'conv2_b':   0.05 * jax.random.normal(ks[11], (planes,)),
    }
    if stride != 1 or in_planes != planes:
        p['sc_w'] = 0.1 * jax.random.normal(ks[12], (planes, in_planes, 1, 1))
        p['sc_b'] = 0.05 * jax.random.normal(ks[13], (planes,))
    return p


# ------------------------------------ main --------------------------------------

if __name__ == "__main__":
    key = jax.random.PRNGKey(0)
    B, Cin, H, W = 2, 4, 16, 16
    x = jax.random.normal(jax.random.fold_in(key, 1), (B, Cin, H, W),
                          dtype=jnp.float32)

    ok = True
    # (planes, stride, tap_concat):
    #   (8, 2, None)  projection shortcut + stride 2, tap-concat matmul path
    #   (8, 1, None)  projection shortcut, stride 1
    #   (4, 1, None)  identity shortcut
    #   (8, 2, False) per-tap (large-C) matmul path forced, to exercise it
    for planes, stride, tap_concat in [(8, 2, None), (8, 1, None),
                                       (4, 1, None), (8, 2, False)]:
        p = init_params(jax.random.fold_in(key, 1000 + 10 * planes + stride),
                        Cin, planes, stride)
        out = wide_basic_forward(x, p, Cin, planes, stride, tap_concat=tap_concat)
        out = jax.block_until_ready(out)
        ref = ref_forward(x, p, stride)
        # bf16 matmul inputs (f32 accumulation) -> loose-ish tolerance.
        if out.shape != ref.shape or not bool(
                jnp.allclose(out, ref, atol=3e-2, rtol=3e-2)):
            ok = False

    if ok:
        print("KERNEL_OK")
</pallas_src>

<mosaic_0001>
module attributes {stable_mosaic.version = 11 : i64} {
  func.func @kernel(%arg0: i32, %arg1: memref<1x256x4xf32, #tpu.memory_space<vmem>>, %arg2: memref<1x4xf32, #tpu.memory_space<vmem>>, %arg3: memref<1x4xf32, #tpu.memory_space<vmem>>, %arg4: memref<36x8xbf16, #tpu.memory_space<vmem>>, %arg5: memref<1x8xf32, #tpu.memory_space<vmem>>, %arg6: memref<72x8xbf16, #tpu.memory_space<vmem>>, %arg7: memref<1x8xf32, #tpu.memory_space<vmem>>, %arg8: memref<4x8xbf16, #tpu.memory_space<vmem>>, %arg9: memref<1x64x4xbf16, #tpu.memory_space<vmem>>, %arg10: memref<64x256xbf16, #tpu.memory_space<vmem>>, %arg11: memref<1x64x8xf32, #tpu.memory_space<vmem>>, %arg12: memref<18x18x4xbf16, #tpu.memory_space<vmem>>, %arg13: memref<18x18x8xbf16, #tpu.memory_space<vmem>>) attributes {dimension_semantics = [#tpu.dimension_semantics<parallel>], iteration_bounds = array<i64: 2>, scalar_prefetch = 0 : i64, scratch_operands = 2 : i64, tpu.core_type = #tpu.core_type<tc>, window_params = [{transform_indices = @transform_0, window_bounds = array<i64: 1, 256, 4>}, {pipeline_mode = #tpu.pipeline_mode<synchronous>, transform_indices = @transform_1, window_bounds = array<i64: 1, 4>}, {pipeline_mode = #tpu.pipeline_mode<synchronous>, transform_indices = @transform_2, window_bounds = array<i64: 1, 4>}, {pipeline_mode = #tpu.pipeline_mode<synchronous>, transform_indices = @transform_3, window_bounds = array<i64: 36, 8>}, {pipeline_mode = #tpu.pipeline_mode<synchronous>, transform_indices = @transform_4, window_bounds = array<i64: 1, 8>}, {pipeline_mode = #tpu.pipeline_mode<synchronous>, transform_indices = @transform_5, window_bounds = array<i64: 72, 8>}, {pipeline_mode = #tpu.pipeline_mode<synchronous>, transform_indices = @transform_6, window_bounds = array<i64: 1, 8>}, {pipeline_mode = #tpu.pipeline_mode<synchronous>, transform_indices = @transform_7, window_bounds = array<i64: 4, 8>}, {transform_indices = @transform_8, window_bounds = array<i64: 1, 64, 4>}, {pipeline_mode = #tpu.pipeline_mode<synchronous>, transform_indices = @transform_9, window_bounds = array<i64: 64, 256>}, {transform_indices = @transform_10, window_bounds = array<i64: 1, 64, 8>}]} {
    %c0 = arith.constant 0 : index
    %c0_0 = arith.constant 0 : index
    %c0_1 = arith.constant 0 : index
    %0 = vector.load %arg1[%c0, %c0_0, %c0_1] : memref<1x256x4xf32, #tpu.memory_space<vmem>>, vector<1x256x4xf32>
    %1 = vector.shape_cast %0 : vector<1x256x4xf32> to vector<256x4xf32>
    %c0_2 = arith.constant 0 : index
    %c0_3 = arith.constant 0 : index
    %2 = vector.load %arg2[%c0_2, %c0_3] : memref<1x4xf32, #tpu.memory_space<vmem>>, vector<1x4xf32>
    %3 = vector.broadcast %2 : vector<1x4xf32> to vector<256x4xf32>
    %4 = arith.mulf %1, %3 : vector<256x4xf32>
    %c0_4 = arith.constant 0 : index
    %c0_5 = arith.constant 0 : index
    %5 = vector.load %arg3[%c0_4, %c0_5] : memref<1x4xf32, #tpu.memory_space<vmem>>, vector<1x4xf32>
    %6 = vector.broadcast %5 : vector<1x4xf32> to vector<256x4xf32>
    %7 = arith.addf %4, %6 : vector<256x4xf32>
    %cst = arith.constant 0.000000e+00 : f32
    %8 = vector.broadcast %cst : f32 to vector<256x4xf32>
    %9 = arith.maximumf %7, %8 : vector<256x4xf32>
    %10 = arith.truncf %9 : vector<256x4xf32> to vector<256x4xbf16>
    %cst_6 = arith.constant 0.000000e+00 : bf16
    %11 = vector.broadcast %cst_6 : bf16 to vector<18x18x4xbf16>
    %c0_7 = arith.constant 0 : index
    %c0_8 = arith.constant 0 : index
    %c0_9 = arith.constant 0 : index
    %12 = vector.load %arg12[%c0_7, %c0_8, %c0_9] : memref<18x18x4xbf16, #tpu.memory_space<vmem>>, vector<18x18x4xbf16>
    tpu.vector_store %arg12[%c0_7, %c0_8, %c0_9], %11 {strides = array<i32>} : memref<18x18x4xbf16, #tpu.memory_space<vmem>>, vector<18x18x4xbf16>,
    %13 = vector.shape_cast %10 : vector<256x4xbf16> to vector<16x16x4xbf16>
    %c1 = arith.constant 1 : index
    %c1_10 = arith.constant 1 : index
    %c0_11 = arith.constant 0 : index
    %14 = vector.load %arg12[%c1, %c1_10, %c0_11] : memref<18x18x4xbf16, #tpu.memory_space<vmem>>, vector<16x16x4xbf16>
    tpu.vector_store %arg12[%c1, %c1_10, %c0_11], %13 {strides = array<i32>} : memref<18x18x4xbf16, #tpu.memory_space<vmem>>, vector<16x16x4xbf16>,
    %c0_12 = arith.constant 0 : index
    %c0_13 = arith.constant 0 : index
    %c0_14 = arith.constant 0 : index
    %15 = vector.load %arg12[%c0_12, %c0_13, %c0_14] : memref<18x18x4xbf16, #tpu.memory_space<vmem>>, vector<16x16x4xbf16>
    %16 = vector.shape_cast %15 : vector<16x16x4xbf16> to vector<256x4xbf16>
    %c0_15 = arith.constant 0 : index
    %c1_16 = arith.constant 1 : index
    %c0_17 = arith.constant 0 : index
    %17 = vector.load %arg12[%c0_15, %c1_16, %c0_17] : memref<18x18x4xbf16, #tpu.memory_space<vmem>>, vector<16x16x4xbf16>
    %18 = vector.shape_cast %17 : vector<16x16x4xbf16> to vector<256x4xbf16>
    %c0_18 = arith.constant 0 : index
    %c2 = arith.constant 2 : index
    %c0_19 = arith.constant 0 : index
    %19 = vector.load %arg12[%c0_18, %c2, %c0_19] : memref<18x18x4xbf16, #tpu.memory_space<vmem>>, vector<16x16x4xbf16>
    %20 = vector.shape_cast %19 : vector<16x16x4xbf16> to vector<256x4xbf16>
    %c1_20 = arith.constant 1 : index
    %c0_21 = arith.constant 0 : index
    %c0_22 = arith.constant 0 : index
    %21 = vector.load %arg12[%c1_20, %c0_21, %c0_22] : memref<18x18x4xbf16, #tpu.memory_space<vmem>>, vector<16x16x4xbf16>
    %22 = vector.shape_cast %21 : vector<16x16x4xbf16> to vector<256x4xbf16>
    %c1_23 = arith.constant 1 : index
    %c1_24 = arith.constant 1 : index
    %c0_25 = arith.constant 0 : index
    %23 = vector.load %arg12[%c1_23, %c1_24, %c0_25] : memref<18x18x4xbf16, #tpu.memory_space<vmem>>, vector<16x16x4xbf16>
    %24 = vector.shape_cast %23 : vector<16x16x4xbf16> to vector<256x4xbf16>
    %c1_26 = arith.constant 1 : index
    %c2_27 = arith.constant 2 : index
    %c0_28 = arith.constant 0 : index
    %25 = vector.load %arg12[%c1_26, %c2_27, %c0_28] : memref<18x18x4xbf16, #tpu.memory_space<vmem>>, vector<16x16x4xbf16>
    %26 = vector.shape_cast %25 : vector<16x16x4xbf16> to vector<256x4xbf16>
    %c2_29 = arith.constant 2 : index
    %c0_30 = arith.constant 0 : index
    %c0_31 = arith.constant 0 : index
    %27 = vector.load %arg12[%c2_29, %c0_30, %c0_31] : memref<18x18x4xbf16, #tpu.memory_space<vmem>>, vector<16x16x4xbf16>
    %28 = vector.shape_cast %27 : vector<16x16x4xbf16> to vector<256x4xbf16>
    %c2_32 = arith.constant 2 : index
    %c1_33 = arith.constant 1 : index
    %c0_34 = arith.constant 0 : index
    %29 = vector.load %arg12[%c2_32, %c1_33, %c0_34] : memref<18x18x4xbf16, #tpu.memory_space<vmem>>, vector<16x16x4xbf16>
    %30 = vector.shape_cast %29 : vector<16x16x4xbf16> to vector<256x4xbf16>
    %c2_35 = arith.constant 2 : index
    %c2_36 = arith.constant 2 : index
    %c0_37 = arith.constant 0 : index
    %31 = vector.load %arg12[%c2_35, %c2_36, %c0_37] : memref<18x18x4xbf16, #tpu.memory_space<vmem>>, vector<16x16x4xbf16>
    %32 = vector.shape_cast %31 : vector<16x16x4xbf16> to vector<256x4xbf16>
    %33 = tpu.concatenate %16, %18, %20, %22, %24, %26, %28, %30, %32 in 1 : vector<256x4xbf16>, vector<256x4xbf16>, vector<256x4xbf16>, vector<256x4xbf16>, vector<256x4xbf16>, vector<256x4xbf16>, vector<256x4xbf16>, vector<256x4xbf16>, vector<256x4xbf16> -> vector<256x36xbf16>
    %c0_38 = arith.constant 0 : index
    %c0_39 = arith.constant 0 : index
    %34 = vector.load %arg4[%c0_38, %c0_39] : memref<36x8xbf16, #tpu.memory_space<vmem>>, vector<36x8xbf16>
    %cst_40 = arith.constant dense<0.000000e+00> : vector<256x8xf32>
    %35 = tpu.matmul %33, %34, %cst_40 {dimension_numbers = #tpu.dot_dimension_numbers<[1], [0], [0], [1], [0, 0, 1, 1], [], []>} : vector<256x36xbf16>, vector<36x8xbf16>, vector<256x8xf32> -> vector<256x8xf32>
    %c0_41 = arith.constant 0 : index
    %c0_42 = arith.constant 0 : index
    %36 = vector.load %arg5[%c0_41, %c0_42] : memref<1x8xf32, #tpu.memory_space<vmem>>, vector<1x8xf32>
    %37 = vector.broadcast %36 : vector<1x8xf32> to vector<256x8xf32>
    %38 = arith.addf %35, %37 : vector<256x8xf32>
    %cst_43 = arith.constant 0.000000e+00 : f32
    %39 = vector.broadcast %cst_43 : f32 to vector<256x8xf32>
    %40 = arith.maximumf %38, %39 : vector<256x8xf32>
    %41 = arith.truncf %40 : vector<256x8xf32> to vector<256x8xbf16>
    %cst_44 = arith.constant 0.000000e+00 : bf16
    %42 = vector.broadcast %cst_44 : bf16 to vector<18x18x8xbf16>
    %c0_45 = arith.constant 0 : index
    %c0_46 = arith.constant 0 : index
    %c0_47 = arith.constant 0 : index
    %43 = vector.load %arg13[%c0_45, %c0_46, %c0_47] : memref<18x18x8xbf16, #tpu.memory_space<vmem>>, vector<18x18x8xbf16>
    tpu.vector_store %arg13[%c0_45, %c0_46, %c0_47], %42 {strides = array<i32>} : memref<18x18x8xbf16, #tpu.memory_space<vmem>>, vector<18x18x8xbf16>,
    %44 = vector.shape_cast %41 : vector<256x8xbf16> to vector<16x16x8xbf16>
    %c1_48 = arith.constant 1 : index
    %c1_49 = arith.constant 1 : index
    %c0_50 = arith.constant 0 : index
    %45 = vector.load %arg13[%c1_48, %c1_49, %c0_50] : memref<18x18x8xbf16, #tpu.memory_space<vmem>>, vector<16x16x8xbf16>
    tpu.vector_store %arg13[%c1_48, %c1_49, %c0_50], %44 {strides = array<i32>} : memref<18x18x8xbf16, #tpu.memory_space<vmem>>, vector<16x16x8xbf16>,
    %c0_51 = arith.constant 0 : index
    %c0_52 = arith.constant 0 : index
    %c0_53 = arith.constant 0 : index
    %46 = vector.load %arg13[%c0_51, %c0_52, %c0_53] : memref<18x18x8xbf16, #tpu.memory_space<vmem>>, vector<16x16x8xbf16>
    %47 = vector.shape_cast %46 : vector<16x16x8xbf16> to vector<256x8xbf16>
    %c0_54 = arith.constant 0 : index
    %c1_55 = arith.constant 1 : index
    %c0_56 = arith.constant 0 : index
    %48 = vector.load %arg13[%c0_54, %c1_55, %c0_56] : memref<18x18x8xbf16, #tpu.memory_space<vmem>>, vector<16x16x8xbf16>
    %49 = vector.shape_cast %48 : vector<16x16x8xbf16> to vector<256x8xbf16>
    %c0_57 = arith.constant 0 : index
    %c2_58 = arith.constant 2 : index
    %c0_59 = arith.constant 0 : index
    %50 = vector.load %arg13[%c0_57, %c2_58, %c0_59] : memref<18x18x8xbf16, #tpu.memory_space<vmem>>, vector<16x16x8xbf16>
    %51 = vector.shape_cast %50 : vector<16x16x8xbf16> to vector<256x8xbf16>
    %c1_60 = arith.constant 1 : index
    %c0_61 = arith.constant 0 : index
    %c0_62 = arith.constant 0 : index
    %52 = vector.load %arg13[%c1_60, %c0_61, %c0_62] : memref<18x18x8xbf16, #tpu.memory_space<vmem>>, vector<16x16x8xbf16>
    %53 = vector.shape_cast %52 : vector<16x16x8xbf16> to vector<256x8xbf16>
    %c1_63 = arith.constant 1 : index
    %c1_64 = arith.constant 1 : index
    %c0_65 = arith.constant 0 : index
    %54 = vector.load %arg13[%c1_63, %c1_64, %c0_65] : memref<18x18x8xbf16, #tpu.memory_space<vmem>>, vector<16x16x8xbf16>
    %55 = vector.shape_cast %54 : vector<16x16x8xbf16> to vector<256x8xbf16>
    %c1_66 = arith.constant 1 : index
    %c2_67 = arith.constant 2 : index
    %c0_68 = arith.constant 0 : index
    %56 = vector.load %arg13[%c1_66, %c2_67, %c0_68] : memref<18x18x8xbf16, #tpu.memory_space<vmem>>, vector<16x16x8xbf16>
    %57 = vector.shape_cast %56 : vector<16x16x8xbf16> to vector<256x8xbf16>
    %c2_69 = arith.constant 2 : index
    %c0_70 = arith.constant 0 : index
    %c0_71 = arith.constant 0 : index
    %58 = vector.load %arg13[%c2_69, %c0_70, %c0_71] : memref<18x18x8xbf16, #tpu.memory_space<vmem>>, vector<16x16x8xbf16>
    %59 = vector.shape_cast %58 : vector<16x16x8xbf16> to vector<256x8xbf16>
    %c2_72 = arith.constant 2 : index
    %c1_73 = arith.constant 1 : index
    %c0_74 = arith.constant 0 : index
    %60 = vector.load %arg13[%c2_72, %c1_73, %c0_74] : memref<18x18x8xbf16, #tpu.memory_space<vmem>>, vector<16x16x8xbf16>
    %61 = vector.shape_cast %60 : vector<16x16x8xbf16> to vector<256x8xbf16>
    %c2_75 = arith.constant 2 : index
    %c2_76 = arith.constant 2 : index
    %c0_77 = arith.constant 0 : index
    %62 = vector.load %arg13[%c2_75, %c2_76, %c0_77] : memref<18x18x8xbf16, #tpu.memory_space<vmem>>, vector<16x16x8xbf16>
    %63 = vector.shape_cast %62 : vector<16x16x8xbf16> to vector<256x8xbf16>
    %64 = tpu.concatenate %47, %49, %51, %53, %55, %57, %59, %61, %63 in 1 : vector<256x8xbf16>, vector<256x8xbf16>, vector<256x8xbf16>, vector<256x8xbf16>, vector<256x8xbf16>, vector<256x8xbf16>, vector<256x8xbf16>, vector<256x8xbf16>, vector<256x8xbf16> -> vector<256x72xbf16>
    %c0_78 = arith.constant 0 : index
    %c0_79 = arith.constant 0 : index
    %65 = vector.load %arg6[%c0_78, %c0_79] : memref<72x8xbf16, #tpu.memory_space<vmem>>, vector<72x8xbf16>
    %cst_80 = arith.constant dense<0.000000e+00> : vector<256x8xf32>
    %66 = tpu.matmul %64, %65, %cst_80 {dimension_numbers = #tpu.dot_dimension_numbers<[1], [0], [0], [1], [0, 0, 1, 1], [], []>} : vector<256x72xbf16>, vector<72x8xbf16>, vector<256x8xf32> -> vector<256x8xf32>
    %c0_81 = arith.constant 0 : index
    %c0_82 = arith.constant 0 : index
    %67 = vector.load %arg10[%c0_81, %c0_82] : memref<64x256xbf16, #tpu.memory_space<vmem>>, vector<64x256xbf16>
    %68 = arith.truncf %66 : vector<256x8xf32> to vector<256x8xbf16>
    %cst_83 = arith.constant dense<0.000000e+00> : vector<64x8xf32>
    %69 = tpu.matmul %67, %68, %cst_83 {dimension_numbers = #tpu.dot_dimension_numbers<[1], [0], [0], [1], [0, 0, 1, 1], [], []>} : vector<64x256xbf16>, vector<256x8xbf16>, vector<64x8xf32> -> vector<64x8xf32>
    %c0_84 = arith.constant 0 : index
    %c0_85 = arith.constant 0 : index
    %c0_86 = arith.constant 0 : index
    %70 = vector.load %arg9[%c0_84, %c0_85, %c0_86] : memref<1x64x4xbf16, #tpu.memory_space<vmem>>, vector<1x64x4xbf16>
    %71 = vector.shape_cast %70 : vector<1x64x4xbf16> to vector<64x4xbf16>
    %c0_87 = arith.constant 0 : index
    %c0_88 = arith.constant 0 : index
    %72 = vector.load %arg8[%c0_87, %c0_88] : memref<4x8xbf16, #tpu.memory_space<vmem>>, vector<4x8xbf16>
    %cst_89 = arith.constant dense<0.000000e+00> : vector<64x8xf32>
    %73 = tpu.matmul %71, %72, %cst_89 {dimension_numbers = #tpu.dot_dimension_numbers<[1], [0], [0], [1], [0, 0, 1, 1], [], []>} : vector<64x4xbf16>, vector<4x8xbf16>, vector<64x8xf32> -> vector<64x8xf32>
    %74 = arith.addf %69, %73 : vector<64x8xf32>
    %c0_90 = arith.constant 0 : index
    %c0_91 = arith.constant 0 : index
    %75 = vector.load %arg7[%c0_90, %c0_91] : memref<1x8xf32, #tpu.memory_space<vmem>>, vector<1x8xf32>
    %76 = vector.broadcast %75 : vector<1x8xf32> to vector<64x8xf32>
    %77 = arith.addf %74, %76 : vector<64x8xf32>
    %c0_92 = arith.constant 0 : index
    %c0_93 = arith.constant 0 : index
    %c0_94 = arith.constant 0 : index
    %78 = vector.load %arg11[%c0_92, %c0_93, %c0_94] : memref<1x64x8xf32, #tpu.memory_space<vmem>>, vector<1x64x8xf32>
    %79 = vector.shape_cast %78 : vector<1x64x8xf32> to vector<64x8xf32>
    %80 = vector.shape_cast %77 : vector<64x8xf32> to vector<1x64x8xf32>
    tpu.vector_store %arg11[%c0_92, %c0_93, %c0_94], %80 {strides = array<i32>} : memref<1x64x8xf32, #tpu.memory_space<vmem>>, vector<1x64x8xf32>,
    return
  }
  func.func @transform_0(%arg0: i32) -> (i32, i32, i32) {
    %c0_i32 = arith.constant 0 : i32
    %c0_i32_0 = arith.constant 0 : i32
    %c0_i32_1 = arith.constant 0 : i32
    return %arg0, %c0_i32, %c0_i32_0 : i32, i32, i32
  }
  func.func @transform_1(%arg0: i32) -> (i32, i32) {
    %c0_i32 = arith.constant 0 : i32
    %c0_i32_0 = arith.constant 0 : i32
    %c0_i32_1 = arith.constant 0 : i32
    return %c0_i32, %c0_i32_0 : i32, i32
  }
  func.func @transform_2(%arg0: i32) -> (i32, i32) {
    %c0_i32 = arith.constant 0 : i32
    %c0_i32_0 = arith.constant 0 : i32
    %c0_i32_1 = arith.constant 0 : i32
    return %c0_i32, %c0_i32_0 : i32, i32
  }
  func.func @transform_3(%arg0: i32) -> (i32, i32) {
    %c0_i32 = arith.constant 0 : i32
    %c0_i32_0 = arith.constant 0 : i32
    %c0_i32_1 = arith.constant 0 : i32
    return %c0_i32, %c0_i32_0 : i32, i32
  }
  func.func @transform_4(%arg0: i32) -> (i32, i32) {
    %c0_i32 = arith.constant 0 : i32
    %c0_i32_0 = arith.constant 0 : i32
    %c0_i32_1 = arith.constant 0 : i32
    return %c0_i32, %c0_i32_0 : i32, i32
  }
  func.func @transform_5(%arg0: i32) -> (i32, i32) {
    %c0_i32 = arith.constant 0 : i32
    %c0_i32_0 = arith.constant 0 : i32
    %c0_i32_1 = arith.constant 0 : i32
    return %c0_i32, %c0_i32_0 : i32, i32
  }
  func.func @transform_6(%arg0: i32) -> (i32, i32) {
    %c0_i32 = arith.constant 0 : i32
    %c0_i32_0 = arith.constant 0 : i32
    %c0_i32_1 = arith.constant 0 : i32
    return %c0_i32, %c0_i32_0 : i32, i32
  }
  func.func @transform_7(%arg0: i32) -> (i32, i32) {
    %c0_i32 = arith.constant 0 : i32
    %c0_i32_0 = arith.constant 0 : i32
    %c0_i32_1 = arith.constant 0 : i32
    return %c0_i32, %c0_i32_0 : i32, i32
  }
  func.func @transform_8(%arg0: i32) -> (i32, i32, i32) {
    %c0_i32 = arith.constant 0 : i32
    %c0_i32_0 = arith.constant 0 : i32
    %c0_i32_1 = arith.constant 0 : i32
    return %arg0, %c0_i32, %c0_i32_0 : i32, i32, i32
  }
  func.func @transform_9(%arg0: i32) -> (i32, i32) {
    %c0_i32 = arith.constant 0 : i32
    %c0_i32_0 = arith.constant 0 : i32
    %c0_i32_1 = arith.constant 0 : i32
    return %c0_i32, %c0_i32_0 : i32, i32
  }
  func.func @transform_10(%arg0: i32) -> (i32, i32, i32) {
    %c0_i32 = arith.constant 0 : i32
    %c0_i32_0 = arith.constant 0 : i32
    %c0_i32_1 = arith.constant 0 : i32
    return %arg0, %c0_i32, %c0_i32_0 : i32, i32, i32
  }
}

</mosaic_0001>

<llo_original>
// kernel: tpu_custom_call.1
$region0: #{tpu_custom_call.1}
  #allocation0 [shape = 'u32[]', space=smem, size = 0x4, offset = 0x4, fixed_abs, tag = 'smem constant byte address 0x4 - core index']
  #allocation1 [shape = 'u32[72,128]{1,0:T(1,128)}', space=vmem, size = 0x9000, scoped, tag = 'internal scratch']
  #allocation2 [shape = 'bf16[18,18,4]{2,1,0:T(8,128)(2,1)}', space=vmem, size = 0x1b000, scoped, tag = 'scratch operand']
  #allocation3 [shape = 'bf16[18,18,8]{2,1,0:T(8,128)(2,1)}', space=vmem, size = 0x1b000, scoped, tag = 'scratch operand']
  %s0 = inlined_call_operand.vmem [shape: f32[2,256,4], index: 0, kind: input, shape index: {}]
  %s1 = inlined_call_operand.vmem [shape: f32[1,4], index: 1, kind: input, shape index: {}]
  %s2 = inlined_call_operand.vmem [shape: f32[1,4], index: 2, kind: input, shape index: {}]
  %s3 = inlined_call_operand.vmem [shape: bf16[36,8], index: 3, kind: input, shape index: {}]
  %s4 = inlined_call_operand.vmem [shape: f32[1,8], index: 4, kind: input, shape index: {}]
  %s5 = inlined_call_operand.vmem [shape: bf16[72,8], index: 5, kind: input, shape index: {}]
  %s6 = inlined_call_operand.vmem [shape: f32[1,8], index: 6, kind: input, shape index: {}]
  %s7 = inlined_call_operand.vmem [shape: bf16[4,8], index: 7, kind: input, shape index: {}]
  %s8 = inlined_call_operand.vmem [shape: bf16[2,64,4], index: 8, kind: input, shape index: {}]
  %s9 = inlined_call_operand.vmem [shape: bf16[64,256], index: 9, kind: input, shape index: {}]
  %s10 = inlined_call_operand.vmem [shape: f32[2,64,8], index: 10, kind: output, shape index: {}]
  %s11 = sld [smem:[#allocation0]]
  $region73: #{tpu_custom_call.1} parent=0
    _
  %s13 = ssub.s32 1, %s11
  %s14 = scalar_select 0, %s13, %s11
  loop: start=0, step=1, limit=4
  $region2: #{tpu_custom_call.1} parent=0 // loop_pre_header
    _
  $region3: #{tpu_custom_call.1} parent=0 // loop_header
    %s16 = sphi 0, %s20
    %p17 = scmp.ge.s32.totalorder %s16, 4
    %s26 = sphi 0, %s28
    %s29 = sphi 0, %s26
    %s30 = sphi 0, %s29
    %s46 = sphi 0, %s30
    %s50 = sphi 0, %s50
    %s52 = sphi 0, %s50
    %s53 = sphi 0, %s52
    %s67 = sphi 0, %s53
    %s71 = sphi 0, %s71
    %s73 = sphi 0, %s71
    %s74 = sphi 0, %s73
    %s88 = sphi 0, %s74
    %s92 = sphi 0, %s92
    %s94 = sphi 0, %s92
    %s95 = sphi 0, %s94
    %s109 = sphi 0, %s95
    %s113 = sphi 0, %s113
    %s115 = sphi 0, %s113
    %s116 = sphi 0, %s115
    %s130 = sphi 0, %s116
    %s134 = sphi 0, %s134
    %s136 = sphi 0, %s134
    %s137 = sphi 0, %s136
    %s151 = sphi 0, %s137
    %s155 = sphi 0, %s155
    %s157 = sphi 0, %s155
    %s158 = sphi 0, %s157
    %s172 = sphi 0, %s158
    %s176 = sphi 0, %s176
    %s178 = sphi 0, %s176
    %s179 = sphi 0, %s178
    %s193 = sphi 0, %s179
    %s199 = sphi 0, %s201
    %s202 = sphi 0, %s199
    %s203 = sphi 0, %s202
    %s219 = sphi 0, %s203
    %s223 = sphi 0, %s223
    %s225 = sphi 0, %s223
    %s226 = sphi 0, %s225
    %s240 = sphi 0, %s226
    %s246 = sphi 0, %s248
    %s249 = sphi 0, %s246
    %s250 = sphi 0, %s249
    %s266 = sphi 0, %s250
  $region4: #{tpu_custom_call.1} parent=0 // loop_header_branch
    %19 = sbr.rel (%p17) target = $region8
  $region5: #{tpu_custom_call.1} parent=0 // loop_body
    %s21 = ssub.s32 %s16, 1
    %s22 = ssub.s32 %s16, 2
    %s23 = sadd.s32 %s16, 1
    %s24 = ssub.s32 %s16, %s23
    %p25 = scmp.eq.s32.totalorder %s24, 0
    %s27 = sadd.s32 %s26, 1
    %s28 = scalar_select %p25, %s26, %s27
    %p31 = pneg %p25
    %p32 = scmp.eq.s32.totalorder %s16, 1
    %p33 = por %p31, %p32
    %p34 = scmp.ne.s32.totalorder %s26, %s29
    %p35 = scmp.eq.s32.totalorder %s16, 0
    %p36 = por %p34, %p35
    %p37 = scmp.ne.s32.totalorder %s26, %s29
    %p38 = scmp.eq.s32.totalorder %s21, 1
    %p39 = por %p37, %p38
    %p40 = scmp.ne.s32.totalorder %s29, %s30
    %p41 = scmp.eq.s32.totalorder %s21, 0
    %p42 = por %p40, %p41
    %p43 = scmp.ne.s32.totalorder %s29, %s30
    %p44 = scmp.eq.s32.totalorder %s22, 1
    %p45 = por %p43, %p44
    %p47 = scmp.ne.s32.totalorder %s30, %s46
    %p48 = scmp.eq.s32.totalorder %s22, 0
    %p49 = por %p47, %p48
    %s51 = sadd.s32 %s50, 1
    %p54 = scmp.eq.s32.totalorder %s16, 1
    %p55 = scmp.ne.s32.totalorder %s50, %s52
    %p56 = scmp.eq.s32.totalorder %s16, 0
    %p57 = por %p55, %p56
    %p58 = scmp.ne.s32.totalorder %s50, %s52
    %p59 = scmp.eq.s32.totalorder %s21, 1
    %p60 = por %p58, %p59
    %p61 = scmp.ne.s32.totalorder %s52, %s53
    %p62 = scmp.eq.s32.totalorder %s21, 0
    %p63 = por %p61, %p62
    %p64 = scmp.ne.s32.totalorder %s52, %s53
    %p65 = scmp.eq.s32.totalorder %s22, 1
    %p66 = por %p64, %p65
    %p68 = scmp.ne.s32.totalorder %s53, %s67
    %p69 = scmp.eq.s32.totalorder %s22, 0
    %p70 = por %p68, %p69
    %s72 = sadd.s32 %s71, 1
    %p75 = scmp.eq.s32.totalorder %s16, 1
    %p76 = scmp.ne.s32.totalorder %s71, %s73
    %p77 = scmp.eq.s32.totalorder %s16, 0
    %p78 = por %p76, %p77
    %p79 = scmp.ne.s32.totalorder %s71, %s73
    %p80 = scmp.eq.s32.totalorder %s21, 1
    %p81 = por %p79, %p80
    %p82 = scmp.ne.s32.totalorder %s73, %s74
    %p83 = scmp.eq.s32.totalorder %s21, 0
    %p84 = por %p82, %p83
    %p85 = scmp.ne.s32.totalorder %s73, %s74
    %p86 = scmp.eq.s32.totalorder %s22, 1
    %p87 = por %p85, %p86
    %p89 = scmp.ne.s32.totalorder %s74, %s88
    %p90 = scmp.eq.s32.totalorder %s22, 0
    %p91 = por %p89, %p90
    %s93 = sadd.s32 %s92, 1
    %p96 = scmp.eq.s32.totalorder %s16, 1
    %p97 = scmp.ne.s32.totalorder %s92, %s94
    %p98 = scmp.eq.s32.totalorder %s16, 0
    %p99 = por %p97, %p98
    %p100 = scmp.ne.s32.totalorder %s92, %s94
    %p101 = scmp.eq.s32.totalorder %s21, 1
    %p102 = por %p100, %p101
    %p103 = scmp.ne.s32.totalorder %s94, %s95
    %p104 = scmp.eq.s32.totalorder %s21, 0
    %p105 = por %p103, %p104
    %p106 = scmp.ne.s32.totalorder %s94, %s95
    %p107 = scmp.eq.s32.totalorder %s22, 1
    %p108 = por %p106, %p107
    %p110 = scmp.ne.s32.totalorder %s95, %s109
    %p111 = scmp.eq.s32.totalorder %s22, 0
    %p112 = por %p110, %p111
    %s114 = sadd.s32 %s113, 1
    %p117 = scmp.eq.s32.totalorder %s16, 1
    %p118 = scmp.ne.s32.totalorder %s113, %s115
    %p119 = scmp.eq.s32.totalorder %s16, 0
    %p120 = por %p118, %p119
    %p121 = scmp.ne.s32.totalorder %s113, %s115
    %p122 = scmp.eq.s32.totalorder %s21, 1
    %p123 = por %p121, %p122
    %p124 = scmp.ne.s32.totalorder %s115, %s116
    %p125 = scmp.eq.s32.totalorder %s21, 0
    %p126 = por %p124, %p125
    %p127 = scmp.ne.s32.totalorder %s115, %s116
    %p128 = scmp.eq.s32.totalorder %s22, 1
    %p129 = por %p127, %p128
    %p131 = scmp.ne.s32.totalorder %s116, %s130
    %p132 = scmp.eq.s32.totalorder %s22, 0
    %p133 = por %p131, %p132
    %s135 = sadd.s32 %s134, 1
    %p138 = scmp.eq.s32.totalorder %s16, 1
    %p139 = scmp.ne.s32.totalorder %s134, %s136
    %p140 = scmp.eq.s32.totalorder %s16, 0
    %p141 = por %p139, %p140
    %p142 = scmp.ne.s32.totalorder %s134, %s136
    %p143 = scmp.eq.s32.totalorder %s21, 1
    %p144 = por %p142, %p143
    %p145 = scmp.ne.s32.totalorder %s136, %s137
    %p146 = scmp.eq.s32.totalorder %s21, 0
    %p147 = por %p145, %p146
    %p148 = scmp.ne.s32.totalorder %s136, %s137
    %p149 = scmp.eq.s32.totalorder %s22, 1
    %p150 = por %p148, %p149
    %p152 = scmp.ne.s32.totalorder %s137, %s151
    %p153 = scmp.eq.s32.totalorder %s22, 0
    %p154 = por %p152, %p153
    %s156 = sadd.s32 %s155, 1
    %p159 = scmp.eq.s32.totalorder %s16, 1
    %p160 = scmp.ne.s32.totalorder %s155, %s157
    %p161 = scmp.eq.s32.totalorder %s16, 0
    %p162 = por %p160, %p161
    %p163 = scmp.ne.s32.totalorder %s155, %s157
    %p164 = scmp.eq.s32.totalorder %s21, 1
    %p165 = por %p163, %p164
    %p166 = scmp.ne.s32.totalorder %s157, %s158
    %p167 = scmp.eq.s32.totalorder %s21, 0
    %p168 = por %p166, %p167
    %p169 = scmp.ne.s32.totalorder %s157, %s158
    %p170 = scmp.eq.s32.totalorder %s22, 1
    %p171 = por %p169, %p170
    %p173 = scmp.ne.s32.totalorder %s158, %s172
    %p174 = scmp.eq.s32.totalorder %s22, 0
    %p175 = por %p173, %p174
    %s177 = sadd.s32 %s176, 1
    %p180 = scmp.eq.s32.totalorder %s16, 1
    %p181 = scmp.ne.s32.totalorder %s176, %s178
    %p182 = scmp.eq.s32.totalorder %s16, 0
    %p183 = por %p181, %p182
    %p184 = scmp.ne.s32.totalorder %s176, %s178
    %p185 = scmp.eq.s32.totalorder %s21, 1
    %p186 = por %p184, %p185
    %p187 = scmp.ne.s32.totalorder %s178, %s179
    %p188 = scmp.eq.s32.totalorder %s21, 0
    %p189 = por %p187, %p188
    %p190 = scmp.ne.s32.totalorder %s178, %s179
    %p191 = scmp.eq.s32.totalorder %s22, 1
    %p192 = por %p190, %p191
    %p194 = scmp.ne.s32.totalorder %s179, %s193
    %p195 = scmp.eq.s32.totalorder %s22, 0
    %p196 = por %p194, %p195
    %s197 = ssub.s32 %s16, %s23
    %p198 = scmp.eq.s32.totalorder %s197, 0
    %s200 = sadd.s32 %s199, 1
    %s201 = scalar_select %p198, %s199, %s200
    %p204 = pneg %p198
    %p205 = scmp.eq.s32.totalorder %s16, 1
    %p206 = por %p204, %p205
    %p207 = scmp.ne.s32.totalorder %s199, %s202
    %p208 = scmp.eq.s32.totalorder %s16, 0
    %p209 = por %p207, %p208
    %p210 = scmp.ne.s32.totalorder %s199, %s202
    %p211 = scmp.eq.s32.totalorder %s21, 1
    %p212 = por %p210, %p211
    %p213 = scmp.ne.s32.totalorder %s202, %s203
    %p214 = scmp.eq.s32.totalorder %s21, 0
    %p215 = por %p213, %p214
    %p216 = scmp.ne.s32.totalorder %s202, %s203
    %p217 = scmp.eq.s32.totalorder %s22, 1
    %p218 = por %p216, %p217
    %p220 = scmp.ne.s32.totalorder %s203, %s219
    %p221 = scmp.eq.s32.totalorder %s22, 0
    %p222 = por %p220, %p221
    %s224 = sadd.s32 %s223, 1
    %p227 = scmp.eq.s32.totalorder %s16, 1
    %p228 = scmp.ne.s32.totalorder %s223, %s225
    %p229 = scmp.eq.s32.totalorder %s16, 0
    %p230 = por %p228, %p229
    %p231 = scmp.ne.s32.totalorder %s223, %s225
    %p232 = scmp.eq.s32.totalorder %s21, 1
    %p233 = por %p231, %p232
    %p234 = scmp.ne.s32.totalorder %s225, %s226
    %p235 = scmp.eq.s32.totalorder %s21, 0
    %p236 = por %p234, %p235
    %p237 = scmp.ne.s32.totalorder %s225, %s226
    %p238 = scmp.eq.s32.totalorder %s22, 1
    %p239 = por %p237, %p238
    %p241 = scmp.ne.s32.totalorder %s226, %s240
    %p242 = scmp.eq.s32.totalorder %s22, 0
    %p243 = por %p241, %p242
    %s244 = ssub.s32 %s16, %s23
    %p245 = scmp.eq.s32.totalorder %s244, 0
    %s247 = sadd.s32 %s246, 1
    %s248 = scalar_select %p245, %s246, %s247
    %p251 = pneg %p245
    %p252 = scmp.eq.s32.totalorder %s16, 1
    %p253 = por %p251, %p252
    %p254 = scmp.ne.s32.totalorder %s246, %s249
    %p255 = scmp.eq.s32.totalorder %s16, 0
    %p256 = por %p254, %p255
    %p257 = scmp.ne.s32.totalorder %s246, %s249
    %p258 = scmp.eq.s32.totalorder %s21, 1
    %p259 = por %p257, %p258
    %p260 = scmp.ne.s32.totalorder %s249, %s250
    %p261 = scmp.eq.s32.totalorder %s21, 0
    %p262 = por %p260, %p261
    %p263 = scmp.ne.s32.totalorder %s249, %s250
    %p264 = scmp.eq.s32.totalorder %s22, 1
    %p265 = por %p263, %p264
    %p267 = scmp.ne.s32.totalorder %s250, %s266
    %p268 = scmp.eq.s32.totalorder %s22, 0
    %p269 = por %p267, %p268
    %p270 = scmp.le.s32.totalorder 1, %s16
    %p271 = scmp.lt.s32.totalorder %s16, 3
    %p272 = pnand %p270, %p271
    %p273 = pneg %p272
    // Predicated region
    $region9: #{tpu_custom_call.1} parent=5 // pred_check
      _
    $region10: #{tpu_custom_call.1} parent=5 // pred_check_branch
      %275 = sbr.rel (%p272) target = $region12
    $region11: #{tpu_custom_call.1} parent=5 // pred_region
      %s276 = ssub.s32 %s16, 1
      // Predicated region
      $region13: #{tpu_custom_call.1} parent=11 // pred_check
        %p277 = pneg %p63
      $region14: #{tpu_custom_call.1} parent=11 // pred_check_branch
        %279 = sbr.rel (%p277) target = $region16
      $region15: #{tpu_custom_call.1} parent=11 // pred_region
        _
      $region16: #{tpu_custom_call.1} parent=11 // pred_fallthru
        _
      // Predicated region
      $region17: #{tpu_custom_call.1} parent=11 // pred_check
        %p280 = pneg %p84
      $region18: #{tpu_custom_call.1} parent=11 // pred_check_branch
        %282 = sbr.rel (%p280) target = $region20
      $region19: #{tpu_custom_call.1} parent=11 // pred_region
        _
      $region20: #{tpu_custom_call.1} parent=11 // pred_fallthru
        _
      // Predicated region
      $region21: #{tpu_custom_call.1} parent=11 // pred_check
        %p283 = pneg %p105
      $region22: #{tpu_custom_call.1} parent=11 // pred_check_branch
        %285 = sbr.rel (%p283) target = $region24
      $region23: #{tpu_custom_call.1} parent=11 // pred_region
        _
      $region24: #{tpu_custom_call.1} parent=11 // pred_fallthru
        _
      // Predicated region
      $region25: #{tpu_custom_call.1} parent=11 // pred_check
        %p286 = pneg %p126
      $region26: #{tpu_custom_call.1} parent=11 // pred_check_branch
        %288 = sbr.rel (%p286) target = $region28
      $region27: #{tpu_custom_call.1} parent=11 // pred_region
        _
      $region28: #{tpu_custom_call.1} parent=11 // pred_fallthru
        _
      // Predicated region
      $region29: #{tpu_custom_call.1} parent=11 // pred_check
        %p289 = pneg %p147
      $region30: #{tpu_custom_call.1} parent=11 // pred_check_branch
        %291 = sbr.rel (%p289) target = $region32
      $region31: #{tpu_custom_call.1} parent=11 // pred_region
        _
      $region32: #{tpu_custom_call.1} parent=11 // pred_fallthru
        _
      // Predicated region
      $region33: #{tpu_custom_call.1} parent=11 // pred_check
        %p292 = pneg %p168
      $region34: #{tpu_custom_call.1} parent=11 // pred_check_branch
        %294 = sbr.rel (%p292) target = $region36
      $region35: #{tpu_custom_call.1} parent=11 // pred_region
        _
      $region36: #{tpu_custom_call.1} parent=11 // pred_fallthru
        _
      // Predicated region
      $region37: #{tpu_custom_call.1} parent=11 // pred_check
        %p295 = pneg %p189
      $region38: #{tpu_custom_call.1} parent=11 // pred_check_branch
        %297 = sbr.rel (%p295) target = $region40
      $region39: #{tpu_custom_call.1} parent=11 // pred_region
        _
      $region40: #{tpu_custom_call.1} parent=11 // pred_fallthru
        _
      // Predicated region
      $region41: #{tpu_custom_call.1} parent=11 // pred_check
        %p298 = pneg %p236
      $region42: #{tpu_custom_call.1} parent=11 // pred_check_branch
        %300 = sbr.rel (%p298) target = $region44
      $region43: #{tpu_custom_call.1} parent=11 // pred_region
        _
      $region44: #{tpu_custom_call.1} parent=11 // pred_fallthru
        _
    $region12: #{tpu_custom_call.1} parent=5 // pred_fallthru
      _
    %p301 = scmp.lt.s32.totalorder %s16, 2
    // Predicated region
    $region45: #{tpu_custom_call.1} parent=5 // pred_check
      %p302 = pneg %p301
    $region46: #{tpu_custom_call.1} parent=5 // pred_check_branch
      %304 = sbr.rel (%p302) target = $region48
    $region47: #{tpu_custom_call.1} parent=5 // pred_region
      // Predicated region
      $region49: #{tpu_custom_call.1} parent=47 // pred_check
        %p305 = pneg %p36
      $region50: #{tpu_custom_call.1} parent=47 // pred_check_branch
        %307 = sbr.rel (%p305) target = $region52
      $region51: #{tpu_custom_call.1} parent=47 // pred_region
        %p308 = scmp.lt.s32.totalorder %s16, 1
        %s309 = scalar_select %p308, %s16, 1
        %s310 = smul.addr %s309, 32
        %s311 = smul.addr %s310, 8
        %s312 = scalar_lea.vmem %s0, %s311
      $region52: #{tpu_custom_call.1} parent=47 // pred_fallthru
        _
      // Predicated region
      $region53: #{tpu_custom_call.1} parent=47 // pred_check
        %p313 = pneg %p209
      $region54: #{tpu_custom_call.1} parent=47 // pred_check_branch
        %315 = sbr.rel (%p313) target = $region56
      $region55: #{tpu_custom_call.1} parent=47 // pred_region
        %p316 = scmp.lt.s32.totalorder %s16, 1
        %s317 = scalar_select %p316, %s16, 1
        %s318 = smul.addr %s317, 8
        %s319 = smul.addr %s318, 4
        %s320 = scalar_lea.vmem %s8, %s319
      $region56: #{tpu_custom_call.1} parent=47 // pred_fallthru
        _
    $region48: #{tpu_custom_call.1} parent=5 // pred_fallthru
      _
    %p321 = scmp.le.s32.totalorder 1, %s16
    %p322 = scmp.lt.s32.totalorder %s16, 3
    %p323 = pnand %p321, %p322
    %p324 = pneg %p323
    // Predicated region
    $region57: #{tpu_custom_call.1} parent=5 // pred_check
      _
    $region58: #{tpu_custom_call.1} parent=5 // pred_check_branch
      %326 = sbr.rel (%p323) target = $region60
    $region59: #{tpu_custom_call.1} parent=5 // pred_region
      %s327 = ssub.s32 %s16, 1
      %p328 = scmp.lt.s32.totalorder %s21, 1
      %s329 = scalar_select %p328, %s21, 1
      %s330 = smul.addr %s329, 32
      %s331 = smul.addr %s330, 8
      %s332 = scalar_lea.vmem %s0, %s331
      %p333 = pneg %p42
      %p334 = pneg %p39
      %p335 = pneg %p63
      %p336 = pneg %p60
      %p337 = pneg %p84
      %p338 = pneg %p81
      %p339 = pneg %p105
      %p340 = pneg %p102
      %p341 = pneg %p126
      %p342 = pneg %p123
      %p343 = pneg %p147
      %p344 = pneg %p144
      %p345 = pneg %p168
      %p346 = pneg %p165
      %p347 = pneg %p189
      %p348 = pneg %p186
      %p349 = scmp.lt.s32.totalorder %s21, 1
      %s350 = scalar_select %p349, %s21, 1
      %s351 = smul.addr %s350, 8
      %s352 = smul.addr %s351, 4
      %s353 = scalar_lea.vmem %s8, %s352
      %p354 = pneg %p215
      %p355 = pneg %p212
      %p356 = pneg %p236
      %p357 = pneg %p233
      %p358 = pneg %p262
      %p359 = pneg %p259
      %p360 = scmp.lt.s32.totalorder %s21, 1
      %s361 = scalar_select %p360, %s21, 1
      %s362 = smul.addr %s361, 8
      %s363 = smul.addr %s362, 8
      %s364 = scalar_lea.vmem %s10, %s363
      %p365 = scmp.lt.s32.totalorder %s21, 1
      %s366 = scalar_select %p365, %s21, 1
      %s367 = smul.addr %s366, 32
      %s368 = smul.addr %s367, 8
      %s369 = scalar_lea.vmem %s0, %s368
      %p370 = scmp.lt.s32.totalorder %s21, 1
      %s371 = scalar_select %p370, %s21, 1
      %s372 = smul.addr %s371, 8
      %s373 = smul.addr %s372, 4
      %s374 = scalar_lea.vmem %s8, %s373
      %p375 = scmp.lt.s32.totalorder %s21, 1
      %s376 = scalar_select %p375, %s21, 1
      %s377 = smul.addr %s376, 8
      %s378 = smul.addr %s377, 8
      %s379 = scalar_lea.vmem %s10, %s378
      %v381 = vld [vmem:[%s369] sm:$0xff]
      %v382 = vld [vmem:[%s369 + $0x8] sm:$0xff]
      %v383 = vld [vmem:[%s369 + $0x10] sm:$0xff]
      %v384 = vld [vmem:[%s369 + $0x18] sm:$0xff]
      %v385 = vld [vmem:[%s369 + $0x20] sm:$0xff]
      %v386 = vld [vmem:[%s369 + $0x28] sm:$0xff]
      %v387 = vld [vmem:[%s369 + $0x30] sm:$0xff]
      %v388 = vld [vmem:[%s369 + $0x38] sm:$0xff]
      %v389 = vld [vmem:[%s369 + $0x40] sm:$0xff]
      %v390 = vld [vmem:[%s369 + $0x48] sm:$0xff]
      %v391 = vld [vmem:[%s369 + $0x50] sm:$0xff]
      %v392 = vld [vmem:[%s369 + $0x58] sm:$0xff]
      %v393 = vld [vmem:[%s369 + $0x60] sm:$0xff]
      %v394 = vld [vmem:[%s369 + $0x68] sm:$0xff]
      %v395 = vld [vmem:[%s369 + $0x70] sm:$0xff]
      %v396 = vld [vmem:[%s369 + $0x78] sm:$0xff]
      %v397 = vld [vmem:[%s369 + $0x80] sm:$0xff]
      %v398 = vld [vmem:[%s369 + $0x88] sm:$0xff]
      %v399 = vld [vmem:[%s369 + $0x90] sm:$0xff]
      %v400 = vld [vmem:[%s369 + $0x98] sm:$0xff]
      %v401 = vld [vmem:[%s369 + $0xa0] sm:$0xff]
      %v402 = vld [vmem:[%s369 + $0xa8] sm:$0xff]
      %v403 = vld [vmem:[%s369 + $0xb0] sm:$0xff]
      %v404 = vld [vmem:[%s369 + $0xb8] sm:$0xff]
      %v405 = vld [vmem:[%s369 + $0xc0] sm:$0xff]
      %v406 = vld [vmem:[%s369 + $0xc8] sm:$0xff]
      %v407 = vld [vmem:[%s369 + $0xd0] sm:$0xff]
      %v408 = vld [vmem:[%s369 + $0xd8] sm:$0xff]
      %v409 = vld [vmem:[%s369 + $0xe0] sm:$0xff]
      %v410 = vld [vmem:[%s369 + $0xe8] sm:$0xff]
      %v411 = vld [vmem:[%s369 + $0xf0] sm:$0xff]
      %v412 = vld [vmem:[%s369 + $0xf8] sm:$0xff]
      %v413 = vld [vmem:[%s1] sm:$0x1]
      %v415 = vperm.slane %v413, 0
      %v417 = vmul.f32 %v381, %v415
      %v418 = vmul.f32 %v382, %v415
      %v419 = vmul.f32 %v383, %v415
      %v420 = vmul.f32 %v384, %v415
      %v421 = vmul.f32 %v385, %v415
      %v422 = vmul.f32 %v386, %v415
      %v423 = vmul.f32 %v387, %v415
      %v424 = vmul.f32 %v388, %v415
      %v425 = vmul.f32 %v389, %v415
      %v426 = vmul.f32 %v390, %v415
      %v427 = vmul.f32 %v391, %v415
      %v428 = vmul.f32 %v392, %v415
      %v429 = vmul.f32 %v393, %v415
      %v430 = vmul.f32 %v394, %v415
      %v431 = vmul.f32 %v395, %v415
      %v432 = vmul.f32 %v396, %v415
      %v433 = vmul.f32 %v397, %v415
      %v434 = vmul.f32 %v398, %v415
      %v435 = vmul.f32 %v399, %v415
      %v436 = vmul.f32 %v400, %v415
      %v437 = vmul.f32 %v401, %v415
      %v438 = vmul.f32 %v402, %v415
      %v439 = vmul.f32 %v403, %v415
      %v440 = vmul.f32 %v404, %v415
      %v441 = vmul.f32 %v405, %v415
      %v442 = vmul.f32 %v406, %v415
      %v443 = vmul.f32 %v407, %v415
      %v444 = vmul.f32 %v408, %v415
      %v445 = vmul.f32 %v409, %v415
      %v446 = vmul.f32 %v410, %v415
      %v447 = vmul.f32 %v411, %v415
      %v448 = vmul.f32 %v412, %v415
      %v449 = vld [vmem:[%s2] sm:$0x1]
      %v451 = vperm.slane %v449, 0
      %v453 = vadd.f32 %v417, %v451
      %v454 = vadd.f32 %v418, %v451
      %v455 = vadd.f32 %v419, %v451
      %v456 = vadd.f32 %v420, %v451
      %v457 = vadd.f32 %v421, %v451
      %v458 = vadd.f32 %v422, %v451
      %v459 = vadd.f32 %v423, %v451
      %v460 = vadd.f32 %v424, %v451
      %v461 = vadd.f32 %v425, %v451
      %v462 = vadd.f32 %v426, %v451
      %v463 = vadd.f32 %v427, %v451
      %v464 = vadd.f32 %v428, %v451
      %v465 = vadd.f32 %v429, %v451
      %v466 = vadd.f32 %v430, %v451
      %v467 = vadd.f32 %v431, %v451
      %v468 = vadd.f32 %v432, %v451
      %v469 = vadd.f32 %v433, %v451
      %v470 = vadd.f32 %v434, %v451
      %v471 = vadd.f32 %v435, %v451
      %v472 = vadd.f32 %v436, %v451
      %v473 = vadd.f32 %v437, %v451
      %v474 = vadd.f32 %v438, %v451
      %v475 = vadd.f32 %v439, %v451
      %v476 = vadd.f32 %v440, %v451
      %v477 = vadd.f32 %v441, %v451
      %v478 = vadd.f32 %v442, %v451
      %v479 = vadd.f32 %v443, %v451
      %v480 = vadd.f32 %v444, %v451
      %v481 = vadd.f32 %v445, %v451
      %v482 = vadd.f32 %v446, %v451
      %v483 = vadd.f32 %v447, %v451
      %v484 = vadd.f32 %v448, %v451
      %v485 = vmax.f32 %v453, 0.0
      %v486 = vmax.f32 %v454, 0.0
      %v487 = vmax.f32 %v455, 0.0
      %v488 = vmax.f32 %v456, 0.0
      %v489 = vmax.f32 %v457, 0.0
      %v490 = vmax.f32 %v458, 0.0
      %v491 = vmax.f32 %v459, 0.0
      %v492 = vmax.f32 %v460, 0.0
      %v493 = vmax.f32 %v461, 0.0
      %v494 = vmax.f32 %v462, 0.0
      %v495 = vmax.f32 %v463, 0.0
      %v496 = vmax.f32 %v464, 0.0
      %v497 = vmax.f32 %v465, 0.0
      %v498 = vmax.f32 %v466, 0.0
      %v499 = vmax.f32 %v467, 0.0
      %v500 = vmax.f32 %v468, 0.0
      %v501 = vmax.f32 %v469, 0.0
      %v502 = vmax.f32 %v470, 0.0
      %v503 = vmax.f32 %v471, 0.0
      %v504 = vmax.f32 %v472, 0.0
      %v505 = vmax.f32 %v473, 0.0
      %v506 = vmax.f32 %v474, 0.0
      %v507 = vmax.f32 %v475, 0.0
      %v508 = vmax.f32 %v476, 0.0
      %v509 = vmax.f32 %v477, 0.0
      %v510 = vmax.f32 %v478, 0.0
      %v511 = vmax.f32 %v479, 0.0
      %v512 = vmax.f32 %v480, 0.0
      %v513 = vmax.f32 %v481, 0.0
      %v514 = vmax.f32 %v482, 0.0
      %v515 = vmax.f32 %v483, 0.0
      %v516 = vmax.f32 %v484, 0.0
      %v517 = vpack.c.bf16 %v485, %v485
      %v518 = vpack.c.bf16 %v486, %v486
      %v519 = vpack.c.bf16 %v487, %v487
      %v520 = vpack.c.bf16 %v488, %v488
      %v521 = vpack.c.bf16 %v489, %v489
      %v522 = vpack.c.bf16 %v490, %v490
      %v523 = vpack.c.bf16 %v491, %v491
      %v524 = vpack.c.bf16 %v492, %v492
      %v525 = vpack.c.bf16 %v493, %v493
      %v526 = vpack.c.bf16 %v494, %v494
      %v527 = vpack.c.bf16 %v495, %v495
      %v528 = vpack.c.bf16 %v496, %v496
      %v529 = vpack.c.bf16 %v497, %v497
      %v530 = vpack.c.bf16 %v498, %v498
      %v531 = vpack.c.bf16 %v499, %v499
      %v532 = vpack.c.bf16 %v500, %v500
      %v533 = vpack.c.bf16 %v501, %v501
      %v534 = vpack.c.bf16 %v502, %v502
      %v535 = vpack.c.bf16 %v503, %v503
      %v536 = vpack.c.bf16 %v504, %v504
      %v537 = vpack.c.bf16 %v505, %v505
      %v538 = vpack.c.bf16 %v506, %v506
      %v539 = vpack.c.bf16 %v507, %v507
      %v540 = vpack.c.bf16 %v508, %v508
      %v541 = vpack.c.bf16 %v509, %v509
      %v542 = vpack.c.bf16 %v510, %v510
      %v543 = vpack.c.bf16 %v511, %v511
      %v544 = vpack.c.bf16 %v512, %v512
      %v545 = vpack.c.bf16 %v513, %v513
      %v546 = vpack.c.bf16 %v514, %v514
      %v547 = vpack.c.bf16 %v515, %v515
      %v548 = vpack.c.bf16 %v516, %v516
      %vm549 = vcmask 27648
      %550 = vst.msk [vmem:[#allocation2] sm:$0xf] %vm549, 0
      %551 = vst.msk [vmem:[#allocation2 + $0x4] sm:$0xf] %vm549, 0
      %vm552 = vcmask 24576
      %553 = vst.msk [vmem:[#allocation2 + $0x8] sm:$0x1] %vm552, 0
      %554 = vst.msk [vmem:[#allocation2 + $0xc] sm:$0xf] %vm549, 0
      %555 = vst.msk [vmem:[#allocation2 + $0x10] sm:$0xf] %vm549, 0
      %556 = vst.msk [vmem:[#allocation2 + $0x14] sm:$0x1] %vm552, 0
      %557 = vst.msk [vmem:[#allocation2 + $0x18] sm:$0xf] %vm549, 0
      %558 = vst.msk [vmem:[#allocation2 + $0x1c] sm:$0xf] %vm549, 0
      %559 = vst.msk [vmem:[#allocation2 + $0x20] sm:$0x1] %vm552, 0
      %560 = vst.msk [vmem:[#allocation2 + $0x24] sm:$0xf] %vm549, 0
      %561 = vst.msk [vmem:[#allocation2 + $0x28] sm:$0xf] %vm549, 0
      %562 = vst.msk [vmem:[#allocation2 + $0x2c] sm:$0x1] %vm552, 0
      %563 = vst.msk [vmem:[#allocation2 + $0x30] sm:$0xf] %vm549, 0
      %564 = vst.msk [vmem:[#allocation2 + $0x34] sm:$0xf] %vm549, 0
      %565 = vst.msk [vmem:[#allocation2 + $0x38] sm:$0x1] %vm552, 0
      %566 = vst.msk [vmem:[#allocation2 + $0x3c] sm:$0xf] %vm549, 0
      %567 = vst.msk [vmem:[#allocation2 + $0x40] sm:$0xf] %vm549, 0
      %568 = vst.msk [vmem:[#allocation2 + $0x44] sm:$0x1] %vm552, 0
      %569 = vst.msk [vmem:[#allocation2 + $0x48] sm:$0xf] %vm549, 0
      %570 = vst.msk [vmem:[#allocation2 + $0x4c] sm:$0xf] %vm549, 0
      %571 = vst.msk [vmem:[#allocation2 + $0x50] sm:$0x1] %vm552, 0
      %572 = vst.msk [vmem:[#allocation2 + $0x54] sm:$0xf] %vm549, 0
      %573 = vst.msk [vmem:[#allocation2 + $0x58] sm:$0xf] %vm549, 0
      %574 = vst.msk [vmem:[#allocation2 + $0x5c] sm:$0x1] %vm552, 0
      %575 = vst.msk [vmem:[#allocation2 + $0x60] sm:$0xf] %vm549, 0
      %576 = vst.msk [vmem:[#allocation2 + $0x64] sm:$0xf] %vm549, 0
      %577 = vst.msk [vmem:[#allocation2 + $0x68] sm:$0x1] %vm552, 0
      %578 = vst.msk [vmem:[#allocation2 + $0x6c] sm:$0xf] %vm549, 0
      %579 = vst.msk [vmem:[#allocation2 + $0x70] sm:$0xf] %vm549, 0
      %580 = vst.msk [vmem:[#allocation2 + $0x74] sm:$0x1] %vm552, 0
      %581 = vst.msk [vmem:[#allocation2 + $0x78] sm:$0xf] %vm549, 0
      %582 = vst.msk [vmem:[#allocation2 + $0x7c] sm:$0xf] %vm549, 0
      %583 = vst.msk [vmem:[#allocation2 + $0x80] sm:$0x1] %vm552, 0
      %584 = vst.msk [vmem:[#allocation2 + $0x84] sm:$0xf] %vm549, 0
      %585 = vst.msk [vmem:[#allocation2 + $0x88] sm:$0xf] %vm549, 0
      %586 = vst.msk [vmem:[#allocation2 + $0x8c] sm:$0x1] %vm552, 0
      %587 = vst.msk [vmem:[#allocation2 + $0x90] sm:$0xf] %vm549, 0
      %588 = vst.msk [vmem:[#allocation2 + $0x94] sm:$0xf] %vm549, 0
      %589 = vst.msk [vmem:[#allocation2 + $0x98] sm:$0x1] %vm552, 0
      %590 = vst.msk [vmem:[#allocation2 + $0x9c] sm:$0xf] %vm549, 0
      %591 = vst.msk [vmem:[#allocation2 + $0xa0] sm:$0xf] %vm549, 0
      %592 = vst.msk [vmem:[#allocation2 + $0xa4] sm:$0x1] %vm552, 0
      %593 = vst.msk [vmem:[#allocation2 + $0xa8] sm:$0xf] %vm549, 0
      %594 = vst.msk [vmem:[#allocation2 + $0xac] sm:$0xf] %vm549, 0
      %595 = vst.msk [vmem:[#allocation2 + $0xb0] sm:$0x1] %vm552, 0
      %596 = vst.msk [vmem:[#allocation2 + $0xb4] sm:$0xf] %vm549, 0
      %597 = vst.msk [vmem:[#allocation2 + $0xb8] sm:$0xf] %vm549, 0
      %598 = vst.msk [vmem:[#allocation2 + $0xbc] sm:$0x1] %vm552, 0
      %599 = vst.msk [vmem:[#allocation2 + $0xc0] sm:$0xf] %vm549, 0
      %600 = vst.msk [vmem:[#allocation2 + $0xc4] sm:$0xf] %vm549, 0
      %601 = vst.msk [vmem:[#allocation2 + $0xc8] sm:$0x1] %vm552, 0
      %602 = vst.msk [vmem:[#allocation2 + $0xcc] sm:$0xf] %vm549, 0
      %603 = vst.msk [vmem:[#allocation2 + $0xd0] sm:$0xf] %vm549, 0
      %604 = vst.msk [vmem:[#allocation2 + $0xd4] sm:$0x1] %vm552, 0
      %vm605 = vsmask.f32 256
      %vm606 = vsmask.f32 4368
      %vm607 = vmor %vm605, %vm606
      %v609 = vshrl.u32 %v517, 16
      %v611 = vrot.slane %v609, 7
      %v612 = vshll.u32 %v517, 16
      %v614 = vor.u32 %v611, %v612
      %v615 = vrot.slane %v611, 4
      %v617 = vshrl.u32 %v518, 16
      %v619 = vrot.slane %v617, 7
      %v620 = vshll.u32 %v518, 16
      %v622 = vor.u32 %v619, %v620
      %v623 = vsel %vm607, %v615, %v622
      %v624 = vrot.slane %v619, 4
      %v626 = vshrl.u32 %v519, 16
      %v628 = vrot.slane %v626, 7
      %v629 = vshll.u32 %v519, 16
      %v631 = vor.u32 %v628, %v629
      %v632 = vrot.slane %v628, 4
      %v634 = vshrl.u32 %v520, 16
      %v636 = vrot.slane %v634, 7
      %v637 = vshll.u32 %v520, 16
      %v639 = vor.u32 %v636, %v637
      %v640 = vsel %vm607, %v632, %v639
      %v641 = vrot.slane %v636, 4
      %v643 = vshrl.u32 %v521, 16
      %v645 = vrot.slane %v643, 7
      %v646 = vshll.u32 %v521, 16
      %v648 = vor.u32 %v645, %v646
      %v649 = vrot.slane %v645, 4
      %v651 = vshrl.u32 %v522, 16
      %v653 = vrot.slane %v651, 7
      %v654 = vshll.u32 %v522, 16
      %v656 = vor.u32 %v653, %v654
      %v657 = vsel %vm607, %v649, %v656
      %v658 = vrot.slane %v653, 4
      %v660 = vshrl.u32 %v523, 16
      %v662 = vrot.slane %v660, 7
      %v663 = vshll.u32 %v523, 16
      %v665 = vor.u32 %v662, %v663
      %v666 = vrot.slane %v662, 4
      %v668 = vshrl.u32 %v524, 16
      %v670 = vrot.slane %v668, 7
      %v671 = vshll.u32 %v524, 16
      %v673 = vor.u32 %v670, %v671
      %v674 = vsel %vm607, %v666, %v673
      %v675 = vrot.slane %v670, 4
      %v677 = vshrl.u32 %v525, 16
      %v679 = vrot.slane %v677, 7
      %v680 = vshll.u32 %v525, 16
      %v682 = vor.u32 %v679, %v680
      %v683 = vrot.slane %v679, 4
      %v685 = vshrl.u32 %v526, 16
      %v687 = vrot.slane %v685, 7
      %v688 = vshll.u32 %v526, 16
      %v690 = vor.u32 %v687, %v688
      %v691 = vsel %vm607, %v683, %v690
      %v692 = vrot.slane %v687, 4
      %v694 = vshrl.u32 %v527, 16
      %v696 = vrot.slane %v694, 7
      %v697 = vshll.u32 %v527, 16
      %v699 = vor.u32 %v696, %v697
      %v700 = vrot.slane %v696, 4
      %v702 = vshrl.u32 %v528, 16
      %v704 = vrot.slane %v702, 7
      %v705 = vshll.u32 %v528, 16
      %v707 = vor.u32 %v704, %v705
      %v708 = vsel %vm607, %v700, %v707
      %v709 = vrot.slane %v704, 4
      %v711 = vshrl.u32 %v529, 16
      %v713 = vrot.slane %v711, 7
      %v714 = vshll.u32 %v529, 16
      %v716 = vor.u32 %v713, %v714
      %v717 = vrot.slane %v713, 4
      %v719 = vshrl.u32 %v530, 16
      %v721 = vrot.slane %v719, 7
      %v722 = vshll.u32 %v530, 16
      %v724 = vor.u32 %v721, %v722
      %v725 = vsel %vm607, %v717, %v724
      %v726 = vrot.slane %v721, 4
      %v728 = vshrl.u32 %v531, 16
      %v730 = vrot.slane %v728, 7
      %v731 = vshll.u32 %v531, 16
      %v733 = vor.u32 %v730, %v731
      %v734 = vrot.slane %v730, 4
      %v736 = vshrl.u32 %v532, 16
      %v738 = vrot.slane %v736, 7
      %v739 = vshll.u32 %v532, 16
      %v741 = vor.u32 %v738, %v739
      %v742 = vsel %vm607, %v734, %v741
      %v743 = vrot.slane %v738, 4
      %v745 = vshrl.u32 %v533, 16
      %v747 = vrot.slane %v745, 7
      %v748 = vshll.u32 %v533, 16
      %v750 = vor.u32 %v747, %v748
      %v751 = vrot.slane %v747, 4
      %v753 = vshrl.u32 %v534, 16
      %v755 = vrot.slane %v753, 7
      %v756 = vshll.u32 %v534, 16
      %v758 = vor.u32 %v755, %v756
      %v759 = vsel %vm607, %v751, %v758
      %v760 = vrot.slane %v755, 4
      %v762 = vshrl.u32 %v535, 16
      %v764 = vrot.slane %v762, 7
      %v765 = vshll.u32 %v535, 16
      %v767 = vor.u32 %v764, %v765
      %v768 = vrot.slane %v764, 4
      %v770 = vshrl.u32 %v536, 16
      %v772 = vrot.slane %v770, 7
      %v773 = vshll.u32 %v536, 16
      %v775 = vor.u32 %v772, %v773
      %v776 = vsel %vm607, %v768, %v775
      %v777 = vrot.slane %v772, 4
      %v779 = vshrl.u32 %v537, 16
      %v781 = vrot.slane %v779, 7
      %v782 = vshll.u32 %v537, 16
      %v784 = vor.u32 %v781, %v782
      %v785 = vrot.slane %v781, 4
      %v787 = vshrl.u32 %v538, 16
      %v789 = vrot.slane %v787, 7
      %v790 = vshll.u32 %v538, 16
      %v792 = vor.u32 %v789, %v790
      %v793 = vsel %vm607, %v785, %v792
      %v794 = vrot.slane %v789, 4
      %v796 = vshrl.u32 %v539, 16
      %v798 = vrot.slane %v796, 7
      %v799 = vshll.u32 %v539, 16
      %v801 = vor.u32 %v798, %v799
      %v802 = vrot.slane %v798, 4
      %v804 = vshrl.u32 %v540, 16
      %v806 = vrot.slane %v804, 7
      %v807 = vshll.u32 %v540, 16
      %v809 = vor.u32 %v806, %v807
      %v810 = vsel %vm607, %v802, %v809
      %v811 = vrot.slane %v806, 4
      %v813 = vshrl.u32 %v541, 16
      %v815 = vrot.slane %v813, 7
      %v816 = vshll.u32 %v541, 16
      %v818 = vor.u32 %v815, %v816
      %v819 = vrot.slane %v815, 4
      %v821 = vshrl.u32 %v542, 16
      %v823 = vrot.slane %v821, 7
      %v824 = vshll.u32 %v542, 16
      %v826 = vor.u32 %v823, %v824
      %v827 = vsel %vm607, %v819, %v826
      %v828 = vrot.slane %v823, 4
      %v830 = vshrl.u32 %v543, 16
      %v832 = vrot.slane %v830, 7
      %v833 = vshll.u32 %v543, 16
      %v835 = vor.u32 %v832, %v833
      %v836 = vrot.slane %v832, 4
      %v838 = vshrl.u32 %v544, 16
      %v840 = vrot.slane %v838, 7
      %v841 = vshll.u32 %v544, 16
      %v843 = vor.u32 %v840, %v841
      %v844 = vsel %vm607, %v836, %v843
      %v845 = vrot.slane %v840, 4
      %v847 = vshrl.u32 %v545, 16
      %v849 = vrot.slane %v847, 7
      %v850 = vshll.u32 %v545, 16
      %v852 = vor.u32 %v849, %v850
      %v853 = vrot.slane %v849, 4
      %v855 = vshrl.u32 %v546, 16
      %v857 = vrot.slane %v855, 7
      %v858 = vshll.u32 %v546, 16
      %v860 = vor.u32 %v857, %v858
      %v861 = vsel %vm607, %v853, %v860
      %v862 = vrot.slane %v857, 4
      %v864 = vshrl.u32 %v547, 16
      %v866 = vrot.slane %v864, 7
      %v867 = vshll.u32 %v547, 16
      %v869 = vor.u32 %v866, %v867
      %v870 = vrot.slane %v866, 4
      %v872 = vshrl.u32 %v548, 16
      %v874 = vrot.slane %v872, 7
      %v875 = vshll.u32 %v548, 16
      %v877 = vor.u32 %v874, %v875
      %v878 = vsel %vm607, %v870, %v877
      %v879 = vrot.slane %v874, 4
      %s928 = scalar_lea.vmem [#allocation2], 12
      %vm929 = vcmask 27648
      %vm930 = vsmask.f32 7938
      %vm931 = vmand %vm929, %vm930
      %v932 = vld [vmem:[%s928] sm:$0xf]
      %v933 = vsel %vm931, %v614, %v932
      %934 = vst [vmem:[%s928] sm:$0xf] %v933
      %935 = vst.msk [vmem:[%s928 + $0x4] sm:$0xf] %vm549, %v623
      %vm936 = vcmask 24576
      %vm937 = vmand %vm936, %vm605
      %v938 = vld [vmem:[%s928 + $0x8] sm:$0x1]
      %v939 = vsel %vm937, %v624, %v938
      %940 = vst [vmem:[%s928 + $0x8] sm:$0x1] %v939
      %v941 = vld [vmem:[%s928 + $0xc] sm:$0xf]
      %v942 = vsel %vm931, %v631, %v941
      %943 = vst [vmem:[%s928 + $0xc] sm:$0xf] %v942
      %944 = vst.msk [vmem:[%s928 + $0x10] sm:$0xf] %vm549, %v640
      %v945 = vld [vmem:[%s928 + $0x14] sm:$0x1]
      %v946 = vsel %vm937, %v641, %v945
      %947 = vst [vmem:[%s928 + $0x14] sm:$0x1] %v946
      %v948 = vld [vmem:[%s928 + $0x18] sm:$0xf]
      %v949 = vsel %vm931, %v648, %v948
      %950 = vst [vmem:[%s928 + $0x18] sm:$0xf] %v949
      %951 = vst.msk [vmem:[%s928 + $0x1c] sm:$0xf] %vm549, %v657
      %v952 = vld [vmem:[%s928 + $0x20] sm:$0x1]
      %v953 = vsel %vm937, %v658, %v952
      %954 = vst [vmem:[%s928 + $0x20] sm:$0x1] %v953
      %v955 = vld [vmem:[%s928 + $0x24] sm:$0xf]
      %v956 = vsel %vm931, %v665, %v955
      %957 = vst [vmem:[%s928 + $0x24] sm:$0xf] %v956
      %958 = vst.msk [vmem:[%s928 + $0x28] sm:$0xf] %vm549, %v674
      %v959 = vld [vmem:[%s928 + $0x2c] sm:$0x1]
      %v960 = vsel %vm937, %v675, %v959
      %961 = vst [vmem:[%s928 + $0x2c] sm:$0x1] %v960
      %v962 = vld [vmem:[%s928 + $0x30] sm:$0xf]
      %v963 = vsel %vm931, %v682, %v962
      %964 = vst [vmem:[%s928 + $0x30] sm:$0xf] %v963
      %965 = vst.msk [vmem:[%s928 + $0x34] sm:$0xf] %vm549, %v691
      %v966 = vld [vmem:[%s928 + $0x38] sm:$0x1]
      %v967 = vsel %vm937, %v692, %v966
      %968 = vst [vmem:[%s928 + $0x38] sm:$0x1] %v967
      %v969 = vld [vmem:[%s928 + $0x3c] sm:$0xf]
      %v970 = vsel %vm931, %v699, %v969
      %971 = vst [vmem:[%s928 + $0x3c] sm:$0xf] %v970
      %972 = vst.msk [vmem:[%s928 + $0x40] sm:$0xf] %vm549, %v708
      %v973 = vld [vmem:[%s928 + $0x44] sm:$0x1]
      %v974 = vsel %vm937, %v709, %v973
      %975 = vst [vmem:[%s928 + $0x44] sm:$0x1] %v974
      %v976 = vld [vmem:[%s928 + $0x48] sm:$0xf]
      %v977 = vsel %vm931, %v716, %v976
      %978 = vst [vmem:[%s928 + $0x48] sm:$0xf] %v977
      %979 = vst.msk [vmem:[%s928 + $0x4c] sm:$0xf] %vm549, %v725
      %v980 = vld [vmem:[%s928 + $0x50] sm:$0x1]
      %v981 = vsel %vm937, %v726, %v980
      %982 = vst [vmem:[%s928 + $0x50] sm:$0x1] %v981
      %v983 = vld [vmem:[%s928 + $0x54] sm:$0xf]
      %v984 = vsel %vm931, %v733, %v983
      %985 = vst [vmem:[%s928 + $0x54] sm:$0xf] %v984
      %986 = vst.msk [vmem:[%s928 + $0x58] sm:$0xf] %vm549, %v742
      %v987 = vld [vmem:[%s928 + $0x5c] sm:$0x1]
      %v988 = vsel %vm937, %v743, %v987
      %989 = vst [vmem:[%s928 + $0x5c] sm:$0x1] %v988
      %v990 = vld [vmem:[%s928 + $0x60] sm:$0xf]
      %v991 = vsel %vm931, %v750, %v990
      %992 = vst [vmem:[%s928 + $0x60] sm:$0xf] %v991
      %993 = vst.msk [vmem:[%s928 + $0x64] sm:$0xf] %vm549, %v759
      %v994 = vld [vmem:[%s928 + $0x68] sm:$0x1]
      %v995 = vsel %vm937, %v760, %v994
      %996 = vst [vmem:[%s928 + $0x68] sm:$0x1] %v995
      %v997 = vld [vmem:[%s928 + $0x6c] sm:$0xf]
      %v998 = vsel %vm931, %v767, %v997
      %999 = vst [vmem:[%s928 + $0x6c] sm:$0xf] %v998
      %1000 = vst.msk [vmem:[%s928 + $0x70] sm:$0xf] %vm549, %v776
      %v1001 = vld [vmem:[%s928 + $0x74] sm:$0x1]
      %v1002 = vsel %vm937, %v777, %v1001
      %1003 = vst [vmem:[%s928 + $0x74] sm:$0x1] %v1002
      %v1004 = vld [vmem:[%s928 + $0x78] sm:$0xf]
      %v1005 = vsel %vm931, %v784, %v1004
      %1006 = vst [vmem:[%s928 + $0x78] sm:$0xf] %v1005
      %1007 = vst.msk [vmem:[%s928 + $0x7c] sm:$0xf] %vm549, %v793
      %v1008 = vld [vmem:[%s928 + $0x80] sm:$0x1]
      %v1009 = vsel %vm937, %v794, %v1008
      %1010 = vst [vmem:[%s928 + $0x80] sm:$0x1] %v1009
      %v1011 = vld [vmem:[%s928 + $0x84] sm:$0xf]
      %v1012 = vsel %vm931, %v801, %v1011
      %1013 = vst [vmem:[%s928 + $0x84] sm:$0xf] %v1012
      %1014 = vst.msk [vmem:[%s928 + $0x88] sm:$0xf] %vm549, %v810
      %v1015 = vld [vmem:[%s928 + $0x8c] sm:$0x1]
      %v1016 = vsel %vm937, %v811, %v1015
      %1017 = vst [vmem:[%s928 + $0x8c] sm:$0x1] %v1016
      %v1018 = vld [vmem:[%s928 + $0x90] sm:$0xf]
      %v1019 = vsel %vm931, %v818, %v1018
      %1020 = vst [vmem:[%s928 + $0x90] sm:$0xf] %v1019
      %1021 = vst.msk [vmem:[%s928 + $0x94] sm:$0xf] %vm549, %v827
      %v1022 = vld [vmem:[%s928 + $0x98] sm:$0x1]
      %v1023 = vsel %vm937, %v828, %v1022
      %1024 = vst [vmem:[%s928 + $0x98] sm:$0x1] %v1023
      %v1025 = vld [vmem:[%s928 + $0x9c] sm:$0xf]
      %v1026 = vsel %vm931, %v835, %v1025
      %1027 = vst [vmem:[%s928 + $0x9c] sm:$0xf] %v1026
      %1028 = vst.msk [vmem:[%s928 + $0xa0] sm:$0xf] %vm549, %v844
      %v1029 = vld [vmem:[%s928 + $0xa4] sm:$0x1]
      %v1030 = vsel %vm937, %v845, %v1029
      %1031 = vst [vmem:[%s928 + $0xa4] sm:$0x1] %v1030
      %v1032 = vld [vmem:[%s928 + $0xa8] sm:$0xf]
      %v1033 = vsel %vm931, %v852, %v1032
      %1034 = vst [vmem:[%s928 + $0xa8] sm:$0xf] %v1033
      %1035 = vst.msk [vmem:[%s928 + $0xac] sm:$0xf] %vm549, %v861
      %v1036 = vld [vmem:[%s928 + $0xb0] sm:$0x1]
      %v1037 = vsel %vm937, %v862, %v1036
      %1038 = vst [vmem:[%s928 + $0xb0] sm:$0x1] %v1037
      %v1039 = vld [vmem:[%s928 + $0xb4] sm:$0xf]
      %v1040 = vsel %vm931, %v869, %v1039
      %1041 = vst [vmem:[%s928 + $0xb4] sm:$0xf] %v1040
      %1042 = vst.msk [vmem:[%s928 + $0xb8] sm:$0xf] %vm549, %v878
      %v1043 = vld [vmem:[%s928 + $0xbc] sm:$0x1]
      %v1044 = vsel %vm937, %v879, %v1043
      %1045 = vst [vmem:[%s928 + $0xbc] sm:$0x1] %v1044
      %v1046 = vld [vmem:[#allocation2] sm:$0xf]
      %v1047 = vld [vmem:[#allocation2 + $0x4] sm:$0xf]
      %v1048 = vld [vmem:[#allocation2 + $0xc] sm:$0xf]
      %v1049 = vld [vmem:[#allocation2 + $0x10] sm:$0xf]
      %v1050 = vld [vmem:[#allocation2 + $0x18] sm:$0xf]
      %v1051 = vld [vmem:[#allocation2 + $0x1c] sm:$0xf]
      %v1052 = vld [vmem:[#allocation2 + $0x24] sm:$0xf]
      %v1053 = vld [vmem:[#allocation2 + $0x28] sm:$0xf]
      %v1054 = vld [vmem:[#allocation2 + $0x30] sm:$0xf]
      %v1055 = vld [vmem:[#allocation2 + $0x34] sm:$0xf]
      %v1056 = vld [vmem:[#allocation2 + $0x3c] sm:$0xf]
      %v1057 = vld [vmem:[#allocation2 + $0x40] sm:$0xf]
      %v1058 = vld [vmem:[#allocation2 + $0x48] sm:$0xf]
      %v1059 = vld [vmem:[#allocation2 + $0x4c] sm:$0xf]
      %v1060 = vld [vmem:[#allocation2 + $0x54] sm:$0xf]
      %v1061 = vld [vmem:[#allocation2 + $0x58] sm:$0xf]
      %v1062 = vld [vmem:[#allocation2 + $0x60] sm:$0xf]
      %v1063 = vld [vmem:[#allocation2 + $0x64] sm:$0xf]
      %v1064 = vld [vmem:[#allocation2 + $0x6c] sm:$0xf]
      %v1065 = vld [vmem:[#allocation2 + $0x70] sm:$0xf]
      %v1066 = vld [vmem:[#allocation2 + $0x78] sm:$0xf]
      %v1067 = vld [vmem:[#allocation2 + $0x7c] sm:$0xf]
      %v1068 = vld [vmem:[#allocation2 + $0x84] sm:$0xf]
      %v1069 = vld [vmem:[#allocation2 + $0x88] sm:$0xf]
      %v1070 = vld [vmem:[#allocation2 + $0x90] sm:$0xf]
      %v1071 = vld [vmem:[#allocation2 + $0x94] sm:$0xf]
      %v1072 = vld [vmem:[#allocation2 + $0x9c] sm:$0xf]
      %v1073 = vld [vmem:[#allocation2 + $0xa0] sm:$0xf]
      %v1074 = vld [vmem:[#allocation2 + $0xa8] sm:$0xf]
      %v1075 = vld [vmem:[#allocation2 + $0xac] sm:$0xf]
      %v1076 = vld [vmem:[#allocation2 + $0xb4] sm:$0xf]
      %v1077 = vld [vmem:[#allocation2 + $0xb8] sm:$0xf]
      %v1078 = vld [vmem:[#allocation2 + $0x8] sm:$0x1]
      %v1079 = vld [vmem:[#allocation2 + $0x14] sm:$0x1]
      %v1080 = vld [vmem:[#allocation2 + $0x20] sm:$0x1]
      %v1081 = vld [vmem:[#allocation2 + $0x2c] sm:$0x1]
      %v1082 = vld [vmem:[#allocation2 + $0x38] sm:$0x1]
      %v1083 = vld [vmem:[#allocation2 + $0x44] sm:$0x1]
      %v1084 = vld [vmem:[#allocation2 + $0x50] sm:$0x1]
      %v1085 = vld [vmem:[#allocation2 + $0x5c] sm:$0x1]
      %v1086 = vld [vmem:[#allocation2 + $0x68] sm:$0x1]
      %v1087 = vld [vmem:[#allocation2 + $0x74] sm:$0x1]
      %v1088 = vld [vmem:[#allocation2 + $0x80] sm:$0x1]
      %v1089 = vld [vmem:[#allocation2 + $0x8c] sm:$0x1]
      %v1090 = vld [vmem:[#allocation2 + $0x98] sm:$0x1]
      %v1091 = vld [vmem:[#allocation2 + $0xa4] sm:$0x1]
      %v1092 = vld [vmem:[#allocation2 + $0xb0] sm:$0x1]
      %v1093 = vld [vmem:[#allocation2 + $0xbc] sm:$0x1]
      %vm1094 = vsmask.f32 3328
      %vm1095 = vsmask.f32 7440
      %vm1096 = vmor %vm1094, %vm1095
      %v1098 = vshrl.u32 %v1046, 16
      %v1100 = vrot.slane %v1098, 4
      %v1101 = vshll.u32 %v1046, 16
      %v1103 = vrot.slane %v1101, 5
      %v1104 = vor.u32 %v1100, %v1103
      %v1105 = vrot.slane %v1104, 4
      %v1107 = vshll.u32 %v1047, 16
      %v1109 = vrot.slane %v1107, 5
      %v1110 = vsel %vm1096, %v1105, %v1109
      %v1111 = vshrl.u32 %v1047, 16
      %v1113 = vrot.slane %v1111, 4
      %v1114 = vor.u32 %v1113, %v1109
      %v1115 = vrot.slane %v1114, 4
      %v1117 = vshll.u32 %v1078, 16
      %v1119 = vrot.slane %v1117, 5
      %v1120 = vsel %vm1096, %v1115, %v1119
      %v1122 = vshrl.u32 %v1048, 16
      %v1124 = vrot.slane %v1122, 4
      %v1125 = vshll.u32 %v1048, 16
      %v1127 = vrot.slane %v1125, 5
      %v1128 = vor.u32 %v1124, %v1127
      %v1129 = vrot.slane %v1128, 4
      %v1131 = vshll.u32 %v1049, 16
      %v1133 = vrot.slane %v1131, 5
      %v1134 = vsel %vm1096, %v1129, %v1133
      %v1135 = vshrl.u32 %v1049, 16
      %v1137 = vrot.slane %v1135, 4
      %v1138 = vor.u32 %v1137, %v1133
      %v1139 = vrot.slane %v1138, 4
      %v1141 = vshll.u32 %v1079, 16
      %v1143 = vrot.slane %v1141, 5
      %v1144 = vsel %vm1096, %v1139, %v1143
      %v1146 = vshrl.u32 %v1050, 16
      %v1148 = vrot.slane %v1146, 4
      %v1149 = vshll.u32 %v1050, 16
      %v1151 = vrot.slane %v1149, 5
      %v1152 = vor.u32 %v1148, %v1151
      %v1153 = vrot.slane %v1152, 4
      %v1155 = vshll.u32 %v1051, 16
      %v1157 = vrot.slane %v1155, 5
      %v1158 = vsel %vm1096, %v1153, %v1157
      %v1159 = vshrl.u32 %v1051, 16
      %v1161 = vrot.slane %v1159, 4
      %v1162 = vor.u32 %v1161, %v1157
      %v1163 = vrot.slane %v1162, 4
      %v1165 = vshll.u32 %v1080, 16
      %v1167 = vrot.slane %v1165, 5
      %v1168 = vsel %vm1096, %v1163, %v1167
      %v1170 = vshrl.u32 %v1052, 16
      %v1172 = vrot.slane %v1170, 4
      %v1173 = vshll.u32 %v1052, 16
      %v1175 = vrot.slane %v1173, 5
      %v1176 = vor.u32 %v1172, %v1175
      %v1177 = vrot.slane %v1176, 4
      %v1179 = vshll.u32 %v1053, 16
      %v1181 = vrot.slane %v1179, 5
      %v1182 = vsel %vm1096, %v1177, %v1181
      %v1183 = vshrl.u32 %v1053, 16
      %v1185 = vrot.slane %v1183, 4
      %v1186 = vor.u32 %v1185, %v1181
      %v1187 = vrot.slane %v1186, 4
      %v1189 = vshll.u32 %v1081, 16
      %v1191 = vrot.slane %v1189, 5
      %v1192 = vsel %vm1096, %v1187, %v1191
      %v1194 = vshrl.u32 %v1054, 16
      %v1196 = vrot.slane %v1194, 4
      %v1197 = vshll.u32 %v1054, 16
      %v1199 = vrot.slane %v1197, 5
      %v1200 = vor.u32 %v1196, %v1199
      %v1201 = vrot.slane %v1200, 4
      %v1203 = vshll.u32 %v1055, 16
      %v1205 = vrot.slane %v1203, 5
      %v1206 = vsel %vm1096, %v1201, %v1205
      %v1207 = vshrl.u32 %v1055, 16
      %v1209 = vrot.slane %v1207, 4
      %v1210 = vor.u32 %v1209, %v1205
      %v1211 = vrot.slane %v1210, 4
      %v1213 = vshll.u32 %v1082, 16
      %v1215 = vrot.slane %v1213, 5
      %v1216 = vsel %vm1096, %v1211, %v1215
      %v1218 = vshrl.u32 %v1056, 16
      %v1220 = vrot.slane %v1218, 4
      %v1221 = vshll.u32 %v1056, 16
      %v1223 = vrot.slane %v1221, 5
      %v1224 = vor.u32 %v1220, %v1223
      %v1225 = vrot.slane %v1224, 4
      %v1227 = vshll.u32 %v1057, 16
      %v1229 = vrot.slane %v1227, 5
      %v1230 = vsel %vm1096, %v1225, %v1229
      %v1231 = vshrl.u32 %v1057, 16
      %v1233 = vrot.slane %v1231, 4
      %v1234 = vor.u32 %v1233, %v1229
      %v1235 = vrot.slane %v1234, 4
      %v1237 = vshll.u32 %v1083, 16
      %v1239 = vrot.slane %v1237, 5
      %v1240 = vsel %vm1096, %v1235, %v1239
      %v1242 = vshrl.u32 %v1058, 16
      %v1244 = vrot.slane %v1242, 4
      %v1245 = vshll.u32 %v1058, 16
      %v1247 = vrot.slane %v1245, 5
      %v1248 = vor.u32 %v1244, %v1247
      %v1249 = vrot.slane %v1248, 4
      %v1251 = vshll.u32 %v1059, 16
      %v1253 = vrot.slane %v1251, 5
      %v1254 = vsel %vm1096, %v1249, %v1253
      %v1255 = vshrl.u32 %v1059, 16
      %v1257 = vrot.slane %v1255, 4
      %v1258 = vor.u32 %v1257, %v1253
      %v1259 = vrot.slane %v1258, 4
      %v1261 = vshll.u32 %v1084, 16
      %v1263 = vrot.slane %v1261, 5
      %v1264 = vsel %vm1096, %v1259, %v1263
      %v1266 = vshrl.u32 %v1060, 16
      %v1268 = vrot.slane %v1266, 4
      %v1269 = vshll.u32 %v1060, 16
      %v1271 = vrot.slane %v1269, 5
      %v1272 = vor.u32 %v1268, %v1271
      %v1273 = vrot.slane %v1272, 4
      %v1275 = vshll.u32 %v1061, 16
      %v1277 = vrot.slane %v1275, 5
      %v1278 = vsel %vm1096, %v1273, %v1277
      %v1279 = vshrl.u32 %v1061, 16
      %v1281 = vrot.slane %v1279, 4
      %v1282 = vor.u32 %v1281, %v1277
      %v1283 = vrot.slane %v1282, 4
      %v1285 = vshll.u32 %v1085, 16
      %v1287 = vrot.slane %v1285, 5
      %v1288 = vsel %vm1096, %v1283, %v1287
      %v1290 = vshrl.u32 %v1062, 16
      %v1292 = vrot.slane %v1290, 4
      %v1293 = vshll.u32 %v1062, 16
      %v1295 = vrot.slane %v1293, 5
      %v1296 = vor.u32 %v1292, %v1295
      %v1297 = vrot.slane %v1296, 4
      %v1299 = vshll.u32 %v1063, 16
      %v1301 = vrot.slane %v1299, 5
      %v1302 = vsel %vm1096, %v1297, %v1301
      %v1303 = vshrl.u32 %v1063, 16
      %v1305 = vrot.slane %v1303, 4
      %v1306 = vor.u32 %v1305, %v1301
      %v1307 = vrot.slane %v1306, 4
      %v1309 = vshll.u32 %v1086, 16
      %v1311 = vrot.slane %v1309, 5
      %v1312 = vsel %vm1096, %v1307, %v1311
      %v1314 = vshrl.u32 %v1064, 16
      %v1316 = vrot.slane %v1314, 4
      %v1317 = vshll.u32 %v1064, 16
      %v1319 = vrot.slane %v1317, 5
      %v1320 = vor.u32 %v1316, %v1319
      %v1321 = vrot.slane %v1320, 4
      %v1323 = vshll.u32 %v1065, 16
      %v1325 = vrot.slane %v1323, 5
      %v1326 = vsel %vm1096, %v1321, %v1325
      %v1327 = vshrl.u32 %v1065, 16
      %v1329 = vrot.slane %v1327, 4
      %v1330 = vor.u32 %v1329, %v1325
      %v1331 = vrot.slane %v1330, 4
      %v1333 = vshll.u32 %v1087, 16
      %v1335 = vrot.slane %v1333, 5
      %v1336 = vsel %vm1096, %v1331, %v1335
      %v1338 = vshrl.u32 %v1066, 16
      %v1340 = vrot.slane %v1338, 4
      %v1341 = vshll.u32 %v1066, 16
      %v1343 = vrot.slane %v1341, 5
      %v1344 = vor.u32 %v1340, %v1343
      %v1345 = vrot.slane %v1344, 4
      %v1347 = vshll.u32 %v1067, 16
      %v1349 = vrot.slane %v1347, 5
      %v1350 = vsel %vm1096, %v1345, %v1349
      %v1351 = vshrl.u32 %v1067, 16
      %v1353 = vrot.slane %v1351, 4
      %v1354 = vor.u32 %v1353, %v1349
      %v1355 = vrot.slane %v1354, 4
      %v1357 = vshll.u32 %v1088, 16
      %v1359 = vrot.slane %v1357, 5
      %v1360 = vsel %vm1096, %v1355, %v1359
      %v1362 = vshrl.u32 %v1068, 16
      %v1364 = vrot.slane %v1362, 4
      %v1365 = vshll.u32 %v1068, 16
      %v1367 = vrot.slane %v1365, 5
      %v1368 = vor.u32 %v1364, %v1367
      %v1369 = vrot.slane %v1368, 4
      %v1371 = vshll.u32 %v1069, 16
      %v1373 = vrot.slane %v1371, 5
      %v1374 = vsel %vm1096, %v1369, %v1373
      %v1375 = vshrl.u32 %v1069, 16
      %v1377 = vrot.slane %v1375, 4
      %v1378 = vor.u32 %v1377, %v1373
      %v1379 = vrot.slane %v1378, 4
      %v1381 = vshll.u32 %v1089, 16
      %v1383 = vrot.slane %v1381, 5
      %v1384 = vsel %vm1096, %v1379, %v1383
      %v1386 = vshrl.u32 %v1070, 16
      %v1388 = vrot.slane %v1386, 4
      %v1389 = vshll.u32 %v1070, 16
      %v1391 = vrot.slane %v1389, 5
      %v1392 = vor.u32 %v1388, %v1391
      %v1393 = vrot.slane %v1392, 4
      %v1395 = vshll.u32 %v1071, 16
      %v1397 = vrot.slane %v1395, 5
      %v1398 = vsel %vm1096, %v1393, %v1397
      %v1399 = vshrl.u32 %v1071, 16
      %v1401 = vrot.slane %v1399, 4
      %v1402 = vor.u32 %v1401, %v1397
      %v1403 = vrot.slane %v1402, 4
      %v1405 = vshll.u32 %v1090, 16
      %v1407 = vrot.slane %v1405, 5
      %v1408 = vsel %vm1096, %v1403, %v1407
      %v1410 = vshrl.u32 %v1072, 16
      %v1412 = vrot.slane %v1410, 4
      %v1413 = vshll.u32 %v1072, 16
      %v1415 = vrot.slane %v1413, 5
      %v1416 = vor.u32 %v1412, %v1415
      %v1417 = vrot.slane %v1416, 4
      %v1419 = vshll.u32 %v1073, 16
      %v1421 = vrot.slane %v1419, 5
      %v1422 = vsel %vm1096, %v1417, %v1421
      %v1423 = vshrl.u32 %v1073, 16
      %v1425 = vrot.slane %v1423, 4
      %v1426 = vor.u32 %v1425, %v1421
      %v1427 = vrot.slane %v1426, 4
      %v1429 = vshll.u32 %v1091, 16
      %v1431 = vrot.slane %v1429, 5
      %v1432 = vsel %vm1096, %v1427, %v1431
      %v1434 = vshrl.u32 %v1074, 16
      %v1436 = vrot.slane %v1434, 4
      %v1437 = vshll.u32 %v1074, 16
      %v1439 = vrot.slane %v1437, 5
      %v1440 = vor.u32 %v1436, %v1439
      %v1441 = vrot.slane %v1440, 4
      %v1443 = vshll.u32 %v1075, 16
      %v1445 = vrot.slane %v1443, 5
      %v1446 = vsel %vm1096, %v1441, %v1445
      %v1447 = vshrl.u32 %v1075, 16
      %v1449 = vrot.slane %v1447, 4
      %v1450 = vor.u32 %v1449, %v1445
      %v1451 = vrot.slane %v1450, 4
      %v1453 = vshll.u32 %v1092, 16
      %v1455 = vrot.slane %v1453, 5
      %v1456 = vsel %vm1096, %v1451, %v1455
      %v1458 = vshrl.u32 %v1076, 16
      %v1460 = vrot.slane %v1458, 4
      %v1461 = vshll.u32 %v1076, 16
      %v1463 = vrot.slane %v1461, 5
      %v1464 = vor.u32 %v1460, %v1463
      %v1465 = vrot.slane %v1464, 4
      %v1467 = vshll.u32 %v1077, 16
      %v1469 = vrot.slane %v1467, 5
      %v1470 = vsel %vm1096, %v1465, %v1469
      %v1471 = vshrl.u32 %v1077, 16
      %v1473 = vrot.slane %v1471, 4
      %v1474 = vor.u32 %v1473, %v1469
      %v1475 = vrot.slane %v1474, 4
      %v1477 = vshll.u32 %v1093, 16
      %v1479 = vrot.slane %v1477, 5
      %v1480 = vsel %vm1096, %v1475, %v1479
      %v1481 = vld [vmem:[#allocation2] sm:$0xe]
      %v1482 = vld [vmem:[#allocation2 + $0xc] sm:$0xe]
      %v1483 = vld [vmem:[#allocation2 + $0x18] sm:$0xe]
      %v1484 = vld [vmem:[#allocation2 + $0x24] sm:$0xe]
      %v1485 = vld [vmem:[#allocation2 + $0x30] sm:$0xe]
      %v1486 = vld [vmem:[#allocation2 + $0x3c] sm:$0xe]
      %v1487 = vld [vmem:[#allocation2 + $0x48] sm:$0xe]
      %v1488 = vld [vmem:[#allocation2 + $0x54] sm:$0xe]
      %v1489 = vld [vmem:[#allocation2 + $0x60] sm:$0xe]
      %v1490 = vld [vmem:[#allocation2 + $0x6c] sm:$0xe]
      %v1491 = vld [vmem:[#allocation2 + $0x78] sm:$0xe]
      %v1492 = vld [vmem:[#allocation2 + $0x84] sm:$0xe]
      %v1493 = vld [vmem:[#allocation2 + $0x90] sm:$0xe]
      %v1494 = vld [vmem:[#allocation2 + $0x9c] sm:$0xe]
      %v1495 = vld [vmem:[#allocation2 + $0xa8] sm:$0xe]
      %v1496 = vld [vmem:[#allocation2 + $0xb4] sm:$0xe]
      %vm1545 = vcmask 1042432
      %vm1546 = vcmask 1046532
      %vm1547 = vmor %vm1545, %vm1546
      %v1548 = vrot.slane %v1481, 5
      %v1549 = vrot.slane %v1548, 4
      %v1550 = vrot.slane %v1047, 5
      %v1551 = vsel %vm1547, %v1549, %v1550
      %v1552 = vrot.slane %v1550, 4
      %v1553 = vrot.slane %v1078, 5
      %v1554 = vsel %vm1547, %v1552, %v1553
      %v1555 = vrot.slane %v1482, 5
      %v1556 = vrot.slane %v1555, 4
      %v1557 = vrot.slane %v1049, 5
      %v1558 = vsel %vm1547, %v1556, %v1557
      %v1559 = vrot.slane %v1557, 4
      %v1560 = vrot.slane %v1079, 5
      %v1561 = vsel %vm1547, %v1559, %v1560
      %v1562 = vrot.slane %v1483, 5
      %v1563 = vrot.slane %v1562, 4
      %v1564 = vrot.slane %v1051, 5
      %v1565 = vsel %vm1547, %v1563, %v1564
      %v1566 = vrot.slane %v1564, 4
      %v1567 = vrot.slane %v1080, 5
      %v1568 = vsel %vm1547, %v1566, %v1567
      %v1569 = vrot.slane %v1484, 5
      %v1570 = vrot.slane %v1569, 4
      %v1571 = vrot.slane %v1053, 5
      %v1572 = vsel %vm1547, %v1570, %v1571
      %v1573 = vrot.slane %v1571, 4
      %v1574 = vrot.slane %v1081, 5
      %v1575 = vsel %vm1547, %v1573, %v1574
      %v1576 = vrot.slane %v1485, 5
      %v1577 = vrot.slane %v1576, 4
      %v1578 = vrot.slane %v1055, 5
      %v1579 = vsel %vm1547, %v1577, %v1578
      %v1580 = vrot.slane %v1578, 4
      %v1581 = vrot.slane %v1082, 5
      %v1582 = vsel %vm1547, %v1580, %v1581
      %v1583 = vrot.slane %v1486, 5
      %v1584 = vrot.slane %v1583, 4
      %v1585 = vrot.slane %v1057, 5
      %v1586 = vsel %vm1547, %v1584, %v1585
      %v1587 = vrot.slane %v1585, 4
      %v1588 = vrot.slane %v1083, 5
      %v1589 = vsel %vm1547, %v1587, %v1588
      %v1590 = vrot.slane %v1487, 5
      %v1591 = vrot.slane %v1590, 4
      %v1592 = vrot.slane %v1059, 5
      %v1593 = vsel %vm1547, %v1591, %v1592
      %v1594 = vrot.slane %v1592, 4
      %v1595 = vrot.slane %v1084, 5
      %v1596 = vsel %vm1547, %v1594, %v1595
      %v1597 = vrot.slane %v1488, 5
      %v1598 = vrot.slane %v1597, 4
      %v1599 = vrot.slane %v1061, 5
      %v1600 = vsel %vm1547, %v1598, %v1599
      %v1601 = vrot.slane %v1599, 4
      %v1602 = vrot.slane %v1085, 5
      %v1603 = vsel %vm1547, %v1601, %v1602
      %v1604 = vrot.slane %v1489, 5
      %v1605 = vrot.slane %v1604, 4
      %v1606 = vrot.slane %v1063, 5
      %v1607 = vsel %vm1547, %v1605, %v1606
      %v1608 = vrot.slane %v1606, 4
      %v1609 = vrot.slane %v1086, 5
      %v1610 = vsel %vm1547, %v1608, %v1609
      %v1611 = vrot.slane %v1490, 5
      %v1612 = vrot.slane %v1611, 4
      %v1613 = vrot.slane %v1065, 5
      %v1614 = vsel %vm1547, %v1612, %v1613
      %v1615 = vrot.slane %v1613, 4
      %v1616 = vrot.slane %v1087, 5
      %v1617 = vsel %vm1547, %v1615, %v1616
      %v1618 = vrot.slane %v1491, 5
      %v1619 = vrot.slane %v1618, 4
      %v1620 = vrot.slane %v1067, 5
      %v1621 = vsel %vm1547, %v1619, %v1620
      %v1622 = vrot.slane %v1620, 4
      %v1623 = vrot.slane %v1088, 5
      %v1624 = vsel %vm1547, %v1622, %v1623
      %v1625 = vrot.slane %v1492, 5
      %v1626 = vrot.slane %v1625, 4
      %v1627 = vrot.slane %v1069, 5
      %v1628 = vsel %vm1547, %v1626, %v1627
      %v1629 = vrot.slane %v1627, 4
      %v1630 = vrot.slane %v1089, 5
      %v1631 = vsel %vm1547, %v1629, %v1630
      %v1632 = vrot.slane %v1493, 5
      %v1633 = vrot.slane %v1632, 4
      %v1634 = vrot.slane %v1071, 5
      %v1635 = vsel %vm1547, %v1633, %v1634
      %v1636 = vrot.slane %v1634, 4
      %v1637 = vrot.slane %v1090, 5
      %v1638 = vsel %vm1547, %v1636, %v1637
      %v1639 = vrot.slane %v1494, 5
      %v1640 = vrot.slane %v1639, 4
      %v1641 = vrot.slane %v1073, 5
      %v1642 = vsel %vm1547, %v1640, %v1641
      %v1643 = vrot.slane %v1641, 4
      %v1644 = vrot.slane %v1091, 5
      %v1645 = vsel %vm1547, %v1643, %v1644
      %v1646 = vrot.slane %v1495, 5
      %v1647 = vrot.slane %v1646, 4
      %v1648 = vrot.slane %v1075, 5
      %v1649 = vsel %vm1547, %v1647, %v1648
      %v1650 = vrot.slane %v1648, 4
      %v1651 = vrot.slane %v1092, 5
      %v1652 = vsel %vm1547, %v1650, %v1651
      %v1653 = vrot.slane %v1496, 5
      %v1654 = vrot.slane %v1653, 4
      %v1655 = vrot.slane %v1077, 5
      %v1656 = vsel %vm1547, %v1654, %v1655
      %v1657 = vrot.slane %v1655, 4
      %v1658 = vrot.slane %v1093, 5
      %v1659 = vsel %vm1547, %v1657, %v1658
      %v1660 = vld [vmem:[%s928] sm:$0xf]
      %v1661 = vld [vmem:[%s928 + $0x4] sm:$0xf]
      %v1662 = vld [vmem:[%s928 + $0xc] sm:$0xf]
      %v1663 = vld [vmem:[%s928 + $0x10] sm:$0xf]
      %v1664 = vld [vmem:[%s928 + $0x18] sm:$0xf]
      %v1665 = vld [vmem:[%s928 + $0x1c] sm:$0xf]
      %v1666 = vld [vmem:[%s928 + $0x24] sm:$0xf]
      %v1667 = vld [vmem:[%s928 + $0x28] sm:$0xf]
      %v1668 = vld [vmem:[%s928 + $0x30] sm:$0xf]
      %v1669 = vld [vmem:[%s928 + $0x34] sm:$0xf]
      %v1670 = vld [vmem:[%s928 + $0x3c] sm:$0xf]
      %v1671 = vld [vmem:[%s928 + $0x40] sm:$0xf]
      %v1672 = vld [vmem:[%s928 + $0x48] sm:$0xf]
      %v1673 = vld [vmem:[%s928 + $0x4c] sm:$0xf]
      %v1674 = vld [vmem:[%s928 + $0x54] sm:$0xf]
      %v1675 = vld [vmem:[%s928 + $0x58] sm:$0xf]
      %v1676 = vld [vmem:[%s928 + $0x60] sm:$0xf]
      %v1677 = vld [vmem:[%s928 + $0x64] sm:$0xf]
      %v1678 = vld [vmem:[%s928 + $0x6c] sm:$0xf]
      %v1679 = vld [vmem:[%s928 + $0x70] sm:$0xf]
      %v1680 = vld [vmem:[%s928 + $0x78] sm:$0xf]
      %v1681 = vld [vmem:[%s928 + $0x7c] sm:$0xf]
      %v1682 = vld [vmem:[%s928 + $0x84] sm:$0xf]
      %v1683 = vld [vmem:[%s928 + $0x88] sm:$0xf]
      %v1684 = vld [vmem:[%s928 + $0x90] sm:$0xf]
      %v1685 = vld [vmem:[%s928 + $0x94] sm:$0xf]
      %v1686 = vld [vmem:[%s928 + $0x9c] sm:$0xf]
      %v1687 = vld [vmem:[%s928 + $0xa0] sm:$0xf]
      %v1688 = vld [vmem:[%s928 + $0xa8] sm:$0xf]
      %v1689 = vld [vmem:[%s928 + $0xac] sm:$0xf]
      %v1690 = vld [vmem:[%s928 + $0xb4] sm:$0xf]
      %v1691 = vld [vmem:[%s928 + $0xb8] sm:$0xf]
      %v1692 = vld [vmem:[%s928 + $0x8] sm:$0x1]
      %v1693 = vld [vmem:[%s928 + $0x14] sm:$0x1]
      %v1694 = vld [vmem:[%s928 + $0x20] sm:$0x1]
      %v1695 = vld [vmem:[%s928 + $0x2c] sm:$0x1]
      %v1696 = vld [vmem:[%s928 + $0x38] sm:$0x1]
      %v1697 = vld [vmem:[%s928 + $0x44] sm:$0x1]
      %v1698 = vld [vmem:[%s928 + $0x50] sm:$0x1]
      %v1699 = vld [vmem:[%s928 + $0x5c] sm:$0x1]
      %v1700 = vld [vmem:[%s928 + $0x68] sm:$0x1]
      %v1701 = vld [vmem:[%s928 + $0x74] sm:$0x1]
      %v1702 = vld [vmem:[%s928 + $0x80] sm:$0x1]
      %v1703 = vld [vmem:[%s928 + $0x8c] sm:$0x1]
      %v1704 = vld [vmem:[%s928 + $0x98] sm:$0x1]
      %v1705 = vld [vmem:[%s928 + $0xa4] sm:$0x1]
      %v1706 = vld [vmem:[%s928 + $0xb0] sm:$0x1]
      %v1707 = vld [vmem:[%s928 + $0xbc] sm:$0x1]
      %v1709 = vshrl.u32 %v1660, 16
      %v1711 = vrot.slane %v1709, 4
      %v1712 = vshll.u32 %v1660, 16
      %v1714 = vrot.slane %v1712, 5
      %v1715 = vor.u32 %v1711, %v1714
      %v1716 = vrot.slane %v1715, 4
      %v1718 = vshll.u32 %v1661, 16
      %v1720 = vrot.slane %v1718, 5
      %v1721 = vsel %vm1096, %v1716, %v1720
      %v1722 = vshrl.u32 %v1661, 16
      %v1724 = vrot.slane %v1722, 4
      %v1725 = vor.u32 %v1724, %v1720
      %v1726 = vrot.slane %v1725, 4
      %v1728 = vshll.u32 %v1692, 16
      %v1730 = vrot.slane %v1728, 5
      %v1731 = vsel %vm1096, %v1726, %v1730
      %v1733 = vshrl.u32 %v1662, 16
      %v1735 = vrot.slane %v1733, 4
      %v1736 = vshll.u32 %v1662, 16
      %v1738 = vrot.slane %v1736, 5
      %v1739 = vor.u32 %v1735, %v1738
      %v1740 = vrot.slane %v1739, 4
      %v1742 = vshll.u32 %v1663, 16
      %v1744 = vrot.slane %v1742, 5
      %v1745 = vsel %vm1096, %v1740, %v1744
      %v1746 = vshrl.u32 %v1663, 16
      %v1748 = vrot.slane %v1746, 4
      %v1749 = vor.u32 %v1748, %v1744
      %v1750 = vrot.slane %v1749, 4
      %v1752 = vshll.u32 %v1693, 16
      %v1754 = vrot.slane %v1752, 5
      %v1755 = vsel %vm1096, %v1750, %v1754
      %v1757 = vshrl.u32 %v1664, 16
      %v1759 = vrot.slane %v1757, 4
      %v1760 = vshll.u32 %v1664, 16
      %v1762 = vrot.slane %v1760, 5
      %v1763 = vor.u32 %v1759, %v1762
      %v1764 = vrot.slane %v1763, 4
      %v1766 = vshll.u32 %v1665, 16
      %v1768 = vrot.slane %v1766, 5
      %v1769 = vsel %vm1096, %v1764, %v1768
      %v1770 = vshrl.u32 %v1665, 16
      %v1772 = vrot.slane %v1770, 4
      %v1773 = vor.u32 %v1772, %v1768
      %v1774 = vrot.slane %v1773, 4
      %v1776 = vshll.u32 %v1694, 16
      %v1778 = vrot.slane %v1776, 5
      %v1779 = vsel %vm1096, %v1774, %v1778
      %v1781 = vshrl.u32 %v1666, 16
      %v1783 = vrot.slane %v1781, 4
      %v1784 = vshll.u32 %v1666, 16
      %v1786 = vrot.slane %v1784, 5
      %v1787 = vor.u32 %v1783, %v1786
      %v1788 = vrot.slane %v1787, 4
      %v1790 = vshll.u32 %v1667, 16
      %v1792 = vrot.slane %v1790, 5
      %v1793 = vsel %vm1096, %v1788, %v1792
      %v1794 = vshrl.u32 %v1667, 16
      %v1796 = vrot.slane %v1794, 4
      %v1797 = vor.u32 %v1796, %v1792
      %v1798 = vrot.slane %v1797, 4
      %v1800 = vshll.u32 %v1695, 16
      %v1802 = vrot.slane %v1800, 5
      %v1803 = vsel %vm1096, %v1798, %v1802
      %v1805 = vshrl.u32 %v1668, 16
      %v1807 = vrot.slane %v1805, 4
      %v1808 = vshll.u32 %v1668, 16
      %v1810 = vrot.slane %v1808, 5
      %v1811 = vor.u32 %v1807, %v1810
      %v1812 = vrot.slane %v1811, 4
      %v1814 = vshll.u32 %v1669, 16
      %v1816 = vrot.slane %v1814, 5
      %v1817 = vsel %vm1096, %v1812, %v1816
      %v1818 = vshrl.u32 %v1669, 16
      %v1820 = vrot.slane %v1818, 4
      %v1821 = vor.u32 %v1820, %v1816
      %v1822 = vrot.slane %v1821, 4
      %v1824 = vshll.u32 %v1696, 16
      %v1826 = vrot.slane %v1824, 5
      %v1827 = vsel %vm1096, %v1822, %v1826
      %v1829 = vshrl.u32 %v1670, 16
      %v1831 = vrot.slane %v1829, 4
      %v1832 = vshll.u32 %v1670, 16
      %v1834 = vrot.slane %v1832, 5
      %v1835 = vor.u32 %v1831, %v1834
      %v1836 = vrot.slane %v1835, 4
      %v1838 = vshll.u32 %v1671, 16
      %v1840 = vrot.slane %v1838, 5
      %v1841 = vsel %vm1096, %v1836, %v1840
      %v1842 = vshrl.u32 %v1671, 16
      %v1844 = vrot.slane %v1842, 4
      %v1845 = vor.u32 %v1844, %v1840
      %v1846 = vrot.slane %v1845, 4
      %v1848 = vshll.u32 %v1697, 16
      %v1850 = vrot.slane %v1848, 5
      %v1851 = vsel %vm1096, %v1846, %v1850
      %v1853 = vshrl.u32 %v1672, 16
      %v1855 = vrot.slane %v1853, 4
      %v1856 = vshll.u32 %v1672, 16
      %v1858 = vrot.slane %v1856, 5
      %v1859 = vor.u32 %v1855, %v1858
      %v1860 = vrot.slane %v1859, 4
      %v1862 = vshll.u32 %v1673, 16
      %v1864 = vrot.slane %v1862, 5
      %v1865 = vsel %vm1096, %v1860, %v1864
      %v1866 = vshrl.u32 %v1673, 16
      %v1868 = vrot.slane %v1866, 4
      %v1869 = vor.u32 %v1868, %v1864
      %v1870 = vrot.slane %v1869, 4
      %v1872 = vshll.u32 %v1698, 16
      %v1874 = vrot.slane %v1872, 5
      %v1875 = vsel %vm1096, %v1870, %v1874
      %v1877 = vshrl.u32 %v1674, 16
      %v1879 = vrot.slane %v1877, 4
      %v1880 = vshll.u32 %v1674, 16
      %v1882 = vrot.slane %v1880, 5
      %v1883 = vor.u32 %v1879, %v1882
      %v1884 = vrot.slane %v1883, 4
      %v1886 = vshll.u32 %v1675, 16
      %v1888 = vrot.slane %v1886, 5
      %v1889 = vsel %vm1096, %v1884, %v1888
      %v1890 = vshrl.u32 %v1675, 16
      %v1892 = vrot.slane %v1890, 4
      %v1893 = vor.u32 %v1892, %v1888
      %v1894 = vrot.slane %v1893, 4
      %v1896 = vshll.u32 %v1699, 16
      %v1898 = vrot.slane %v1896, 5
      %v1899 = vsel %vm1096, %v1894, %v1898
      %v1901 = vshrl.u32 %v1676, 16
      %v1903 = vrot.slane %v1901, 4
      %v1904 = vshll.u32 %v1676, 16
      %v1906 = vrot.slane %v1904, 5
      %v1907 = vor.u32 %v1903, %v1906
      %v1908 = vrot.slane %v1907, 4
      %v1910 = vshll.u32 %v1677, 16
      %v1912 = vrot.slane %v1910, 5
      %v1913 = vsel %vm1096, %v1908, %v1912
      %v1914 = vshrl.u32 %v1677, 16
      %v1916 = vrot.slane %v1914, 4
      %v1917 = vor.u32 %v1916, %v1912
      %v1918 = vrot.slane %v1917, 4
      %v1920 = vshll.u32 %v1700, 16
      %v1922 = vrot.slane %v1920, 5
      %v1923 = vsel %vm1096, %v1918, %v1922
      %v1925 = vshrl.u32 %v1678, 16
      %v1927 = vrot.slane %v1925, 4
      %v1928 = vshll.u32 %v1678, 16
      %v1930 = vrot.slane %v1928, 5
      %v1931 = vor.u32 %v1927, %v1930
      %v1932 = vrot.slane %v1931, 4
      %v1934 = vshll.u32 %v1679, 16
      %v1936 = vrot.slane %v1934, 5
      %v1937 = vsel %vm1096, %v1932, %v1936
      %v1938 = vshrl.u32 %v1679, 16
      %v1940 = vrot.slane %v1938, 4
      %v1941 = vor.u32 %v1940, %v1936
      %v1942 = vrot.slane %v1941, 4
      %v1944 = vshll.u32 %v1701, 16
      %v1946 = vrot.slane %v1944, 5
      %v1947 = vsel %vm1096, %v1942, %v1946
      %v1949 = vshrl.u32 %v1680, 16
      %v1951 = vrot.slane %v1949, 4
      %v1952 = vshll.u32 %v1680, 16
      %v1954 = vrot.slane %v1952, 5
      %v1955 = vor.u32 %v1951, %v1954
      %v1956 = vrot.slane %v1955, 4
      %v1958 = vshll.u32 %v1681, 16
      %v1960 = vrot.slane %v1958, 5
      %v1961 = vsel %vm1096, %v1956, %v1960
      %v1962 = vshrl.u32 %v1681, 16
      %v1964 = vrot.slane %v1962, 4
      %v1965 = vor.u32 %v1964, %v1960
      %v1966 = vrot.slane %v1965, 4
      %v1968 = vshll.u32 %v1702, 16
      %v1970 = vrot.slane %v1968, 5
      %v1971 = vsel %vm1096, %v1966, %v1970
      %v1973 = vshrl.u32 %v1682, 16
      %v1975 = vrot.slane %v1973, 4
      %v1976 = vshll.u32 %v1682, 16
      %v1978 = vrot.slane %v1976, 5
      %v1979 = vor.u32 %v1975, %v1978
      %v1980 = vrot.slane %v1979, 4
      %v1982 = vshll.u32 %v1683, 16
      %v1984 = vrot.slane %v1982, 5
      %v1985 = vsel %vm1096, %v1980, %v1984
      %v1986 = vshrl.u32 %v1683, 16
      %v1988 = vrot.slane %v1986, 4
      %v1989 = vor.u32 %v1988, %v1984
      %v1990 = vrot.slane %v1989, 4
      %v1992 = vshll.u32 %v1703, 16
      %v1994 = vrot.slane %v1992, 5
      %v1995 = vsel %vm1096, %v1990, %v1994
      %v1997 = vshrl.u32 %v1684, 16
      %v1999 = vrot.slane %v1997, 4
      %v2000 = vshll.u32 %v1684, 16
      %v2002 = vrot.slane %v2000, 5
      %v2003 = vor.u32 %v1999, %v2002
      %v2004 = vrot.slane %v2003, 4
      %v2006 = vshll.u32 %v1685, 16
      %v2008 = vrot.slane %v2006, 5
      %v2009 = vsel %vm1096, %v2004, %v2008
      %v2010 = vshrl.u32 %v1685, 16
      %v2012 = vrot.slane %v2010, 4
      %v2013 = vor.u32 %v2012, %v2008
      %v2014 = vrot.slane %v2013, 4
      %v2016 = vshll.u32 %v1704, 16
      %v2018 = vrot.slane %v2016, 5
      %v2019 = vsel %vm1096, %v2014, %v2018
      %v2021 = vshrl.u32 %v1686, 16
      %v2023 = vrot.slane %v2021, 4
      %v2024 = vshll.u32 %v1686, 16
      %v2026 = vrot.slane %v2024, 5
      %v2027 = vor.u32 %v2023, %v2026
      %v2028 = vrot.slane %v2027, 4
      %v2030 = vshll.u32 %v1687, 16
      %v2032 = vrot.slane %v2030, 5
      %v2033 = vsel %vm1096, %v2028, %v2032
      %v2034 = vshrl.u32 %v1687, 16
      %v2036 = vrot.slane %v2034, 4
      %v2037 = vor.u32 %v2036, %v2032
      %v2038 = vrot.slane %v2037, 4
      %v2040 = vshll.u32 %v1705, 16
      %v2042 = vrot.slane %v2040, 5
      %v2043 = vsel %vm1096, %v2038, %v2042
      %v2045 = vshrl.u32 %v1688, 16
      %v2047 = vrot.slane %v2045, 4
      %v2048 = vshll.u32 %v1688, 16
      %v2050 = vrot.slane %v2048, 5
      %v2051 = vor.u32 %v2047, %v2050
      %v2052 = vrot.slane %v2051, 4
      %v2054 = vshll.u32 %v1689, 16
      %v2056 = vrot.slane %v2054, 5
      %v2057 = vsel %vm1096, %v2052, %v2056
      %v2058 = vshrl.u32 %v1689, 16
      %v2060 = vrot.slane %v2058, 4
      %v2061 = vor.u32 %v2060, %v2056
      %v2062 = vrot.slane %v2061, 4
      %v2064 = vshll.u32 %v1706, 16
      %v2066 = vrot.slane %v2064, 5
      %v2067 = vsel %vm1096, %v2062, %v2066
      %v2069 = vshrl.u32 %v1690, 16
      %v2071 = vrot.slane %v2069, 4
      %v2072 = vshll.u32 %v1690, 16
      %v2074 = vrot.slane %v2072, 5
      %v2075 = vor.u32 %v2071, %v2074
      %v2076 = vrot.slane %v2075, 4
      %v2078 = vshll.u32 %v1691, 16
      %v2080 = vrot.slane %v2078, 5
      %v2081 = vsel %vm1096, %v2076, %v2080
      %v2082 = vshrl.u32 %v1691, 16
      %v2084 = vrot.slane %v2082, 4
      %v2085 = vor.u32 %v2084, %v2080
      %v2086 = vrot.slane %v2085, 4
      %v2088 = vshll.u32 %v1707, 16
      %v2090 = vrot.slane %v2088, 5
      %v2091 = vsel %vm1096, %v2086, %v2090
      %v2092 = vld [vmem:[%s928] sm:$0xe]
      %v2093 = vld [vmem:[%s928 + $0xc] sm:$0xe]
      %v2094 = vld [vmem:[%s928 + $0x18] sm:$0xe]
      %v2095 = vld [vmem:[%s928 + $0x24] sm:$0xe]
      %v2096 = vld [vmem:[%s928 + $0x30] sm:$0xe]
      %v2097 = vld [vmem:[%s928 + $0x3c] sm:$0xe]
      %v2098 = vld [vmem:[%s928 + $0x48] sm:$0xe]
      %v2099 = vld [vmem:[%s928 + $0x54] sm:$0xe]
      %v2100 = vld [vmem:[%s928 + $0x60] sm:$0xe]
      %v2101 = vld [vmem:[%s928 + $0x6c] sm:$0xe]
      %v2102 = vld [vmem:[%s928 + $0x78] sm:$0xe]
      %v2103 = vld [vmem:[%s928 + $0x84] sm:$0xe]
      %v2104 = vld [vmem:[%s928 + $0x90] sm:$0xe]
      %v2105 = vld [vmem:[%s928 + $0x9c] sm:$0xe]
      %v2106 = vld [vmem:[%s928 + $0xa8] sm:$0xe]
      %v2107 = vld [vmem:[%s928 + $0xb4] sm:$0xe]
      %v2156 = vrot.slane %v2092, 5
      %v2157 = vrot.slane %v2156, 4
      %v2158 = vrot.slane %v1661, 5
      %v2159 = vsel %vm1547, %v2157, %v2158
      %v2160 = vrot.slane %v2158, 4
      %v2161 = vrot.slane %v1692, 5
      %v2162 = vsel %vm1547, %v2160, %v2161
      %v2163 = vrot.slane %v2093, 5
      %v2164 = vrot.slane %v2163, 4
      %v2165 = vrot.slane %v1663, 5
      %v2166 = vsel %vm1547, %v2164, %v2165
      %v2167 = vrot.slane %v2165, 4
      %v2168 = vrot.slane %v1693, 5
      %v2169 = vsel %vm1547, %v2167, %v2168
      %v2170 = vrot.slane %v2094, 5
      %v2171 = vrot.slane %v2170, 4
      %v2172 = vrot.slane %v1665, 5
      %v2173 = vsel %vm1547, %v2171, %v2172
      %v2174 = vrot.slane %v2172, 4
      %v2175 = vrot.slane %v1694, 5
      %v2176 = vsel %vm1547, %v2174, %v2175
      %v2177 = vrot.slane %v2095, 5
      %v2178 = vrot.slane %v2177, 4
      %v2179 = vrot.slane %v1667, 5
      %v2180 = vsel %vm1547, %v2178, %v2179
      %v2181 = vrot.slane %v2179, 4
      %v2182 = vrot.slane %v1695, 5
      %v2183 = vsel %vm1547, %v2181, %v2182
      %v2184 = vrot.slane %v2096, 5
      %v2185 = vrot.slane %v2184, 4
      %v2186 = vrot.slane %v1669, 5
      %v2187 = vsel %vm1547, %v2185, %v2186
      %v2188 = vrot.slane %v2186, 4
      %v2189 = vrot.slane %v1696, 5
      %v2190 = vsel %vm1547, %v2188, %v2189
      %v2191 = vrot.slane %v2097, 5
      %v2192 = vrot.slane %v2191, 4
      %v2193 = vrot.slane %v1671, 5
      %v2194 = vsel %vm1547, %v2192, %v2193
      %v2195 = vrot.slane %v2193, 4
      %v2196 = vrot.slane %v1697, 5
      %v2197 = vsel %vm1547, %v2195, %v2196
      %v2198 = vrot.slane %v2098, 5
      %v2199 = vrot.slane %v2198, 4
      %v2200 = vrot.slane %v1673, 5
      %v2201 = vsel %vm1547, %v2199, %v2200
      %v2202 = vrot.slane %v2200, 4
      %v2203 = vrot.slane %v1698, 5
      %v2204 = vsel %vm1547, %v2202, %v2203
      %v2205 = vrot.slane %v2099, 5
      %v2206 = vrot.slane %v2205, 4
      %v2207 = vrot.slane %v1675, 5
      %v2208 = vsel %vm1547, %v2206, %v2207
      %v2209 = vrot.slane %v2207, 4
      %v2210 = vrot.slane %v1699, 5
      %v2211 = vsel %vm1547, %v2209, %v2210
      %v2212 = vrot.slane %v2100, 5
      %v2213 = vrot.slane %v2212, 4
      %v2214 = vrot.slane %v1677, 5
      %v2215 = vsel %vm1547, %v2213, %v2214
      %v2216 = vrot.slane %v2214, 4
      %v2217 = vrot.slane %v1700, 5
      %v2218 = vsel %vm1547, %v2216, %v2217
      %v2219 = vrot.slane %v2101, 5
      %v2220 = vrot.slane %v2219, 4
      %v2221 = vrot.slane %v1679, 5
      %v2222 = vsel %vm1547, %v2220, %v2221
      %v2223 = vrot.slane %v2221, 4
      %v2224 = vrot.slane %v1701, 5
      %v2225 = vsel %vm1547, %v2223, %v2224
      %v2226 = vrot.slane %v2102, 5
      %v2227 = vrot.slane %v2226, 4
      %v2228 = vrot.slane %v1681, 5
      %v2229 = vsel %vm1547, %v2227, %v2228
      %v2230 = vrot.slane %v2228, 4
      %v2231 = vrot.slane %v1702, 5
      %v2232 = vsel %vm1547, %v2230, %v2231
      %v2233 = vrot.slane %v2103, 5
      %v2234 = vrot.slane %v2233, 4
      %v2235 = vrot.slane %v1683, 5
      %v2236 = vsel %vm1547, %v2234, %v2235
      %v2237 = vrot.slane %v2235, 4
      %v2238 = vrot.slane %v1703, 5
      %v2239 = vsel %vm1547, %v2237, %v2238
      %v2240 = vrot.slane %v2104, 5
      %v2241 = vrot.slane %v2240, 4
      %v2242 = vrot.slane %v1685, 5
      %v2243 = vsel %vm1547, %v2241, %v2242
      %v2244 = vrot.slane %v2242, 4
      %v2245 = vrot.slane %v1704, 5
      %v2246 = vsel %vm1547, %v2244, %v2245
      %v2247 = vrot.slane %v2105, 5
      %v2248 = vrot.slane %v2247, 4
      %v2249 = vrot.slane %v1687, 5
      %v2250 = vsel %vm1547, %v2248, %v2249
      %v2251 = vrot.slane %v2249, 4
      %v2252 = vrot.slane %v1705, 5
      %v2253 = vsel %vm1547, %v2251, %v2252
      %v2254 = vrot.slane %v2106, 5
      %v2255 = vrot.slane %v2254, 4
      %v2256 = vrot.slane %v1689, 5
      %v2257 = vsel %vm1547, %v2255, %v2256
      %v2258 = vrot.slane %v2256, 4
      %v2259 = vrot.slane %v1706, 5
      %v2260 = vsel %vm1547, %v2258, %v2259
      %v2261 = vrot.slane %v2107, 5
      %v2262 = vrot.slane %v2261, 4
      %v2263 = vrot.slane %v1691, 5
      %v2264 = vsel %vm1547, %v2262, %v2263
      %v2265 = vrot.slane %v2263, 4
      %v2266 = vrot.slane %v1707, 5
      %v2267 = vsel %vm1547, %v2265, %v2266
      %s2268 = scalar_lea.vmem [#allocation2], 24
      %v2269 = vld [vmem:[%s2268] sm:$0xf]
      %v2270 = vld [vmem:[%s2268 + $0x4] sm:$0xf]
      %v2271 = vld [vmem:[%s2268 + $0xc] sm:$0xf]
      %v2272 = vld [vmem:[%s2268 + $0x10] sm:$0xf]
      %v2273 = vld [vmem:[%s2268 + $0x18] sm:$0xf]
      %v2274 = vld [vmem:[%s2268 + $0x1c] sm:$0xf]
      %v2275 = vld [vmem:[%s2268 + $0x24] sm:$0xf]
      %v2276 = vld [vmem:[%s2268 + $0x28] sm:$0xf]
      %v2277 = vld [vmem:[%s2268 + $0x30] sm:$0xf]
      %v2278 = vld [vmem:[%s2268 + $0x34] sm:$0xf]
      %v2279 = vld [vmem:[%s2268 + $0x3c] sm:$0xf]
      %v2280 = vld [vmem:[%s2268 + $0x40] sm:$0xf]
      %v2281 = vld [vmem:[%s2268 + $0x48] sm:$0xf]
      %v2282 = vld [vmem:[%s2268 + $0x4c] sm:$0xf]
      %v2283 = vld [vmem:[%s2268 + $0x54] sm:$0xf]
      %v2284 = vld [vmem:[%s2268 + $0x58] sm:$0xf]
      %v2285 = vld [vmem:[%s2268 + $0x60] sm:$0xf]
      %v2286 = vld [vmem:[%s2268 + $0x64] sm:$0xf]
      %v2287 = vld [vmem:[%s2268 + $0x6c] sm:$0xf]
      %v2288 = vld [vmem:[%s2268 + $0x70] sm:$0xf]
      %v2289 = vld [vmem:[%s2268 + $0x78] sm:$0xf]
      %v2290 = vld [vmem:[%s2268 + $0x7c] sm:$0xf]
      %v2291 = vld [vmem:[%s2268 + $0x84] sm:$0xf]
      %v2292 = vld [vmem:[%s2268 + $0x88] sm:$0xf]
      %v2293 = vld [vmem:[%s2268 + $0x90] sm:$0xf]
      %v2294 = vld [vmem:[%s2268 + $0x94] sm:$0xf]
      %v2295 = vld [vmem:[%s2268 + $0x9c] sm:$0xf]
      %v2296 = vld [vmem:[%s2268 + $0xa0] sm:$0xf]
      %v2297 = vld [vmem:[%s2268 + $0xa8] sm:$0xf]
      %v2298 = vld [vmem:[%s2268 + $0xac] sm:$0xf]
      %v2299 = vld [vmem:[%s2268 + $0xb4] sm:$0xf]
      %v2300 = vld [vmem:[%s2268 + $0xb8] sm:$0xf]
      %v2301 = vld [vmem:[%s2268 + $0x8] sm:$0x1]
      %v2302 = vld [vmem:[%s2268 + $0x14] sm:$0x1]
      %v2303 = vld [vmem:[%s2268 + $0x20] sm:$0x1]
      %v2304 = vld [vmem:[%s2268 + $0x2c] sm:$0x1]
      %v2305 = vld [vmem:[%s2268 + $0x38] sm:$0x1]
      %v2306 = vld [vmem:[%s2268 + $0x44] sm:$0x1]
      %v2307 = vld [vmem:[%s2268 + $0x50] sm:$0x1]
      %v2308 = vld [vmem:[%s2268 + $0x5c] sm:$0x1]
      %v2309 = vld [vmem:[%s2268 + $0x68] sm:$0x1]
      %v2310 = vld [vmem:[%s2268 + $0x74] sm:$0x1]
      %v2311 = vld [vmem:[%s2268 + $0x80] sm:$0x1]
      %v2312 = vld [vmem:[%s2268 + $0x8c] sm:$0x1]
      %v2313 = vld [vmem:[%s2268 + $0x98] sm:$0x1]
      %v2314 = vld [vmem:[%s2268 + $0xa4] sm:$0x1]
      %v2315 = vld [vmem:[%s2268 + $0xb0] sm:$0x1]
      %v2316 = vld [vmem:[%s2268 + $0xbc] sm:$0x1]
      %v2318 = vshrl.u32 %v2269, 16
      %v2320 = vrot.slane %v2318, 4
      %v2321 = vshll.u32 %v2269, 16
      %v2323 = vrot.slane %v2321, 5
      %v2324 = vor.u32 %v2320, %v2323
      %v2325 = vrot.slane %v2324, 4
      %v2327 = vshll.u32 %v2270, 16
      %v2329 = vrot.slane %v2327, 5
      %v2330 = vsel %vm1096, %v2325, %v2329
      %v2331 = vshrl.u32 %v2270, 16
      %v2333 = vrot.slane %v2331, 4
      %v2334 = vor.u32 %v2333, %v2329
      %v2335 = vrot.slane %v2334, 4
      %v2337 = vshll.u32 %v2301, 16
      %v2339 = vrot.slane %v2337, 5
      %v2340 = vsel %vm1096, %v2335, %v2339
      %v2342 = vshrl.u32 %v2271, 16
      %v2344 = vrot.slane %v2342, 4
      %v2345 = vshll.u32 %v2271, 16
      %v2347 = vrot.slane %v2345, 5
      %v2348 = vor.u32 %v2344, %v2347
      %v2349 = vrot.slane %v2348, 4
      %v2351 = vshll.u32 %v2272, 16
      %v2353 = vrot.slane %v2351, 5
      %v2354 = vsel %vm1096, %v2349, %v2353
      %v2355 = vshrl.u32 %v2272, 16
      %v2357 = vrot.slane %v2355, 4
      %v2358 = vor.u32 %v2357, %v2353
      %v2359 = vrot.slane %v2358, 4
      %v2361 = vshll.u32 %v2302, 16
      %v2363 = vrot.slane %v2361, 5
      %v2364 = vsel %vm1096, %v2359, %v2363
      %v2366 = vshrl.u32 %v2273, 16
      %v2368 = vrot.slane %v2366, 4
      %v2369 = vshll.u32 %v2273, 16
      %v2371 = vrot.slane %v2369, 5
      %v2372 = vor.u32 %v2368, %v2371
      %v2373 = vrot.slane %v2372, 4
      %v2375 = vshll.u32 %v2274, 16
      %v2377 = vrot.slane %v2375, 5
      %v2378 = vsel %vm1096, %v2373, %v2377
      %v2379 = vshrl.u32 %v2274, 16
      %v2381 = vrot.slane %v2379, 4
      %v2382 = vor.u32 %v2381, %v2377
      %v2383 = vrot.slane %v2382, 4
      %v2385 = vshll.u32 %v2303, 16
      %v2387 = vrot.slane %v2385, 5
      %v2388 = vsel %vm1096, %v2383, %v2387
      %v2390 = vshrl.u32 %v2275, 16
      %v2392 = vrot.slane %v2390, 4
      %v2393 = vshll.u32 %v2275, 16
      %v2395 = vrot.slane %v2393, 5
      %v2396 = vor.u32 %v2392, %v2395
      %v2397 = vrot.slane %v2396, 4
      %v2399 = vshll.u32 %v2276, 16
      %v2401 = vrot.slane %v2399, 5
      %v2402 = vsel %vm1096, %v2397, %v2401
      %v2403 = vshrl.u32 %v2276, 16
      %v2405 = vrot.slane %v2403, 4
      %v2406 = vor.u32 %v2405, %v2401
      %v2407 = vrot.slane %v2406, 4
      %v2409 = vshll.u32 %v2304, 16
      %v2411 = vrot.slane %v2409, 5
      %v2412 = vsel %vm1096, %v2407, %v2411
      %v2414 = vshrl.u32 %v2277, 16
      %v2416 = vrot.slane %v2414, 4
      %v2417 = vshll.u32 %v2277, 16
      %v2419 = vrot.slane %v2417, 5
      %v2420 = vor.u32 %v2416, %v2419
      %v2421 = vrot.slane %v2420, 4
      %v2423 = vshll.u32 %v2278, 16
      %v2425 = vrot.slane %v2423, 5
      %v2426 = vsel %vm1096, %v2421, %v2425
      %v2427 = vshrl.u32 %v2278, 16
      %v2429 = vrot.slane %v2427, 4
      %v2430 = vor.u32 %v2429, %v2425
      %v2431 = vrot.slane %v2430, 4
      %v2433 = vshll.u32 %v2305, 16
      %v2435 = vrot.slane %v2433, 5
      %v2436 = vsel %vm1096, %v2431, %v2435
      %v2438 = vshrl.u32 %v2279, 16
      %v2440 = vrot.slane %v2438, 4
      %v2441 = vshll.u32 %v2279, 16
      %v2443 = vrot.slane %v2441, 5
      %v2444 = vor.u32 %v2440, %v2443
      %v2445 = vrot.slane %v2444, 4
      %v2447 = vshll.u32 %v2280, 16
      %v2449 = vrot.slane %v2447, 5
      %v2450 = vsel %vm1096, %v2445, %v2449
      %v2451 = vshrl.u32 %v2280, 16
      %v2453 = vrot.slane %v2451, 4
      %v2454 = vor.u32 %v2453, %v2449
      %v2455 = vrot.slane %v2454, 4
      %v2457 = vshll.u32 %v2306, 16
      %v2459 = vrot.slane %v2457, 5
      %v2460 = vsel %vm1096, %v2455, %v2459
      %v2462 = vshrl.u32 %v2281, 16
      %v2464 = vrot.slane %v2462, 4
      %v2465 = vshll.u32 %v2281, 16
      %v2467 = vrot.slane %v2465, 5
      %v2468 = vor.u32 %v2464, %v2467
      %v2469 = vrot.slane %v2468, 4
      %v2471 = vshll.u32 %v2282, 16
      %v2473 = vrot.slane %v2471, 5
      %v2474 = vsel %vm1096, %v2469, %v2473
      %v2475 = vshrl.u32 %v2282, 16
      %v2477 = vrot.slane %v2475, 4
      %v2478 = vor.u32 %v2477, %v2473
      %v2479 = vrot.slane %v2478, 4
      %v2481 = vshll.u32 %v2307, 16
      %v2483 = vrot.slane %v2481, 5
      %v2484 = vsel %vm1096, %v2479, %v2483
      %v2486 = vshrl.u32 %v2283, 16
      %v2488 = vrot.slane %v2486, 4
      %v2489 = vshll.u32 %v2283, 16
      %v2491 = vrot.slane %v2489, 5
      %v2492 = vor.u32 %v2488, %v2491
      %v2493 = vrot.slane %v2492, 4
      %v2495 = vshll.u32 %v2284, 16
      %v2497 = vrot.slane %v2495, 5
      %v2498 = vsel %vm1096, %v2493, %v2497
      %v2499 = vshrl.u32 %v2284, 16
      %v2501 = vrot.slane %v2499, 4
      %v2502 = vor.u32 %v2501, %v2497
      %v2503 = vrot.slane %v2502, 4
      %v2505 = vshll.u32 %v2308, 16
      %v2507 = vrot.slane %v2505, 5
      %v2508 = vsel %vm1096, %v2503, %v2507
      %v2510 = vshrl.u32 %v2285, 16
      %v2512 = vrot.slane %v2510, 4
      %v2513 = vshll.u32 %v2285, 16
      %v2515 = vrot.slane %v2513, 5
      %v2516 = vor.u32 %v2512, %v2515
      %v2517 = vrot.slane %v2516, 4
      %v2519 = vshll.u32 %v2286, 16
      %v2521 = vrot.slane %v2519, 5
      %v2522 = vsel %vm1096, %v2517, %v2521
      %v2523 = vshrl.u32 %v2286, 16
      %v2525 = vrot.slane %v2523, 4
      %v2526 = vor.u32 %v2525, %v2521
      %v2527 = vrot.slane %v2526, 4
      %v2529 = vshll.u32 %v2309, 16
      %v2531 = vrot.slane %v2529, 5
      %v2532 = vsel %vm1096, %v2527, %v2531
      %v2534 = vshrl.u32 %v2287, 16
      %v2536 = vrot.slane %v2534, 4
      %v2537 = vshll.u32 %v2287, 16
      %v2539 = vrot.slane %v2537, 5
      %v2540 = vor.u32 %v2536, %v2539
      %v2541 = vrot.slane %v2540, 4
      %v2543 = vshll.u32 %v2288, 16
      %v2545 = vrot.slane %v2543, 5
      %v2546 = vsel %vm1096, %v2541, %v2545
      %v2547 = vshrl.u32 %v2288, 16
      %v2549 = vrot.slane %v2547, 4
      %v2550 = vor.u32 %v2549, %v2545
      %v2551 = vrot.slane %v2550, 4
      %v2553 = vshll.u32 %v2310, 16
      %v2555 = vrot.slane %v2553, 5
      %v2556 = vsel %vm1096, %v2551, %v2555
      %v2558 = vshrl.u32 %v2289, 16
      %v2560 = vrot.slane %v2558, 4
      %v2561 = vshll.u32 %v2289, 16
      %v2563 = vrot.slane %v2561, 5
      %v2564 = vor.u32 %v2560, %v2563
      %v2565 = vrot.slane %v2564, 4
      %v2567 = vshll.u32 %v2290, 16
      %v2569 = vrot.slane %v2567, 5
      %v2570 = vsel %vm1096, %v2565, %v2569
      %v2571 = vshrl.u32 %v2290, 16
      %v2573 = vrot.slane %v2571, 4
      %v2574 = vor.u32 %v2573, %v2569
      %v2575 = vrot.slane %v2574, 4
      %v2577 = vshll.u32 %v2311, 16
      %v2579 = vrot.slane %v2577, 5
      %v2580 = vsel %vm1096, %v2575, %v2579
      %v2582 = vshrl.u32 %v2291, 16
      %v2584 = vrot.slane %v2582, 4
      %v2585 = vshll.u32 %v2291, 16
      %v2587 = vrot.slane %v2585, 5
      %v2588 = vor.u32 %v2584, %v2587
      %v2589 = vrot.slane %v2588, 4
      %v2591 = vshll.u32 %v2292, 16
      %v2593 = vrot.slane %v2591, 5
      %v2594 = vsel %vm1096, %v2589, %v2593
      %v2595 = vshrl.u32 %v2292, 16
      %v2597 = vrot.slane %v2595, 4
      %v2598 = vor.u32 %v2597, %v2593
      %v2599 = vrot.slane %v2598, 4
      %v2601 = vshll.u32 %v2312, 16
      %v2603 = vrot.slane %v2601, 5
      %v2604 = vsel %vm1096, %v2599, %v2603
      %v2606 = vshrl.u32 %v2293, 16
      %v2608 = vrot.slane %v2606, 4
      %v2609 = vshll.u32 %v2293, 16
      %v2611 = vrot.slane %v2609, 5
      %v2612 = vor.u32 %v2608, %v2611
      %v2613 = vrot.slane %v2612, 4
      %v2615 = vshll.u32 %v2294, 16
      %v2617 = vrot.slane %v2615, 5
      %v2618 = vsel %vm1096, %v2613, %v2617
      %v2619 = vshrl.u32 %v2294, 16
      %v2621 = vrot.slane %v2619, 4
      %v2622 = vor.u32 %v2621, %v2617
      %v2623 = vrot.slane %v2622, 4
      %v2625 = vshll.u32 %v2313, 16
      %v2627 = vrot.slane %v2625, 5
      %v2628 = vsel %vm1096, %v2623, %v2627
      %v2630 = vshrl.u32 %v2295, 16
      %v2632 = vrot.slane %v2630, 4
      %v2633 = vshll.u32 %v2295, 16
      %v2635 = vrot.slane %v2633, 5
      %v2636 = vor.u32 %v2632, %v2635
      %v2637 = vrot.slane %v2636, 4
      %v2639 = vshll.u32 %v2296, 16
      %v2641 = vrot.slane %v2639, 5
      %v2642 = vsel %vm1096, %v2637, %v2641
      %v2643 = vshrl.u32 %v2296, 16
      %v2645 = vrot.slane %v2643, 4
      %v2646 = vor.u32 %v2645, %v2641
      %v2647 = vrot.slane %v2646, 4
      %v2649 = vshll.u32 %v2314, 16
      %v2651 = vrot.slane %v2649, 5
      %v2652 = vsel %vm1096, %v2647, %v2651
      %v2654 = vshrl.u32 %v2297, 16
      %v2656 = vrot.slane %v2654, 4
      %v2657 = vshll.u32 %v2297, 16
      %v2659 = vrot.slane %v2657, 5
      %v2660 = vor.u32 %v2656, %v2659
      %v2661 = vrot.slane %v2660, 4
      %v2663 = vshll.u32 %v2298, 16
      %v2665 = vrot.slane %v2663, 5
      %v2666 = vsel %vm1096, %v2661, %v2665
      %v2667 = vshrl.u32 %v2298, 16
      %v2669 = vrot.slane %v2667, 4
      %v2670 = vor.u32 %v2669, %v2665
      %v2671 = vrot.slane %v2670, 4
      %v2673 = vshll.u32 %v2315, 16
      %v2675 = vrot.slane %v2673, 5
      %v2676 = vsel %vm1096, %v2671, %v2675
      %v2678 = vshrl.u32 %v2299, 16
      %v2680 = vrot.slane %v2678, 4
      %v2681 = vshll.u32 %v2299, 16
      %v2683 = vrot.slane %v2681, 5
      %v2684 = vor.u32 %v2680, %v2683
      %v2685 = vrot.slane %v2684, 4
      %v2687 = vshll.u32 %v2300, 16
      %v2689 = vrot.slane %v2687, 5
      %v2690 = vsel %vm1096, %v2685, %v2689
      %v2691 = vshrl.u32 %v2300, 16
      %v2693 = vrot.slane %v2691, 4
      %v2694 = vor.u32 %v2693, %v2689
      %v2695 = vrot.slane %v2694, 4
      %v2697 = vshll.u32 %v2316, 16
      %v2699 = vrot.slane %v2697, 5
      %v2700 = vsel %vm1096, %v2695, %v2699
      %v2701 = vld [vmem:[%s2268] sm:$0xe]
      %v2702 = vld [vmem:[%s2268 + $0xc] sm:$0xe]
      %v2703 = vld [vmem:[%s2268 + $0x18] sm:$0xe]
      %v2704 = vld [vmem:[%s2268 + $0x24] sm:$0xe]
      %v2705 = vld [vmem:[%s2268 + $0x30] sm:$0xe]
      %v2706 = vld [vmem:[%s2268 + $0x3c] sm:$0xe]
      %v2707 = vld [vmem:[%s2268 + $0x48] sm:$0xe]
      %v2708 = vld [vmem:[%s2268 + $0x54] sm:$0xe]
      %v2709 = vld [vmem:[%s2268 + $0x60] sm:$0xe]
      %v2710 = vld [vmem:[%s2268 + $0x6c] sm:$0xe]
      %v2711 = vld [vmem:[%s2268 + $0x78] sm:$0xe]
      %v2712 = vld [vmem:[%s2268 + $0x84] sm:$0xe]
      %v2713 = vld [vmem:[%s2268 + $0x90] sm:$0xe]
      %v2714 = vld [vmem:[%s2268 + $0x9c] sm:$0xe]
      %v2715 = vld [vmem:[%s2268 + $0xa8] sm:$0xe]
      %v2716 = vld [vmem:[%s2268 + $0xb4] sm:$0xe]
      %v2765 = vrot.slane %v2701, 5
      %v2766 = vrot.slane %v2765, 4
      %v2767 = vrot.slane %v2270, 5
      %v2768 = vsel %vm1547, %v2766, %v2767
      %v2769 = vrot.slane %v2767, 4
      %v2770 = vrot.slane %v2301, 5
      %v2771 = vsel %vm1547, %v2769, %v2770
      %v2772 = vrot.slane %v2702, 5
      %v2773 = vrot.slane %v2772, 4
      %v2774 = vrot.slane %v2272, 5
      %v2775 = vsel %vm1547, %v2773, %v2774
      %v2776 = vrot.slane %v2774, 4
      %v2777 = vrot.slane %v2302, 5
      %v2778 = vsel %vm1547, %v2776, %v2777
      %v2779 = vrot.slane %v2703, 5
      %v2780 = vrot.slane %v2779, 4
      %v2781 = vrot.slane %v2274, 5
      %v2782 = vsel %vm1547, %v2780, %v2781
      %v2783 = vrot.slane %v2781, 4
      %v2784 = vrot.slane %v2303, 5
      %v2785 = vsel %vm1547, %v2783, %v2784
      %v2786 = vrot.slane %v2704, 5
      %v2787 = vrot.slane %v2786, 4
      %v2788 = vrot.slane %v2276, 5
      %v2789 = vsel %vm1547, %v2787, %v2788
      %v2790 = vrot.slane %v2788, 4
      %v2791 = vrot.slane %v2304, 5
      %v2792 = vsel %vm1547, %v2790, %v2791
      %v2793 = vrot.slane %v2705, 5
      %v2794 = vrot.slane %v2793, 4
      %v2795 = vrot.slane %v2278, 5
      %v2796 = vsel %vm1547, %v2794, %v2795
      %v2797 = vrot.slane %v2795, 4
      %v2798 = vrot.slane %v2305, 5
      %v2799 = vsel %vm1547, %v2797, %v2798
      %v2800 = vrot.slane %v2706, 5
      %v2801 = vrot.slane %v2800, 4
      %v2802 = vrot.slane %v2280, 5
      %v2803 = vsel %vm1547, %v2801, %v2802
      %v2804 = vrot.slane %v2802, 4
      %v2805 = vrot.slane %v2306, 5
      %v2806 = vsel %vm1547, %v2804, %v2805
      %v2807 = vrot.slane %v2707, 5
      %v2808 = vrot.slane %v2807, 4
      %v2809 = vrot.slane %v2282, 5
      %v2810 = vsel %vm1547, %v2808, %v2809
      %v2811 = vrot.slane %v2809, 4
      %v2812 = vrot.slane %v2307, 5
      %v2813 = vsel %vm1547, %v2811, %v2812
      %v2814 = vrot.slane %v2708, 5
      %v2815 = vrot.slane %v2814, 4
      %v2816 = vrot.slane %v2284, 5
      %v2817 = vsel %vm1547, %v2815, %v2816
      %v2818 = vrot.slane %v2816, 4
      %v2819 = vrot.slane %v2308, 5
      %v2820 = vsel %vm1547, %v2818, %v2819
      %v2821 = vrot.slane %v2709, 5
      %v2822 = vrot.slane %v2821, 4
      %v2823 = vrot.slane %v2286, 5
      %v2824 = vsel %vm1547, %v2822, %v2823
      %v2825 = vrot.slane %v2823, 4
      %v2826 = vrot.slane %v2309, 5
      %v2827 = vsel %vm1547, %v2825, %v2826
      %v2828 = vrot.slane %v2710, 5
      %v2829 = vrot.slane %v2828, 4
      %v2830 = vrot.slane %v2288, 5
      %v2831 = vsel %vm1547, %v2829, %v2830
      %v2832 = vrot.slane %v2830, 4
      %v2833 = vrot.slane %v2310, 5
      %v2834 = vsel %vm1547, %v2832, %v2833
      %v2835 = vrot.slane %v2711, 5
      %v2836 = vrot.slane %v2835, 4
      %v2837 = vrot.slane %v2290, 5
      %v2838 = vsel %vm1547, %v2836, %v2837
      %v2839 = vrot.slane %v2837, 4
      %v2840 = vrot.slane %v2311, 5
      %v2841 = vsel %vm1547, %v2839, %v2840
      %v2842 = vrot.slane %v2712, 5
      %v2843 = vrot.slane %v2842, 4
      %v2844 = vrot.slane %v2292, 5
      %v2845 = vsel %vm1547, %v2843, %v2844
      %v2846 = vrot.slane %v2844, 4
      %v2847 = vrot.slane %v2312, 5
      %v2848 = vsel %vm1547, %v2846, %v2847
      %v2849 = vrot.slane %v2713, 5
      %v2850 = vrot.slane %v2849, 4
      %v2851 = vrot.slane %v2294, 5
      %v2852 = vsel %vm1547, %v2850, %v2851
      %v2853 = vrot.slane %v2851, 4
      %v2854 = vrot.slane %v2313, 5
      %v2855 = vsel %vm1547, %v2853, %v2854
      %v2856 = vrot.slane %v2714, 5
      %v2857 = vrot.slane %v2856, 4
      %v2858 = vrot.slane %v2296, 5
      %v2859 = vsel %vm1547, %v2857, %v2858
      %v2860 = vrot.slane %v2858, 4
      %v2861 = vrot.slane %v2314, 5
      %v2862 = vsel %vm1547, %v2860, %v2861
      %v2863 = vrot.slane %v2715, 5
      %v2864 = vrot.slane %v2863, 4
      %v2865 = vrot.slane %v2298, 5
      %v2866 = vsel %vm1547, %v2864, %v2865
      %v2867 = vrot.slane %v2865, 4
      %v2868 = vrot.slane %v2315, 5
      %v2869 = vsel %vm1547, %v2867, %v2868
      %v2870 = vrot.slane %v2716, 5
      %v2871 = vrot.slane %v2870, 4
      %v2872 = vrot.slane %v2300, 5
      %v2873 = vsel %vm1547, %v2871, %v2872
      %v2874 = vrot.slane %v2872, 4
      %v2875 = vrot.slane %v2316, 5
      %v2876 = vsel %vm1547, %v2874, %v2875
      %v2893 = vunpack.c.l.b16 %v1046
      %v2894 = vunpack.c.l.b16 %v1047
      %v2895 = vunpack.c.l.b16 %v1048
      %v2896 = vunpack.c.l.b16 %v1049
      %v2897 = vunpack.c.l.b16 %v1050
      %v2898 = vunpack.c.l.b16 %v1051
      %v2899 = vunpack.c.l.b16 %v1052
      %v2900 = vunpack.c.l.b16 %v1053
      %v2901 = vunpack.c.l.b16 %v1054
      %v2902 = vunpack.c.l.b16 %v1055
      %v2903 = vunpack.c.l.b16 %v1056
      %v2904 = vunpack.c.l.b16 %v1057
      %v2905 = vunpack.c.l.b16 %v1058
      %v2906 = vunpack.c.l.b16 %v1059
      %v2907 = vunpack.c.l.b16 %v1060
      %v2908 = vunpack.c.l.b16 %v1061
      %v2909 = vunpack.c.l.b16 %v1062
      %v2910 = vunpack.c.l.b16 %v1063
      %v2911 = vunpack.c.l.b16 %v1064
      %v2912 = vunpack.c.l.b16 %v1065
      %v2913 = vunpack.c.l.b16 %v1066
      %v2914 = vunpack.c.l.b16 %v1067
      %v2915 = vunpack.c.l.b16 %v1068
      %v2916 = vunpack.c.l.b16 %v1069
      %v2917 = vunpack.c.l.b16 %v1070
      %v2918 = vunpack.c.l.b16 %v1071
      %v2919 = vunpack.c.l.b16 %v1072
      %v2920 = vunpack.c.l.b16 %v1073
      %v2921 = vunpack.c.l.b16 %v1074
      %v2922 = vunpack.c.l.b16 %v1075
      %v2923 = vunpack.c.l.b16 %v1076
      %v2924 = vunpack.c.l.b16 %v1077
      %v2925 = vpack.c.b16 %v2894, %v2893
      %v2926 = vpack.c.b16 %v2896, %v2895
      %v2927 = vpack.c.b16 %v2898, %v2897
      %v2928 = vpack.c.b16 %v2900, %v2899
      %v2929 = vpack.c.b16 %v2902, %v2901
      %v2930 = vpack.c.b16 %v2904, %v2903
      %v2931 = vpack.c.b16 %v2906, %v2905
      %v2932 = vpack.c.b16 %v2908, %v2907
      %v2933 = vpack.c.b16 %v2910, %v2909
      %v2934 = vpack.c.b16 %v2912, %v2911
      %v2935 = vpack.c.b16 %v2914, %v2913
      %v2936 = vpack.c.b16 %v2916, %v2915
      %v2937 = vpack.c.b16 %v2918, %v2917
      %v2938 = vpack.c.b16 %v2920, %v2919
      %v2939 = vpack.c.b16 %v2922, %v2921
      %v2940 = vpack.c.b16 %v2924, %v2923
      %v2941 = vunpack.c.l.b16 %v1110
      %v2942 = vunpack.c.l.b16 %v1120
      %v2943 = vunpack.c.l.b16 %v1134
      %v2944 = vunpack.c.l.b16 %v1144
      %v2945 = vunpack.c.l.b16 %v1158
      %v2946 = vunpack.c.l.b16 %v1168
      %v2947 = vunpack.c.l.b16 %v1182
      %v2948 = vunpack.c.l.b16 %v1192
      %v2949 = vunpack.c.l.b16 %v1206
      %v2950 = vunpack.c.l.b16 %v1216
      %v2951 = vunpack.c.l.b16 %v1230
      %v2952 = vunpack.c.l.b16 %v1240
      %v2953 = vunpack.c.l.b16 %v1254
      %v2954 = vunpack.c.l.b16 %v1264
      %v2955 = vunpack.c.l.b16 %v1278
      %v2956 = vunpack.c.l.b16 %v1288
      %v2957 = vunpack.c.l.b16 %v1302
      %v2958 = vunpack.c.l.b16 %v1312
      %v2959 = vunpack.c.l.b16 %v1326
      %v2960 = vunpack.c.l.b16 %v1336
      %v2961 = vunpack.c.l.b16 %v1350
      %v2962 = vunpack.c.l.b16 %v1360
      %v2963 = vunpack.c.l.b16 %v1374
      %v2964 = vunpack.c.l.b16 %v1384
      %v2965 = vunpack.c.l.b16 %v1398
      %v2966 = vunpack.c.l.b16 %v1408
      %v2967 = vunpack.c.l.b16 %v1422
      %v2968 = vunpack.c.l.b16 %v1432
      %v2969 = vunpack.c.l.b16 %v1446
      %v2970 = vunpack.c.l.b16 %v1456
      %v2971 = vunpack.c.l.b16 %v1470
      %v2972 = vunpack.c.l.b16 %v1480
      %v2973 = vpack.c.b16 %v2942, %v2941
      %v2974 = vpack.c.b16 %v2944, %v2943
      %v2975 = vpack.c.b16 %v2946, %v2945
      %v2976 = vpack.c.b16 %v2948, %v2947
      %v2977 = vpack.c.b16 %v2950, %v2949
      %v2978 = vpack.c.b16 %v2952, %v2951
      %v2979 = vpack.c.b16 %v2954, %v2953
      %v2980 = vpack.c.b16 %v2956, %v2955
      %v2981 = vpack.c.b16 %v2958, %v2957
      %v2982 = vpack.c.b16 %v2960, %v2959
      %v2983 = vpack.c.b16 %v2962, %v2961
      %v2984 = vpack.c.b16 %v2964, %v2963
      %v2985 = vpack.c.b16 %v2966, %v2965
      %v2986 = vpack.c.b16 %v2968, %v2967
      %v2987 = vpack.c.b16 %v2970, %v2969
      %v2988 = vpack.c.b16 %v2972, %v2971
      %2989 = vrot.lane.b32.xlu0 %v2973, 4
      %v2990 = vpop.permute.xlu0 %2989
      %2991 = vrot.lane.b32.xlu0 %v2974, 4
      %v2992 = vpop.permute.xlu0 %2991
      %2993 = vrot.lane.b32.xlu0 %v2975, 4
      %v2994 = vpop.permute.xlu0 %2993
      %2995 = vrot.lane.b32.xlu0 %v2976, 4
      %v2996 = vpop.permute.xlu0 %2995
      %2997 = vrot.lane.b32.xlu0 %v2977, 4
      %v2998 = vpop.permute.xlu0 %2997
      %2999 = vrot.lane.b32.xlu0 %v2978, 4
      %v3000 = vpop.permute.xlu0 %2999
      %3001 = vrot.lane.b32.xlu0 %v2979, 4
      %v3002 = vpop.permute.xlu0 %3001
      %3003 = vrot.lane.b32.xlu0 %v2980, 4
      %v3004 = vpop.permute.xlu0 %3003
      %3005 = vrot.lane.b32.xlu0 %v2981, 4
      %v3006 = vpop.permute.xlu0 %3005
      %3007 = vrot.lane.b32.xlu0 %v2982, 4
      %v3008 = vpop.permute.xlu0 %3007
      %3009 = vrot.lane.b32.xlu0 %v2983, 4
      %v3010 = vpop.permute.xlu0 %3009
      %3011 = vrot.lane.b32.xlu0 %v2984, 4
      %v3012 = vpop.permute.xlu0 %3011
      %3013 = vrot.lane.b32.xlu0 %v2985, 4
      %v3014 = vpop.permute.xlu0 %3013
      %3015 = vrot.lane.b32.xlu0 %v2986, 4
      %v3016 = vpop.permute.xlu0 %3015
      %3017 = vrot.lane.b32.xlu0 %v2987, 4
      %v3018 = vpop.permute.xlu0 %3017
      %3019 = vrot.lane.b32.xlu0 %v2988, 4
      %v3020 = vpop.permute.xlu0 %3019
      %v3021 = vunpack.c.l.b16 %v1551
      %v3022 = vunpack.c.l.b16 %v1554
      %v3023 = vunpack.c.l.b16 %v1558
      %v3024 = vunpack.c.l.b16 %v1561
      %v3025 = vunpack.c.l.b16 %v1565
      %v3026 = vunpack.c.l.b16 %v1568
      %v3027 = vunpack.c.l.b16 %v1572
      %v3028 = vunpack.c.l.b16 %v1575
      %v3029 = vunpack.c.l.b16 %v1579
      %v3030 = vunpack.c.l.b16 %v1582
      %v3031 = vunpack.c.l.b16 %v1586
      %v3032 = vunpack.c.l.b16 %v1589
      %v3033 = vunpack.c.l.b16 %v1593
      %v3034 = vunpack.c.l.b16 %v1596
      %v3035 = vunpack.c.l.b16 %v1600
      %v3036 = vunpack.c.l.b16 %v1603
      %v3037 = vunpack.c.l.b16 %v1607
      %v3038 = vunpack.c.l.b16 %v1610
      %v3039 = vunpack.c.l.b16 %v1614
      %v3040 = vunpack.c.l.b16 %v1617
      %v3041 = vunpack.c.l.b16 %v1621
      %v3042 = vunpack.c.l.b16 %v1624
      %v3043 = vunpack.c.l.b16 %v1628
      %v3044 = vunpack.c.l.b16 %v1631
      %v3045 = vunpack.c.l.b16 %v1635
      %v3046 = vunpack.c.l.b16 %v1638
      %v3047 = vunpack.c.l.b16 %v1642
      %v3048 = vunpack.c.l.b16 %v1645
      %v3049 = vunpack.c.l.b16 %v1649
      %v3050 = vunpack.c.l.b16 %v1652
      %v3051 = vunpack.c.l.b16 %v1656
      %v3052 = vunpack.c.l.b16 %v1659
      %v3053 = vpack.c.b16 %v3022, %v3021
      %v3054 = vpack.c.b16 %v3024, %v3023
      %v3055 = vpack.c.b16 %v3026, %v3025
      %v3056 = vpack.c.b16 %v3028, %v3027
      %v3057 = vpack.c.b16 %v3030, %v3029
      %v3058 = vpack.c.b16 %v3032, %v3031
      %v3059 = vpack.c.b16 %v3034, %v3033
      %v3060 = vpack.c.b16 %v3036, %v3035
      %v3061 = vpack.c.b16 %v3038, %v3037
      %v3062 = vpack.c.b16 %v3040, %v3039
      %v3063 = vpack.c.b16 %v3042, %v3041
      %v3064 = vpack.c.b16 %v3044, %v3043
      %v3065 = vpack.c.b16 %v3046, %v3045
      %v3066 = vpack.c.b16 %v3048, %v3047
      %v3067 = vpack.c.b16 %v3050, %v3049
      %v3068 = vpack.c.b16 %v3052, %v3051
      %3069 = vrot.lane.b32.xlu0 %v3053, 8
      %v3070 = vpop.permute.xlu0 %3069
      %3071 = vrot.lane.b32.xlu0 %v3054, 8
      %v3072 = vpop.permute.xlu0 %3071
      %3073 = vrot.lane.b32.xlu0 %v3055, 8
      %v3074 = vpop.permute.xlu0 %3073
      %3075 = vrot.lane.b32.xlu0 %v3056, 8
      %v3076 = vpop.permute.xlu0 %3075
      %3077 = vrot.lane.b32.xlu0 %v3057, 8
      %v3078 = vpop.permute.xlu0 %3077
      %3079 = vrot.lane.b32.xlu0 %v3058, 8
      %v3080 = vpop.permute.xlu0 %3079
      %3081 = vrot.lane.b32.xlu0 %v3059, 8
      %v3082 = vpop.permute.xlu0 %3081
      %3083 = vrot.lane.b32.xlu0 %v3060, 8
      %v3084 = vpop.permute.xlu0 %3083
      %3085 = vrot.lane.b32.xlu0 %v3061, 8
      %v3086 = vpop.permute.xlu0 %3085
      %3087 = vrot.lane.b32.xlu0 %v3062, 8
      %v3088 = vpop.permute.xlu0 %3087
      %3089 = vrot.lane.b32.xlu0 %v3063, 8
      %v3090 = vpop.permute.xlu0 %3089
      %3091 = vrot.lane.b32.xlu0 %v3064, 8
      %v3092 = vpop.permute.xlu0 %3091
      %3093 = vrot.lane.b32.xlu0 %v3065, 8
      %v3094 = vpop.permute.xlu0 %3093
      %3095 = vrot.lane.b32.xlu0 %v3066, 8
      %v3096 = vpop.permute.xlu0 %3095
      %3097 = vrot.lane.b32.xlu0 %v3067, 8
      %v3098 = vpop.permute.xlu0 %3097
      %3099 = vrot.lane.b32.xlu0 %v3068, 8
      %v3100 = vpop.permute.xlu0 %3099
      %v3117 = vunpack.c.l.b16 %v1660
      %v3118 = vunpack.c.l.b16 %v1661
      %v3119 = vunpack.c.l.b16 %v1662
      %v3120 = vunpack.c.l.b16 %v1663
      %v3121 = vunpack.c.l.b16 %v1664
      %v3122 = vunpack.c.l.b16 %v1665
      %v3123 = vunpack.c.l.b16 %v1666
      %v3124 = vunpack.c.l.b16 %v1667
      %v3125 = vunpack.c.l.b16 %v1668
      %v3126 = vunpack.c.l.b16 %v1669
      %v3127 = vunpack.c.l.b16 %v1670
      %v3128 = vunpack.c.l.b16 %v1671
      %v3129 = vunpack.c.l.b16 %v1672
      %v3130 = vunpack.c.l.b16 %v1673
      %v3131 = vunpack.c.l.b16 %v1674
      %v3132 = vunpack.c.l.b16 %v1675
      %v3133 = vunpack.c.l.b16 %v1676
      %v3134 = vunpack.c.l.b16 %v1677
      %v3135 = vunpack.c.l.b16 %v1678
      %v3136 = vunpack.c.l.b16 %v1679
      %v3137 = vunpack.c.l.b16 %v1680
      %v3138 = vunpack.c.l.b16 %v1681
      %v3139 = vunpack.c.l.b16 %v1682
      %v3140 = vunpack.c.l.b16 %v1683
      %v3141 = vunpack.c.l.b16 %v1684
      %v3142 = vunpack.c.l.b16 %v1685
      %v3143 = vunpack.c.l.b16 %v1686
      %v3144 = vunpack.c.l.b16 %v1687
      %v3145 = vunpack.c.l.b16 %v1688
      %v3146 = vunpack.c.l.b16 %v1689
      %v3147 = vunpack.c.l.b16 %v1690
      %v3148 = vunpack.c.l.b16 %v1691
      %v3149 = vpack.c.b16 %v3118, %v3117
      %v3150 = vpack.c.b16 %v3120, %v3119
      %v3151 = vpack.c.b16 %v3122, %v3121
      %v3152 = vpack.c.b16 %v3124, %v3123
      %v3153 = vpack.c.b16 %v3126, %v3125
      %v3154 = vpack.c.b16 %v3128, %v3127
      %v3155 = vpack.c.b16 %v3130, %v3129
      %v3156 = vpack.c.b16 %v3132, %v3131
      %v3157 = vpack.c.b16 %v3134, %v3133
      %v3158 = vpack.c.b16 %v3136, %v3135
      %v3159 = vpack.c.b16 %v3138, %v3137
      %v3160 = vpack.c.b16 %v3140, %v3139
      %v3161 = vpack.c.b16 %v3142, %v3141
      %v3162 = vpack.c.b16 %v3144, %v3143
      %v3163 = vpack.c.b16 %v3146, %v3145
      %v3164 = vpack.c.b16 %v3148, %v3147
      %3165 = vrot.lane.b32.xlu0 %v3149, 12
      %v3166 = vpop.permute.xlu0 %3165
      %3167 = vrot.lane.b32.xlu0 %v3150, 12
      %v3168 = vpop.permute.xlu0 %3167
      %3169 = vrot.lane.b32.xlu0 %v3151, 12
      %v3170 = vpop.permute.xlu0 %3169
      %3171 = vrot.lane.b32.xlu0 %v3152, 12
      %v3172 = vpop.permute.xlu0 %3171
      %3173 = vrot.lane.b32.xlu0 %v3153, 12
      %v3174 = vpop.permute.xlu0 %3173
      %3175 = vrot.lane.b32.xlu0 %v3154, 12
      %v3176 = vpop.permute.xlu0 %3175
      %3177 = vrot.lane.b32.xlu0 %v3155, 12
      %v3178 = vpop.permute.xlu0 %3177
      %3179 = vrot.lane.b32.xlu0 %v3156, 12
      %v3180 = vpop.permute.xlu0 %3179
      %3181 = vrot.lane.b32.xlu0 %v3157, 12
      %v3182 = vpop.permute.xlu0 %3181
      %3183 = vrot.lane.b32.xlu0 %v3158, 12
      %v3184 = vpop.permute.xlu0 %3183
      %3185 = vrot.lane.b32.xlu0 %v3159, 12
      %v3186 = vpop.permute.xlu0 %3185
      %3187 = vrot.lane.b32.xlu0 %v3160, 12
      %v3188 = vpop.permute.xlu0 %3187
      %3189 = vrot.lane.b32.xlu0 %v3161, 12
      %v3190 = vpop.permute.xlu0 %3189
      %3191 = vrot.lane.b32.xlu0 %v3162, 12
      %v3192 = vpop.permute.xlu0 %3191
      %3193 = vrot.lane.b32.xlu0 %v3163, 12
      %v3194 = vpop.permute.xlu0 %3193
      %3195 = vrot.lane.b32.xlu0 %v3164, 12
      %v3196 = vpop.permute.xlu0 %3195
      %v3197 = vunpack.c.l.b16 %v1721
      %v3198 = vunpack.c.l.b16 %v1731
      %v3199 = vunpack.c.l.b16 %v1745
      %v3200 = vunpack.c.l.b16 %v1755
      %v3201 = vunpack.c.l.b16 %v1769
      %v3202 = vunpack.c.l.b16 %v1779
      %v3203 = vunpack.c.l.b16 %v1793
      %v3204 = vunpack.c.l.b16 %v1803
      %v3205 = vunpack.c.l.b16 %v1817
      %v3206 = vunpack.c.l.b16 %v1827
      %v3207 = vunpack.c.l.b16 %v1841
      %v3208 = vunpack.c.l.b16 %v1851
      %v3209 = vunpack.c.l.b16 %v1865
      %v3210 = vunpack.c.l.b16 %v1875
      %v3211 = vunpack.c.l.b16 %v1889
      %v3212 = vunpack.c.l.b16 %v1899
      %v3213 = vunpack.c.l.b16 %v1913
      %v3214 = vunpack.c.l.b16 %v1923
      %v3215 = vunpack.c.l.b16 %v1937
      %v3216 = vunpack.c.l.b16 %v1947
      %v3217 = vunpack.c.l.b16 %v1961
      %v3218 = vunpack.c.l.b16 %v1971
      %v3219 = vunpack.c.l.b16 %v1985
      %v3220 = vunpack.c.l.b16 %v1995
      %v3221 = vunpack.c.l.b16 %v2009
      %v3222 = vunpack.c.l.b16 %v2019
      %v3223 = vunpack.c.l.b16 %v2033
      %v3224 = vunpack.c.l.b16 %v2043
      %v3225 = vunpack.c.l.b16 %v2057
      %v3226 = vunpack.c.l.b16 %v2067
      %v3227 = vunpack.c.l.b16 %v2081
      %v3228 = vunpack.c.l.b16 %v2091
      %v3229 = vpack.c.b16 %v3198, %v3197
      %v3230 = vpack.c.b16 %v3200, %v3199
      %v3231 = vpack.c.b16 %v3202, %v3201
      %v3232 = vpack.c.b16 %v3204, %v3203
      %v3233 = vpack.c.b16 %v3206, %v3205
      %v3234 = vpack.c.b16 %v3208, %v3207
      %v3235 = vpack.c.b16 %v3210, %v3209
      %v3236 = vpack.c.b16 %v3212, %v3211
      %v3237 = vpack.c.b16 %v3214, %v3213
      %v3238 = vpack.c.b16 %v3216, %v3215
      %v3239 = vpack.c.b16 %v3218, %v3217
      %v3240 = vpack.c.b16 %v3220, %v3219
      %v3241 = vpack.c.b16 %v3222, %v3221
      %v3242 = vpack.c.b16 %v3224, %v3223
      %v3243 = vpack.c.b16 %v3226, %v3225
      %v3244 = vpack.c.b16 %v3228, %v3227
      %3245 = vrot.lane.b32.xlu0 %v3229, 16
      %v3246 = vpop.permute.xlu0 %3245
      %3247 = vrot.lane.b32.xlu0 %v3230, 16
      %v3248 = vpop.permute.xlu0 %3247
      %3249 = vrot.lane.b32.xlu0 %v3231, 16
      %v3250 = vpop.permute.xlu0 %3249
      %3251 = vrot.lane.b32.xlu0 %v3232, 16
      %v3252 = vpop.permute.xlu0 %3251
      %3253 = vrot.lane.b32.xlu0 %v3233, 16
      %v3254 = vpop.permute.xlu0 %3253
      %3255 = vrot.lane.b32.xlu0 %v3234, 16
      %v3256 = vpop.permute.xlu0 %3255
      %3257 = vrot.lane.b32.xlu0 %v3235, 16
      %v3258 = vpop.permute.xlu0 %3257
      %3259 = vrot.lane.b32.xlu0 %v3236, 16
      %v3260 = vpop.permute.xlu0 %3259
      %3261 = vrot.lane.b32.xlu0 %v3237, 16
      %v3262 = vpop.permute.xlu0 %3261
      %3263 = vrot.lane.b32.xlu0 %v3238, 16
      %v3264 = vpop.permute.xlu0 %3263
      %3265 = vrot.lane.b32.xlu0 %v3239, 16
      %v3266 = vpop.permute.xlu0 %3265
      %3267 = vrot.lane.b32.xlu0 %v3240, 16
      %v3268 = vpop.permute.xlu0 %3267
      %3269 = vrot.lane.b32.xlu0 %v3241, 16
      %v3270 = vpop.permute.xlu0 %3269
      %3271 = vrot.lane.b32.xlu0 %v3242, 16
      %v3272 = vpop.permute.xlu0 %3271
      %3273 = vrot.lane.b32.xlu0 %v3243, 16
      %v3274 = vpop.permute.xlu0 %3273
      %3275 = vrot.lane.b32.xlu0 %v3244, 16
      %v3276 = vpop.permute.xlu0 %3275
      %v3277 = vunpack.c.l.b16 %v2159
      %v3278 = vunpack.c.l.b16 %v2162
      %v3279 = vunpack.c.l.b16 %v2166
      %v3280 = vunpack.c.l.b16 %v2169
      %v3281 = vunpack.c.l.b16 %v2173
      %v3282 = vunpack.c.l.b16 %v2176
      %v3283 = vunpack.c.l.b16 %v2180
      %v3284 = vunpack.c.l.b16 %v2183
      %v3285 = vunpack.c.l.b16 %v2187
      %v3286 = vunpack.c.l.b16 %v2190
      %v3287 = vunpack.c.l.b16 %v2194
      %v3288 = vunpack.c.l.b16 %v2197
      %v3289 = vunpack.c.l.b16 %v2201
      %v3290 = vunpack.c.l.b16 %v2204
      %v3291 = vunpack.c.l.b16 %v2208
      %v3292 = vunpack.c.l.b16 %v2211
      %v3293 = vunpack.c.l.b16 %v2215
      %v3294 = vunpack.c.l.b16 %v2218
      %v3295 = vunpack.c.l.b16 %v2222
      %v3296 = vunpack.c.l.b16 %v2225
      %v3297 = vunpack.c.l.b16 %v2229
      %v3298 = vunpack.c.l.b16 %v2232
      %v3299 = vunpack.c.l.b16 %v2236
      %v3300 = vunpack.c.l.b16 %v2239
      %v3301 = vunpack.c.l.b16 %v2243
      %v3302 = vunpack.c.l.b16 %v2246
      %v3303 = vunpack.c.l.b16 %v2250
      %v3304 = vunpack.c.l.b16 %v2253
      %v3305 = vunpack.c.l.b16 %v2257
      %v3306 = vunpack.c.l.b16 %v2260
      %v3307 = vunpack.c.l.b16 %v2264
      %v3308 = vunpack.c.l.b16 %v2267
      %v3309 = vpack.c.b16 %v3278, %v3277
      %v3310 = vpack.c.b16 %v3280, %v3279
      %v3311 = vpack.c.b16 %v3282, %v3281
      %v3312 = vpack.c.b16 %v3284, %v3283
      %v3313 = vpack.c.b16 %v3286, %v3285
      %v3314 = vpack.c.b16 %v3288, %v3287
      %v3315 = vpack.c.b16 %v3290, %v3289
      %v3316 = vpack.c.b16 %v3292, %v3291
      %v3317 = vpack.c.b16 %v3294, %v3293
      %v3318 = vpack.c.b16 %v3296, %v3295
      %v3319 = vpack.c.b16 %v3298, %v3297
      %v3320 = vpack.c.b16 %v3300, %v3299
      %v3321 = vpack.c.b16 %v3302, %v3301
      %v3322 = vpack.c.b16 %v3304, %v3303
      %v3323 = vpack.c.b16 %v3306, %v3305
      %v3324 = vpack.c.b16 %v3308, %v3307
      %3325 = vrot.lane.b32.xlu0 %v3309, 20
      %v3326 = vpop.permute.xlu0 %3325
      %3327 = vrot.lane.b32.xlu0 %v3310, 20
      %v3328 = vpop.permute.xlu0 %3327
      %3329 = vrot.lane.b32.xlu0 %v3311, 20
      %v3330 = vpop.permute.xlu0 %3329
      %3331 = vrot.lane.b32.xlu0 %v3312, 20
      %v3332 = vpop.permute.xlu0 %3331
      %3333 = vrot.lane.b32.xlu0 %v3313, 20
      %v3334 = vpop.permute.xlu0 %3333
      %3335 = vrot.lane.b32.xlu0 %v3314, 20
      %v3336 = vpop.permute.xlu0 %3335
      %3337 = vrot.lane.b32.xlu0 %v3315, 20
      %v3338 = vpop.permute.xlu0 %3337
      %3339 = vrot.lane.b32.xlu0 %v3316, 20
      %v3340 = vpop.permute.xlu0 %3339
      %3341 = vrot.lane.b32.xlu0 %v3317, 20
      %v3342 = vpop.permute.xlu0 %3341
      %3343 = vrot.lane.b32.xlu0 %v3318, 20
      %v3344 = vpop.permute.xlu0 %3343
      %3345 = vrot.lane.b32.xlu0 %v3319, 20
      %v3346 = vpop.permute.xlu0 %3345
      %3347 = vrot.lane.b32.xlu0 %v3320, 20
      %v3348 = vpop.permute.xlu0 %3347
      %3349 = vrot.lane.b32.xlu0 %v3321, 20
      %v3350 = vpop.permute.xlu0 %3349
      %3351 = vrot.lane.b32.xlu0 %v3322, 20
      %v3352 = vpop.permute.xlu0 %3351
      %3353 = vrot.lane.b32.xlu0 %v3323, 20
      %v3354 = vpop.permute.xlu0 %3353
      %3355 = vrot.lane.b32.xlu0 %v3324, 20
      %v3356 = vpop.permute.xlu0 %3355
      %v3373 = vunpack.c.l.b16 %v2269
      %v3374 = vunpack.c.l.b16 %v2270
      %v3375 = vunpack.c.l.b16 %v2271
      %v3376 = vunpack.c.l.b16 %v2272
      %v3377 = vunpack.c.l.b16 %v2273
      %v3378 = vunpack.c.l.b16 %v2274
      %v3379 = vunpack.c.l.b16 %v2275
      %v3380 = vunpack.c.l.b16 %v2276
      %v3381 = vunpack.c.l.b16 %v2277
      %v3382 = vunpack.c.l.b16 %v2278
      %v3383 = vunpack.c.l.b16 %v2279
      %v3384 = vunpack.c.l.b16 %v2280
      %v3385 = vunpack.c.l.b16 %v2281
      %v3386 = vunpack.c.l.b16 %v2282
      %v3387 = vunpack.c.l.b16 %v2283
      %v3388 = vunpack.c.l.b16 %v2284
      %v3389 = vunpack.c.l.b16 %v2285
      %v3390 = vunpack.c.l.b16 %v2286
      %v3391 = vunpack.c.l.b16 %v2287
      %v3392 = vunpack.c.l.b16 %v2288
      %v3393 = vunpack.c.l.b16 %v2289
      %v3394 = vunpack.c.l.b16 %v2290
      %v3395 = vunpack.c.l.b16 %v2291
      %v3396 = vunpack.c.l.b16 %v2292
      %v3397 = vunpack.c.l.b16 %v2293
      %v3398 = vunpack.c.l.b16 %v2294
      %v3399 = vunpack.c.l.b16 %v2295
      %v3400 = vunpack.c.l.b16 %v2296
      %v3401 = vunpack.c.l.b16 %v2297
      %v3402 = vunpack.c.l.b16 %v2298
      %v3403 = vunpack.c.l.b16 %v2299
      %v3404 = vunpack.c.l.b16 %v2300
      %v3405 = vpack.c.b16 %v3374, %v3373
      %v3406 = vpack.c.b16 %v3376, %v3375
      %v3407 = vpack.c.b16 %v3378, %v3377
      %v3408 = vpack.c.b16 %v3380, %v3379
      %v3409 = vpack.c.b16 %v3382, %v3381
      %v3410 = vpack.c.b16 %v3384, %v3383
      %v3411 = vpack.c.b16 %v3386, %v3385
      %v3412 = vpack.c.b16 %v3388, %v3387
      %v3413 = vpack.c.b16 %v3390, %v3389
      %v3414 = vpack.c.b16 %v3392, %v3391
      %v3415 = vpack.c.b16 %v3394, %v3393
      %v3416 = vpack.c.b16 %v3396, %v3395
      %v3417 = vpack.c.b16 %v3398, %v3397
      %v3418 = vpack.c.b16 %v3400, %v3399
      %v3419 = vpack.c.b16 %v3402, %v3401
      %v3420 = vpack.c.b16 %v3404, %v3403
      %3421 = vrot.lane.b32.xlu0 %v3405, 24
      %v3422 = vpop.permute.xlu0 %3421
      %3423 = vrot.lane.b32.xlu0 %v3406, 24
      %v3424 = vpop.permute.xlu0 %3423
      %3425 = vrot.lane.b32.xlu0 %v3407, 24
      %v3426 = vpop.permute.xlu0 %3425
      %3427 = vrot.lane.b32.xlu0 %v3408, 24
      %v3428 = vpop.permute.xlu0 %3427
      %3429 = vrot.lane.b32.xlu0 %v3409, 24
      %v3430 = vpop.permute.xlu0 %3429
      %3431 = vrot.lane.b32.xlu0 %v3410, 24
      %v3432 = vpop.permute.xlu0 %3431
      %3433 = vrot.lane.b32.xlu0 %v3411, 24
      %v3434 = vpop.permute.xlu0 %3433
      %3435 = vrot.lane.b32.xlu0 %v3412, 24
      %v3436 = vpop.permute.xlu0 %3435
      %3437 = vrot.lane.b32.xlu0 %v3413, 24
      %v3438 = vpop.permute.xlu0 %3437
      %3439 = vrot.lane.b32.xlu0 %v3414, 24
      %v3440 = vpop.permute.xlu0 %3439
      %3441 = vrot.lane.b32.xlu0 %v3415, 24
      %v3442 = vpop.permute.xlu0 %3441
      %3443 = vrot.lane.b32.xlu0 %v3416, 24
      %v3444 = vpop.permute.xlu0 %3443
      %3445 = vrot.lane.b32.xlu0 %v3417, 24
      %v3446 = vpop.permute.xlu0 %3445
      %3447 = vrot.lane.b32.xlu0 %v3418, 24
      %v3448 = vpop.permute.xlu0 %3447
      %3449 = vrot.lane.b32.xlu0 %v3419, 24
      %v3450 = vpop.permute.xlu0 %3449
      %3451 = vrot.lane.b32.xlu0 %v3420, 24
      %v3452 = vpop.permute.xlu0 %3451
      %v3453 = vunpack.c.l.b16 %v2330
      %v3454 = vunpack.c.l.b16 %v2340
      %v3455 = vunpack.c.l.b16 %v2354
      %v3456 = vunpack.c.l.b16 %v2364
      %v3457 = vunpack.c.l.b16 %v2378
      %v3458 = vunpack.c.l.b16 %v2388
      %v3459 = vunpack.c.l.b16 %v2402
      %v3460 = vunpack.c.l.b16 %v2412
      %v3461 = vunpack.c.l.b16 %v2426
      %v3462 = vunpack.c.l.b16 %v2436
      %v3463 = vunpack.c.l.b16 %v2450
      %v3464 = vunpack.c.l.b16 %v2460
      %v3465 = vunpack.c.l.b16 %v2474
      %v3466 = vunpack.c.l.b16 %v2484
      %v3467 = vunpack.c.l.b16 %v2498
      %v3468 = vunpack.c.l.b16 %v2508
      %v3469 = vunpack.c.l.b16 %v2522
      %v3470 = vunpack.c.l.b16 %v2532
      %v3471 = vunpack.c.l.b16 %v2546
      %v3472 = vunpack.c.l.b16 %v2556
      %v3473 = vunpack.c.l.b16 %v2570
      %v3474 = vunpack.c.l.b16 %v2580
      %v3475 = vunpack.c.l.b16 %v2594
      %v3476 = vunpack.c.l.b16 %v2604
      %v3477 = vunpack.c.l.b16 %v2618
      %v3478 = vunpack.c.l.b16 %v2628
      %v3479 = vunpack.c.l.b16 %v2642
      %v3480 = vunpack.c.l.b16 %v2652
      %v3481 = vunpack.c.l.b16 %v2666
      %v3482 = vunpack.c.l.b16 %v2676
      %v3483 = vunpack.c.l.b16 %v2690
      %v3484 = vunpack.c.l.b16 %v2700
      %v3485 = vpack.c.b16 %v3454, %v3453
      %v3486 = vpack.c.b16 %v3456, %v3455
      %v3487 = vpack.c.b16 %v3458, %v3457
      %v3488 = vpack.c.b16 %v3460, %v3459
      %v3489 = vpack.c.b16 %v3462, %v3461
      %v3490 = vpack.c.b16 %v3464, %v3463
      %v3491 = vpack.c.b16 %v3466, %v3465
      %v3492 = vpack.c.b16 %v3468, %v3467
      %v3493 = vpack.c.b16 %v3470, %v3469
      %v3494 = vpack.c.b16 %v3472, %v3471
      %v3495 = vpack.c.b16 %v3474, %v3473
      %v3496 = vpack.c.b16 %v3476, %v3475
      %v3497 = vpack.c.b16 %v3478, %v3477
      %v3498 = vpack.c.b16 %v3480, %v3479
      %v3499 = vpack.c.b16 %v3482, %v3481
      %v3500 = vpack.c.b16 %v3484, %v3483
      %3501 = vrot.lane.b32.xlu0 %v3485, 28
      %v3502 = vpop.permute.xlu0 %3501
      %3503 = vrot.lane.b32.xlu0 %v3486, 28
      %v3504 = vpop.permute.xlu0 %3503
      %3505 = vrot.lane.b32.xlu0 %v3487, 28
      %v3506 = vpop.permute.xlu0 %3505
      %3507 = vrot.lane.b32.xlu0 %v3488, 28
      %v3508 = vpop.permute.xlu0 %3507
      %3509 = vrot.lane.b32.xlu0 %v3489, 28
      %v3510 = vpop.permute.xlu0 %3509
      %3511 = vrot.lane.b32.xlu0 %v3490, 28
      %v3512 = vpop.permute.xlu0 %3511
      %3513 = vrot.lane.b32.xlu0 %v3491, 28
      %v3514 = vpop.permute.xlu0 %3513
      %3515 = vrot.lane.b32.xlu0 %v3492, 28
      %v3516 = vpop.permute.xlu0 %3515
      %3517 = vrot.lane.b32.xlu0 %v3493, 28
      %v3518 = vpop.permute.xlu0 %3517
      %3519 = vrot.lane.b32.xlu0 %v3494, 28
      %v3520 = vpop.permute.xlu0 %3519
      %3521 = vrot.lane.b32.xlu0 %v3495, 28
      %v3522 = vpop.permute.xlu0 %3521
      %3523 = vrot.lane.b32.xlu0 %v3496, 28
      %v3524 = vpop.permute.xlu0 %3523
      %3525 = vrot.lane.b32.xlu0 %v3497, 28
      %v3526 = vpop.permute.xlu0 %3525
      %3527 = vrot.lane.b32.xlu0 %v3498, 28
      %v3528 = vpop.permute.xlu0 %3527
      %3529 = vrot.lane.b32.xlu0 %v3499, 28
      %v3530 = vpop.permute.xlu0 %3529
      %3531 = vrot.lane.b32.xlu0 %v3500, 28
      %v3532 = vpop.permute.xlu0 %3531
      %v3533 = vunpack.c.l.b16 %v2768
      %v3534 = vunpack.c.l.b16 %v2771
      %v3535 = vunpack.c.l.b16 %v2775
      %v3536 = vunpack.c.l.b16 %v2778
      %v3537 = vunpack.c.l.b16 %v2782
      %v3538 = vunpack.c.l.b16 %v2785
      %v3539 = vunpack.c.l.b16 %v2789
      %v3540 = vunpack.c.l.b16 %v2792
      %v3541 = vunpack.c.l.b16 %v2796
      %v3542 = vunpack.c.l.b16 %v2799
      %v3543 = vunpack.c.l.b16 %v2803
      %v3544 = vunpack.c.l.b16 %v2806
      %v3545 = vunpack.c.l.b16 %v2810
      %v3546 = vunpack.c.l.b16 %v2813
      %v3547 = vunpack.c.l.b16 %v2817
      %v3548 = vunpack.c.l.b16 %v2820
      %v3549 = vunpack.c.l.b16 %v2824
      %v3550 = vunpack.c.l.b16 %v2827
      %v3551 = vunpack.c.l.b16 %v2831
      %v3552 = vunpack.c.l.b16 %v2834
      %v3553 = vunpack.c.l.b16 %v2838
      %v3554 = vunpack.c.l.b16 %v2841
      %v3555 = vunpack.c.l.b16 %v2845
      %v3556 = vunpack.c.l.b16 %v2848
      %v3557 = vunpack.c.l.b16 %v2852
      %v3558 = vunpack.c.l.b16 %v2855
      %v3559 = vunpack.c.l.b16 %v2859
      %v3560 = vunpack.c.l.b16 %v2862
      %v3561 = vunpack.c.l.b16 %v2866
      %v3562 = vunpack.c.l.b16 %v2869
      %v3563 = vunpack.c.l.b16 %v2873
      %v3564 = vunpack.c.l.b16 %v2876
      %v3565 = vpack.c.b16 %v3534, %v3533
      %v3566 = vpack.c.b16 %v3536, %v3535
      %v3567 = vpack.c.b16 %v3538, %v3537
      %v3568 = vpack.c.b16 %v3540, %v3539
      %v3569 = vpack.c.b16 %v3542, %v3541
      %v3570 = vpack.c.b16 %v3544, %v3543
      %v3571 = vpack.c.b16 %v3546, %v3545
      %v3572 = vpack.c.b16 %v3548, %v3547
      %v3573 = vpack.c.b16 %v3550, %v3549
      %v3574 = vpack.c.b16 %v3552, %v3551
      %v3575 = vpack.c.b16 %v3554, %v3553
      %v3576 = vpack.c.b16 %v3556, %v3555
      %v3577 = vpack.c.b16 %v3558, %v3557
      %v3578 = vpack.c.b16 %v3560, %v3559
      %v3579 = vpack.c.b16 %v3562, %v3561
      %v3580 = vpack.c.b16 %v3564, %v3563
      %3581 = vrot.lane.b32.xlu0 %v3565, 32
      %v3582 = vpop.permute.xlu0 %3581
      %3583 = vrot.lane.b32.xlu0 %v3566, 32
      %v3584 = vpop.permute.xlu0 %3583
      %3585 = vrot.lane.b32.xlu0 %v3567, 32
      %v3586 = vpop.permute.xlu0 %3585
      %3587 = vrot.lane.b32.xlu0 %v3568, 32
      %v3588 = vpop.permute.xlu0 %3587
      %3589 = vrot.lane.b32.xlu0 %v3569, 32
      %v3590 = vpop.permute.xlu0 %3589
      %3591 = vrot.lane.b32.xlu0 %v3570, 32
      %v3592 = vpop.permute.xlu0 %3591
      %3593 = vrot.lane.b32.xlu0 %v3571, 32
      %v3594 = vpop.permute.xlu0 %3593
      %3595 = vrot.lane.b32.xlu0 %v3572, 32
      %v3596 = vpop.permute.xlu0 %3595
      %3597 = vrot.lane.b32.xlu0 %v3573, 32
      %v3598 = vpop.permute.xlu0 %3597
      %3599 = vrot.lane.b32.xlu0 %v3574, 32
      %v3600 = vpop.permute.xlu0 %3599
      %3601 = vrot.lane.b32.xlu0 %v3575, 32
      %v3602 = vpop.permute.xlu0 %3601
      %3603 = vrot.lane.b32.xlu0 %v3576, 32
      %v3604 = vpop.permute.xlu0 %3603
      %3605 = vrot.lane.b32.xlu0 %v3577, 32
      %v3606 = vpop.permute.xlu0 %3605
      %3607 = vrot.lane.b32.xlu0 %v3578, 32
      %v3608 = vpop.permute.xlu0 %3607
      %3609 = vrot.lane.b32.xlu0 %v3579, 32
      %v3610 = vpop.permute.xlu0 %3609
      %3611 = vrot.lane.b32.xlu0 %v3580, 32
      %v3612 = vpop.permute.xlu0 %3611
      %vm3613 = vcmask 31744
      %v3616 = vsel %vm3613, %v2925, %v2990
      %v3619 = vsel %vm3613, %v2926, %v2992
      %v3622 = vsel %vm3613, %v2927, %v2994
      %v3625 = vsel %vm3613, %v2928, %v2996
      %v3628 = vsel %vm3613, %v2929, %v2998
      %v3631 = vsel %vm3613, %v2930, %v3000
      %v3634 = vsel %vm3613, %v2931, %v3002
      %v3637 = vsel %vm3613, %v2932, %v3004
      %v3640 = vsel %vm3613, %v2933, %v3006
      %v3643 = vsel %vm3613, %v2934, %v3008
      %v3646 = vsel %vm3613, %v2935, %v3010
      %v3649 = vsel %vm3613, %v2936, %v3012
      %v3652 = vsel %vm3613, %v2937, %v3014
      %v3655 = vsel %vm3613, %v2938, %v3016
      %v3658 = vsel %vm3613, %v2939, %v3018
      %v3661 = vsel %vm3613, %v2940, %v3020
      %vm3662 = vcmask 64512
      %v3664 = vsel %vm3662, %v3616, %v3070
      %v3666 = vsel %vm3662, %v3619, %v3072
      %v3668 = vsel %vm3662, %v3622, %v3074
      %v3670 = vsel %vm3662, %v3625, %v3076
      %v3672 = vsel %vm3662, %v3628, %v3078
      %v3674 = vsel %vm3662, %v3631, %v3080
      %v3676 = vsel %vm3662, %v3634, %v3082
      %v3678 = vsel %vm3662, %v3637, %v3084
      %v3680 = vsel %vm3662, %v3640, %v3086
      %v3682 = vsel %vm3662, %v3643, %v3088
      %v3684 = vsel %vm3662, %v3646, %v3090
      %v3686 = vsel %vm3662, %v3649, %v3092
      %v3688 = vsel %vm3662, %v3652, %v3094
      %v3690 = vsel %vm3662, %v3655, %v3096
      %v3692 = vsel %vm3662, %v3658, %v3098
      %v3694 = vsel %vm3662, %v3661, %v3100
      %vm3695 = vcmask 97280
      %v3697 = vsel %vm3695, %v3664, %v3166
      %v3699 = vsel %vm3695, %v3666, %v3168
      %v3701 = vsel %vm3695, %v3668, %v3170
      %v3703 = vsel %vm3695, %v3670, %v3172
      %v3705 = vsel %vm3695, %v3672, %v3174
      %v3707 = vsel %vm3695, %v3674, %v3176
      %v3709 = vsel %vm3695, %v3676, %v3178
      %v3711 = vsel %vm3695, %v3678, %v3180
      %v3713 = vsel %vm3695, %v3680, %v3182
      %v3715 = vsel %vm3695, %v3682, %v3184
      %v3717 = vsel %vm3695, %v3684, %v3186
      %v3719 = vsel %vm3695, %v3686, %v3188
      %v3721 = vsel %vm3695, %v3688, %v3190
      %v3723 = vsel %vm3695, %v3690, %v3192
      %v3725 = vsel %vm3695, %v3692, %v3194
      %v3727 = vsel %vm3695, %v3694, %v3196
      %vm3728 = vcmask 130048
      %v3730 = vsel %vm3728, %v3697, %v3246
      %v3732 = vsel %vm3728, %v3699, %v3248
      %v3734 = vsel %vm3728, %v3701, %v3250
      %v3736 = vsel %vm3728, %v3703, %v3252
      %v3738 = vsel %vm3728, %v3705, %v3254
      %v3740 = vsel %vm3728, %v3707, %v3256
      %v3742 = vsel %vm3728, %v3709, %v3258
      %v3744 = vsel %vm3728, %v3711, %v3260
      %v3746 = vsel %vm3728, %v3713, %v3262
      %v3748 = vsel %vm3728, %v3715, %v3264
      %v3750 = vsel %vm3728, %v3717, %v3266
      %v3752 = vsel %vm3728, %v3719, %v3268
      %v3754 = vsel %vm3728, %v3721, %v3270
      %v3756 = vsel %vm3728, %v3723, %v3272
      %v3758 = vsel %vm3728, %v3725, %v3274
      %v3760 = vsel %vm3728, %v3727, %v3276
      %vm3761 = vcmask 162816
      %v3763 = vsel %vm3761, %v3730, %v3326
      %v3765 = vsel %vm3761, %v3732, %v3328
      %v3767 = vsel %vm3761, %v3734, %v3330
      %v3769 = vsel %vm3761, %v3736, %v3332
      %v3771 = vsel %vm3761, %v3738, %v3334
      %v3773 = vsel %vm3761, %v3740, %v3336
      %v3775 = vsel %vm3761, %v3742, %v3338
      %v3777 = vsel %vm3761, %v3744, %v3340
      %v3779 = vsel %vm3761, %v3746, %v3342
      %v3781 = vsel %vm3761, %v3748, %v3344
      %v3783 = vsel %vm3761, %v3750, %v3346
      %v3785 = vsel %vm3761, %v3752, %v3348
      %v3787 = vsel %vm3761, %v3754, %v3350
      %v3789 = vsel %vm3761, %v3756, %v3352
      %v3791 = vsel %vm3761, %v3758, %v3354
      %v3793 = vsel %vm3761, %v3760, %v3356
      %vm3794 = vcmask 195584
      %v3796 = vsel %vm3794, %v3763, %v3422
      %v3798 = vsel %vm3794, %v3765, %v3424
      %v3800 = vsel %vm3794, %v3767, %v3426
      %v3802 = vsel %vm3794, %v3769, %v3428
      %v3804 = vsel %vm3794, %v3771, %v3430
      %v3806 = vsel %vm3794, %v3773, %v3432
      %v3808 = vsel %vm3794, %v3775, %v3434
      %v3810 = vsel %vm3794, %v3777, %v3436
      %v3812 = vsel %vm3794, %v3779, %v3438
      %v3814 = vsel %vm3794, %v3781, %v3440
      %v3816 = vsel %vm3794, %v3783, %v3442
      %v3818 = vsel %vm3794, %v3785, %v3444
      %v3820 = vsel %vm3794, %v3787, %v3446
      %v3822 = vsel %vm3794, %v3789, %v3448
      %v3824 = vsel %vm3794, %v3791, %v3450
      %v3826 = vsel %vm3794, %v3793, %v3452
      %vm3827 = vcmask 228352
      %v3829 = vsel %vm3827, %v3796, %v3502
      %v3831 = vsel %vm3827, %v3798, %v3504
      %v3833 = vsel %vm3827, %v3800, %v3506
      %v3835 = vsel %vm3827, %v3802, %v3508
      %v3837 = vsel %vm3827, %v3804, %v3510
      %v3839 = vsel %vm3827, %v3806, %v3512
      %v3841 = vsel %vm3827, %v3808, %v3514
      %v3843 = vsel %vm3827, %v3810, %v3516
      %v3845 = vsel %vm3827, %v3812, %v3518
      %v3847 = vsel %vm3827, %v3814, %v3520
      %v3849 = vsel %vm3827, %v3816, %v3522
      %v3851 = vsel %vm3827, %v3818, %v3524
      %v3853 = vsel %vm3827, %v3820, %v3526
      %v3855 = vsel %vm3827, %v3822, %v3528
      %v3857 = vsel %vm3827, %v3824, %v3530
      %v3859 = vsel %vm3827, %v3826, %v3532
      %vm3860 = vcmask 261120
      %v3862 = vsel %vm3860, %v3829, %v3582
      %v3864 = vsel %vm3860, %v3831, %v3584
      %v3866 = vsel %vm3860, %v3833, %v3586
      %v3868 = vsel %vm3860, %v3835, %v3588
      %v3870 = vsel %vm3860, %v3837, %v3590
      %v3872 = vsel %vm3860, %v3839, %v3592
      %v3874 = vsel %vm3860, %v3841, %v3594
      %v3876 = vsel %vm3860, %v3843, %v3596
      %v3878 = vsel %vm3860, %v3845, %v3598
      %v3880 = vsel %vm3860, %v3847, %v3600
      %v3882 = vsel %vm3860, %v3849, %v3602
      %v3884 = vsel %vm3860, %v3851, %v3604
      %v3886 = vsel %vm3860, %v3853, %v3606
      %v3888 = vsel %vm3860, %v3855, %v3608
      %v3890 = vsel %vm3860, %v3857, %v3610
      %v3892 = vsel %vm3860, %v3859, %v3612
      %v3893 = vld [vmem:[%s3] sm:$0xf]
      %v3894 = vld [vmem:[%s3 + $0x4] sm:$0xf]
      %v3895 = vld [vmem:[%s3 + $0x8] sm:$0xf]
      %v3896 = vld [vmem:[%s3 + $0xc] sm:$0xf]
      %v3897 = vld [vmem:[%s3 + $0x10] sm:$0x3]
      %v3898 = vld [vmem:[%s4] sm:$0x1]
      %v3900 = vperm.slane %v3898, 0
      %v3907 = vunpack.c.l.b16 %v3893
      %v3908 = vunpack.c.l.b16 %v3894
      %v3909 = vunpack.c.l.b16 %v3895
      %v3910 = vunpack.c.l.b16 %v3896
      %v3911 = vunpack.c.l.b16 %v3897
      %v3912 = vpack.c.b16 %v3908, %v3907
      %v3913 = vpack.c.b16 %v3910, %v3909
      %v3914 = vpack.c.b16 %v3911, %v3911
      %vm3917 = vcmask 293888
      %v3918 = vsel %vm3917, %v3862, 0
      %v3920 = vsel %vm3917, %v3864, 0
      %v3922 = vsel %vm3917, %v3866, 0
      %v3924 = vsel %vm3917, %v3868, 0
      %v3926 = vsel %vm3917, %v3870, 0
      %v3928 = vsel %vm3917, %v3872, 0
      %v3930 = vsel %vm3917, %v3874, 0
      %v3932 = vsel %vm3917, %v3876, 0
      %v3934 = vsel %vm3917, %v3878, 0
      %v3936 = vsel %vm3917, %v3880, 0
      %v3938 = vsel %vm3917, %v3882, 0
      %v3940 = vsel %vm3917, %v3884, 0
      %v3942 = vsel %vm3917, %v3886, 0
      %v3944 = vsel %vm3917, %v3888, 0
      %v3946 = vsel %vm3917, %v3890, 0
      %v3948 = vsel %vm3917, %v3892, 0
      %vm3950 = vcmask 1041408
      %v3952 = vsel %vm3950, %v3914, 0
      %3954 = vmatpush.bf16.msra.mxu0 0
      %3955 = vmatpush.bf16.msra.mxu0 0
      %3956 = vmatpush.bf16.msra.mxu0 0
      %3957 = vmatpush.bf16.msra.mxu0 0
      %3958 = vmatpush.bf16.msra.mxu0 0
      %3959 = vmatpush.bf16.msra.mxu0 %v3952
      %3960 = vmatpush.bf16.msra.mxu0 %v3913
      %3961 = vmatpush.bf16.msra.mxu0 %v3912
      %3962 = vmatmul.bf16.gmra.mxu0 %v3918
      %v3963 = vpop.f32.mrf.mxu0
      %v3964 = vadd.f32 %v3900, %v3963
      %v3965 = vpop.f32.mrf.mxu0
      %v3966 = vadd.f32 %v3900, %v3965
      %3967 = vmatmul.bf16.gmra.mxu0 %v3920
      %v3968 = vpop.f32.mrf.mxu0
      %v3969 = vadd.f32 %v3900, %v3968
      %v3970 = vpop.f32.mrf.mxu0
      %v3971 = vadd.f32 %v3900, %v3970
      %3972 = vmatmul.bf16.gmra.mxu0 %v3922
      %v3973 = vpop.f32.mrf.mxu0
      %v3974 = vadd.f32 %v3900, %v3973
      %v3975 = vpop.f32.mrf.mxu0
      %v3976 = vadd.f32 %v3900, %v3975
      %3977 = vmatmul.bf16.gmra.mxu0 %v3924
      %v3978 = vpop.f32.mrf.mxu0
      %v3979 = vadd.f32 %v3900, %v3978
      %v3980 = vpop.f32.mrf.mxu0
      %v3981 = vadd.f32 %v3900, %v3980
      %3982 = vmatmul.bf16.gmra.mxu0 %v3926
      %v3983 = vpop.f32.mrf.mxu0
      %v3984 = vadd.f32 %v3900, %v3983
      %v3985 = vpop.f32.mrf.mxu0
      %v3986 = vadd.f32 %v3900, %v3985
      %3987 = vmatmul.bf16.gmra.mxu0 %v3928
      %v3988 = vpop.f32.mrf.mxu0
      %v3989 = vadd.f32 %v3900, %v3988
      %v3990 = vpop.f32.mrf.mxu0
      %v3991 = vadd.f32 %v3900, %v3990
      %3992 = vmatmul.bf16.gmra.mxu0 %v3930
      %v3993 = vpop.f32.mrf.mxu0
      %v3994 = vadd.f32 %v3900, %v3993
      %v3995 = vpop.f32.mrf.mxu0
      %v3996 = vadd.f32 %v3900, %v3995
      %3997 = vmatmul.bf16.gmra.mxu0 %v3932
      %v3998 = vpop.f32.mrf.mxu0
      %v3999 = vadd.f32 %v3900, %v3998
      %v4000 = vpop.f32.mrf.mxu0
      %v4001 = vadd.f32 %v3900, %v4000
      %4002 = vmatmul.bf16.gmra.mxu0 %v3934
      %v4003 = vpop.f32.mrf.mxu0
      %v4004 = vadd.f32 %v3900, %v4003
      %v4005 = vpop.f32.mrf.mxu0
      %v4006 = vadd.f32 %v3900, %v4005
      %4007 = vmatmul.bf16.gmra.mxu0 %v3936
      %v4008 = vpop.f32.mrf.mxu0
      %v4009 = vadd.f32 %v3900, %v4008
      %v4010 = vpop.f32.mrf.mxu0
      %v4011 = vadd.f32 %v3900, %v4010
      %4012 = vmatmul.bf16.gmra.mxu0 %v3938
      %v4013 = vpop.f32.mrf.mxu0
      %v4014 = vadd.f32 %v3900, %v4013
      %v4015 = vpop.f32.mrf.mxu0
      %v4016 = vadd.f32 %v3900, %v4015
      %4017 = vmatmul.bf16.gmra.mxu0 %v3940
      %v4018 = vpop.f32.mrf.mxu0
      %v4019 = vadd.f32 %v3900, %v4018
      %v4020 = vpop.f32.mrf.mxu0
      %v4021 = vadd.f32 %v3900, %v4020
      %4022 = vmatmul.bf16.gmra.mxu0 %v3942
      %v4023 = vpop.f32.mrf.mxu0
      %v4024 = vadd.f32 %v3900, %v4023
      %v4025 = vpop.f32.mrf.mxu0
      %v4026 = vadd.f32 %v3900, %v4025
      %4027 = vmatmul.bf16.gmra.mxu0 %v3944
      %v4028 = vpop.f32.mrf.mxu0
      %v4029 = vadd.f32 %v3900, %v4028
      %v4030 = vpop.f32.mrf.mxu0
      %v4031 = vadd.f32 %v3900, %v4030
      %4032 = vmatmul.bf16.gmra.mxu0 %v3946
      %v4033 = vpop.f32.mrf.mxu0
      %v4034 = vadd.f32 %v3900, %v4033
      %v4035 = vpop.f32.mrf.mxu0
      %v4036 = vadd.f32 %v3900, %v4035
      %4037 = vmatmul.bf16.gmra.mxu0 %v3948
      %v4038 = vpop.f32.mrf.mxu0
      %v4039 = vadd.f32 %v3900, %v4038
      %v4040 = vpop.f32.mrf.mxu0
      %v4041 = vadd.f32 %v3900, %v4040
      %4042 = vdwg.mxu0
      %v4043 = vmax.f32 %v3964, 0.0
      %v4044 = vmax.f32 %v3966, 0.0
      %v4045 = vmax.f32 %v3969, 0.0
      %v4046 = vmax.f32 %v3971, 0.0
      %v4047 = vmax.f32 %v3974, 0.0
      %v4048 = vmax.f32 %v3976, 0.0
      %v4049 = vmax.f32 %v3979, 0.0
      %v4050 = vmax.f32 %v3981, 0.0
      %v4051 = vmax.f32 %v3984, 0.0
      %v4052 = vmax.f32 %v3986, 0.0
      %v4053 = vmax.f32 %v3989, 0.0
      %v4054 = vmax.f32 %v3991, 0.0
      %v4055 = vmax.f32 %v3994, 0.0
      %v4056 = vmax.f32 %v3996, 0.0
      %v4057 = vmax.f32 %v3999, 0.0
      %v4058 = vmax.f32 %v4001, 0.0
      %v4059 = vmax.f32 %v4004, 0.0
      %v4060 = vmax.f32 %v4006, 0.0
      %v4061 = vmax.f32 %v4009, 0.0
      %v4062 = vmax.f32 %v4011, 0.0
      %v4063 = vmax.f32 %v4014, 0.0
      %v4064 = vmax.f32 %v4016, 0.0
      %v4065 = vmax.f32 %v4019, 0.0
      %v4066 = vmax.f32 %v4021, 0.0
      %v4067 = vmax.f32 %v4024, 0.0
      %v4068 = vmax.f32 %v4026, 0.0
      %v4069 = vmax.f32 %v4029, 0.0
      %v4070 = vmax.f32 %v4031, 0.0
      %v4071 = vmax.f32 %v4034, 0.0
      %v4072 = vmax.f32 %v4036, 0.0
      %v4073 = vmax.f32 %v4039, 0.0
      %v4074 = vmax.f32 %v4041, 0.0
      %v4075 = vpack.c.bf16 %v4043, %v4043
      %v4076 = vpack.c.bf16 %v4044, %v4044
      %v4077 = vpack.c.bf16 %v4045, %v4045
      %v4078 = vpack.c.bf16 %v4046, %v4046
      %v4079 = vpack.c.bf16 %v4047, %v4047
      %v4080 = vpack.c.bf16 %v4048, %v4048
      %v4081 = vpack.c.bf16 %v4049, %v4049
      %v4082 = vpack.c.bf16 %v4050, %v4050
      %v4083 = vpack.c.bf16 %v4051, %v4051
      %v4084 = vpack.c.bf16 %v4052, %v4052
      %v4085 = vpack.c.bf16 %v4053, %v4053
      %v4086 = vpack.c.bf16 %v4054, %v4054
      %v4087 = vpack.c.bf16 %v4055, %v4055
      %v4088 = vpack.c.bf16 %v4056, %v4056
      %v4089 = vpack.c.bf16 %v4057, %v4057
      %v4090 = vpack.c.bf16 %v4058, %v4058
      %v4091 = vpack.c.bf16 %v4059, %v4059
      %v4092 = vpack.c.bf16 %v4060, %v4060
      %v4093 = vpack.c.bf16 %v4061, %v4061
      %v4094 = vpack.c.bf16 %v4062, %v4062
      %v4095 = vpack.c.bf16 %v4063, %v4063
      %v4096 = vpack.c.bf16 %v4064, %v4064
      %v4097 = vpack.c.bf16 %v4065, %v4065
      %v4098 = vpack.c.bf16 %v4066, %v4066
      %v4099 = vpack.c.bf16 %v4067, %v4067
      %v4100 = vpack.c.bf16 %v4068, %v4068
      %v4101 = vpack.c.bf16 %v4069, %v4069
      %v4102 = vpack.c.bf16 %v4070, %v4070
      %v4103 = vpack.c.bf16 %v4071, %v4071
      %v4104 = vpack.c.bf16 %v4072, %v4072
      %v4105 = vpack.c.bf16 %v4073, %v4073
      %v4106 = vpack.c.bf16 %v4074, %v4074
      %vm4107 = vcmask 60416
      %4108 = vst.msk [vmem:[#allocation3] sm:$0xf] %vm4107, 0
      %4109 = vst.msk [vmem:[#allocation3 + $0x4] sm:$0xf] %vm4107, 0
      %vm4110 = vcmask 57344
      %4111 = vst.msk [vmem:[#allocation3 + $0x8] sm:$0x1] %vm4110, 0
      %4112 = vst.msk [vmem:[#allocation3 + $0xc] sm:$0xf] %vm4107, 0
      %4113 = vst.msk [vmem:[#allocation3 + $0x10] sm:$0xf] %vm4107, 0
      %4114 = vst.msk [vmem:[#allocation3 + $0x14] sm:$0x1] %vm4110, 0
      %4115 = vst.msk [vmem:[#allocation3 + $0x18] sm:$0xf] %vm4107, 0
      %4116 = vst.msk [vmem:[#allocation3 + $0x1c] sm:$0xf] %vm4107, 0
      %4117 = vst.msk [vmem:[#allocation3 + $0x20] sm:$0x1] %vm4110, 0
      %4118 = vst.msk [vmem:[#allocation3 + $0x24] sm:$0xf] %vm4107, 0
      %4119 = vst.msk [vmem:[#allocation3 + $0x28] sm:$0xf] %vm4107, 0
      %4120 = vst.msk [vmem:[#allocation3 + $0x2c] sm:$0x1] %vm4110, 0
      %4121 = vst.msk [vmem:[#allocation3 + $0x30] sm:$0xf] %vm4107, 0
      %4122 = vst.msk [vmem:[#allocation3 + $0x34] sm:$0xf] %vm4107, 0
      %4123 = vst.msk [vmem:[#allocation3 + $0x38] sm:$0x1] %vm4110, 0
      %4124 = vst.msk [vmem:[#allocation3 + $0x3c] sm:$0xf] %vm4107, 0
      %4125 = vst.msk [vmem:[#allocation3 + $0x40] sm:$0xf] %vm4107, 0
      %4126 = vst.msk [vmem:[#allocation3 + $0x44] sm:$0x1] %vm4110, 0
      %4127 = vst.msk [vmem:[#allocation3 + $0x48] sm:$0xf] %vm4107, 0
      %4128 = vst.msk [vmem:[#allocation3 + $0x4c] sm:$0xf] %vm4107, 0
      %4129 = vst.msk [vmem:[#allocation3 + $0x50] sm:$0x1] %vm4110, 0
      %4130 = vst.msk [vmem:[#allocation3 + $0x54] sm:$0xf] %vm4107, 0
      %4131 = vst.msk [vmem:[#allocation3 + $0x58] sm:$0xf] %vm4107, 0
      %4132 = vst.msk [vmem:[#allocation3 + $0x5c] sm:$0x1] %vm4110, 0
      %4133 = vst.msk [vmem:[#allocation3 + $0x60] sm:$0xf] %vm4107, 0
      %4134 = vst.msk [vmem:[#allocation3 + $0x64] sm:$0xf] %vm4107, 0
      %4135 = vst.msk [vmem:[#allocation3 + $0x68] sm:$0x1] %vm4110, 0
      %4136 = vst.msk [vmem:[#allocation3 + $0x6c] sm:$0xf] %vm4107, 0
      %4137 = vst.msk [vmem:[#allocation3 + $0x70] sm:$0xf] %vm4107, 0
      %4138 = vst.msk [vmem:[#allocation3 + $0x74] sm:$0x1] %vm4110, 0
      %4139 = vst.msk [vmem:[#allocation3 + $0x78] sm:$0xf] %vm4107, 0
      %4140 = vst.msk [vmem:[#allocation3 + $0x7c] sm:$0xf] %vm4107, 0
      %4141 = vst.msk [vmem:[#allocation3 + $0x80] sm:$0x1] %vm4110, 0
      %4142 = vst.msk [vmem:[#allocation3 + $0x84] sm:$0xf] %vm4107, 0
      %4143 = vst.msk [vmem:[#allocation3 + $0x88] sm:$0xf] %vm4107, 0
      %4144 = vst.msk [vmem:[#allocation3 + $0x8c] sm:$0x1] %vm4110, 0
      %4145 = vst.msk [vmem:[#allocation3 + $0x90] sm:$0xf] %vm4107, 0
      %4146 = vst.msk [vmem:[#allocation3 + $0x94] sm:$0xf] %vm4107, 0
      %4147 = vst.msk [vmem:[#allocation3 + $0x98] sm:$0x1] %vm4110, 0
      %4148 = vst.msk [vmem:[#allocation3 + $0x9c] sm:$0xf] %vm4107, 0
      %4149 = vst.msk [vmem:[#allocation3 + $0xa0] sm:$0xf] %vm4107, 0
      %4150 = vst.msk [vmem:[#allocation3 + $0xa4] sm:$0x1] %vm4110, 0
      %4151 = vst.msk [vmem:[#allocation3 + $0xa8] sm:$0xf] %vm4107, 0
      %4152 = vst.msk [vmem:[#allocation3 + $0xac] sm:$0xf] %vm4107, 0
      %4153 = vst.msk [vmem:[#allocation3 + $0xb0] sm:$0x1] %vm4110, 0
      %4154 = vst.msk [vmem:[#allocation3 + $0xb4] sm:$0xf] %vm4107, 0
      %4155 = vst.msk [vmem:[#allocation3 + $0xb8] sm:$0xf] %vm4107, 0
      %4156 = vst.msk [vmem:[#allocation3 + $0xbc] sm:$0x1] %vm4110, 0
      %4157 = vst.msk [vmem:[#allocation3 + $0xc0] sm:$0xf] %vm4107, 0
      %4158 = vst.msk [vmem:[#allocation3 + $0xc4] sm:$0xf] %vm4107, 0
      %4159 = vst.msk [vmem:[#allocation3 + $0xc8] sm:$0x1] %vm4110, 0
      %4160 = vst.msk [vmem:[#allocation3 + $0xcc] sm:$0xf] %vm4107, 0
      %4161 = vst.msk [vmem:[#allocation3 + $0xd0] sm:$0xf] %vm4107, 0
      %4162 = vst.msk [vmem:[#allocation3 + $0xd4] sm:$0x1] %vm4110, 0
      %v4164 = vshrl.u32 %v4075, 16
      %v4166 = vrot.slane %v4164, 7
      %v4167 = vshll.u32 %v4075, 16
      %v4169 = vor.u32 %v4166, %v4167
      %v4170 = vrot.slane %v4166, 4
      %v4172 = vshrl.u32 %v4076, 16
      %v4174 = vrot.slane %v4172, 7
      %v4175 = vshll.u32 %v4076, 16
      %v4177 = vor.u32 %v4174, %v4175
      %v4178 = vsel %vm607, %v4170, %v4177
      %v4179 = vrot.slane %v4174, 4
      %v4181 = vshrl.u32 %v4077, 16
      %v4183 = vrot.slane %v4181, 7
      %v4184 = vshll.u32 %v4077, 16
      %v4186 = vor.u32 %v4183, %v4184
      %v4187 = vrot.slane %v4183, 4
      %v4189 = vshrl.u32 %v4078, 16
      %v4191 = vrot.slane %v4189, 7
      %v4192 = vshll.u32 %v4078, 16
      %v4194 = vor.u32 %v4191, %v4192
      %v4195 = vsel %vm607, %v4187, %v4194
      %v4196 = vrot.slane %v4191, 4
      %v4198 = vshrl.u32 %v4079, 16
      %v4200 = vrot.slane %v4198, 7
      %v4201 = vshll.u32 %v4079, 16
      %v4203 = vor.u32 %v4200, %v4201
      %v4204 = vrot.slane %v4200, 4
      %v4206 = vshrl.u32 %v4080, 16
      %v4208 = vrot.slane %v4206, 7
      %v4209 = vshll.u32 %v4080, 16
      %v4211 = vor.u32 %v4208, %v4209
      %v4212 = vsel %vm607, %v4204, %v4211
      %v4213 = vrot.slane %v4208, 4
      %v4215 = vshrl.u32 %v4081, 16
      %v4217 = vrot.slane %v4215, 7
      %v4218 = vshll.u32 %v4081, 16
      %v4220 = vor.u32 %v4217, %v4218
      %v4221 = vrot.slane %v4217, 4
      %v4223 = vshrl.u32 %v4082, 16
      %v4225 = vrot.slane %v4223, 7
      %v4226 = vshll.u32 %v4082, 16
      %v4228 = vor.u32 %v4225, %v4226
      %v4229 = vsel %vm607, %v4221, %v4228
      %v4230 = vrot.slane %v4225, 4
      %v4232 = vshrl.u32 %v4083, 16
      %v4234 = vrot.slane %v4232, 7
      %v4235 = vshll.u32 %v4083, 16
      %v4237 = vor.u32 %v4234, %v4235
      %v4238 = vrot.slane %v4234, 4
      %v4240 = vshrl.u32 %v4084, 16
      %v4242 = vrot.slane %v4240, 7
      %v4243 = vshll.u32 %v4084, 16
      %v4245 = vor.u32 %v4242, %v4243
      %v4246 = vsel %vm607, %v4238, %v4245
      %v4247 = vrot.slane %v4242, 4
      %v4249 = vshrl.u32 %v4085, 16
      %v4251 = vrot.slane %v4249, 7
      %v4252 = vshll.u32 %v4085, 16
      %v4254 = vor.u32 %v4251, %v4252
      %v4255 = vrot.slane %v4251, 4
      %v4257 = vshrl.u32 %v4086, 16
      %v4259 = vrot.slane %v4257, 7
      %v4260 = vshll.u32 %v4086, 16
      %v4262 = vor.u32 %v4259, %v4260
      %v4263 = vsel %vm607, %v4255, %v4262
      %v4264 = vrot.slane %v4259, 4
      %v4266 = vshrl.u32 %v4087, 16
      %v4268 = vrot.slane %v4266, 7
      %v4269 = vshll.u32 %v4087, 16
      %v4271 = vor.u32 %v4268, %v4269
      %v4272 = vrot.slane %v4268, 4
      %v4274 = vshrl.u32 %v4088, 16
      %v4276 = vrot.slane %v4274, 7
      %v4277 = vshll.u32 %v4088, 16
      %v4279 = vor.u32 %v4276, %v4277
      %v4280 = vsel %vm607, %v4272, %v4279
      %v4281 = vrot.slane %v4276, 4
      %v4283 = vshrl.u32 %v4089, 16
      %v4285 = vrot.slane %v4283, 7
      %v4286 = vshll.u32 %v4089, 16
      %v4288 = vor.u32 %v4285, %v4286
      %v4289 = vrot.slane %v4285, 4
      %v4291 = vshrl.u32 %v4090, 16
      %v4293 = vrot.slane %v4291, 7
      %v4294 = vshll.u32 %v4090, 16
      %v4296 = vor.u32 %v4293, %v4294
      %v4297 = vsel %vm607, %v4289, %v4296
      %v4298 = vrot.slane %v4293, 4
      %v4300 = vshrl.u32 %v4091, 16
      %v4302 = vrot.slane %v4300, 7
      %v4303 = vshll.u32 %v4091, 16
      %v4305 = vor.u32 %v4302, %v4303
      %v4306 = vrot.slane %v4302, 4
      %v4308 = vshrl.u32 %v4092, 16
      %v4310 = vrot.slane %v4308, 7
      %v4311 = vshll.u32 %v4092, 16
      %v4313 = vor.u32 %v4310, %v4311
      %v4314 = vsel %vm607, %v4306, %v4313
      %v4315 = vrot.slane %v4310, 4
      %v4317 = vshrl.u32 %v4093, 16
      %v4319 = vrot.slane %v4317, 7
      %v4320 = vshll.u32 %v4093, 16
      %v4322 = vor.u32 %v4319, %v4320
      %v4323 = vrot.slane %v4319, 4
      %v4325 = vshrl.u32 %v4094, 16
      %v4327 = vrot.slane %v4325, 7
      %v4328 = vshll.u32 %v4094, 16
      %v4330 = vor.u32 %v4327, %v4328
      %v4331 = vsel %vm607, %v4323, %v4330
      %v4332 = vrot.slane %v4327, 4
      %v4334 = vshrl.u32 %v4095, 16
      %v4336 = vrot.slane %v4334, 7
      %v4337 = vshll.u32 %v4095, 16
      %v4339 = vor.u32 %v4336, %v4337
      %v4340 = vrot.slane %v4336, 4
      %v4342 = vshrl.u32 %v4096, 16
      %v4344 = vrot.slane %v4342, 7
      %v4345 = vshll.u32 %v4096, 16
      %v4347 = vor.u32 %v4344, %v4345
      %v4348 = vsel %vm607, %v4340, %v4347
      %v4349 = vrot.slane %v4344, 4
      %v4351 = vshrl.u32 %v4097, 16
      %v4353 = vrot.slane %v4351, 7
      %v4354 = vshll.u32 %v4097, 16
      %v4356 = vor.u32 %v4353, %v4354
      %v4357 = vrot.slane %v4353, 4
      %v4359 = vshrl.u32 %v4098, 16
      %v4361 = vrot.slane %v4359, 7
      %v4362 = vshll.u32 %v4098, 16
      %v4364 = vor.u32 %v4361, %v4362
      %v4365 = vsel %vm607, %v4357, %v4364
      %v4366 = vrot.slane %v4361, 4
      %v4368 = vshrl.u32 %v4099, 16
      %v4370 = vrot.slane %v4368, 7
      %v4371 = vshll.u32 %v4099, 16
      %v4373 = vor.u32 %v4370, %v4371
      %v4374 = vrot.slane %v4370, 4
      %v4376 = vshrl.u32 %v4100, 16
      %v4378 = vrot.slane %v4376, 7
      %v4379 = vshll.u32 %v4100, 16
      %v4381 = vor.u32 %v4378, %v4379
      %v4382 = vsel %vm607, %v4374, %v4381
      %v4383 = vrot.slane %v4378, 4
      %v4385 = vshrl.u32 %v4101, 16
      %v4387 = vrot.slane %v4385, 7
      %v4388 = vshll.u32 %v4101, 16
      %v4390 = vor.u32 %v4387, %v4388
      %v4391 = vrot.slane %v4387, 4
      %v4393 = vshrl.u32 %v4102, 16
      %v4395 = vrot.slane %v4393, 7
      %v4396 = vshll.u32 %v4102, 16
      %v4398 = vor.u32 %v4395, %v4396
      %v4399 = vsel %vm607, %v4391, %v4398
      %v4400 = vrot.slane %v4395, 4
      %v4402 = vshrl.u32 %v4103, 16
      %v4404 = vrot.slane %v4402, 7
      %v4405 = vshll.u32 %v4103, 16
      %v4407 = vor.u32 %v4404, %v4405
      %v4408 = vrot.slane %v4404, 4
      %v4410 = vshrl.u32 %v4104, 16
      %v4412 = vrot.slane %v4410, 7
      %v4413 = vshll.u32 %v4104, 16
      %v4415 = vor.u32 %v4412, %v4413
      %v4416 = vsel %vm607, %v4408, %v4415
      %v4417 = vrot.slane %v4412, 4
      %v4419 = vshrl.u32 %v4105, 16
      %v4421 = vrot.slane %v4419, 7
      %v4422 = vshll.u32 %v4105, 16
      %v4424 = vor.u32 %v4421, %v4422
      %v4425 = vrot.slane %v4421, 4
      %v4427 = vshrl.u32 %v4106, 16
      %v4429 = vrot.slane %v4427, 7
      %v4430 = vshll.u32 %v4106, 16
      %v4432 = vor.u32 %v4429, %v4430
      %v4433 = vsel %vm607, %v4425, %v4432
      %v4434 = vrot.slane %v4429, 4
      %s4483 = scalar_lea.vmem [#allocation3], 12
      %vm4484 = vcmask 60416
      %vm4485 = vmand %vm4484, %vm930
      %v4486 = vld [vmem:[%s4483] sm:$0xf]
      %v4487 = vsel %vm4485, %v4169, %v4486
      %4488 = vst [vmem:[%s4483] sm:$0xf] %v4487
      %4489 = vst.msk [vmem:[%s4483 + $0x4] sm:$0xf] %vm4107, %v4178
      %vm4490 = vcmask 57344
      %vm4491 = vmand %vm4490, %vm605
      %v4492 = vld [vmem:[%s4483 + $0x8] sm:$0x1]
      %v4493 = vsel %vm4491, %v4179, %v4492
      %4494 = vst [vmem:[%s4483 + $0x8] sm:$0x1] %v4493
      %v4495 = vld [vmem:[%s4483 + $0xc] sm:$0xf]
      %v4496 = vsel %vm4485, %v4186, %v4495
      %4497 = vst [vmem:[%s4483 + $0xc] sm:$0xf] %v4496
      %4498 = vst.msk [vmem:[%s4483 + $0x10] sm:$0xf] %vm4107, %v4195
      %v4499 = vld [vmem:[%s4483 + $0x14] sm:$0x1]
      %v4500 = vsel %vm4491, %v4196, %v4499
      %4501 = vst [vmem:[%s4483 + $0x14] sm:$0x1] %v4500
      %v4502 = vld [vmem:[%s4483 + $0x18] sm:$0xf]
      %v4503 = vsel %vm4485, %v4203, %v4502
      %4504 = vst [vmem:[%s4483 + $0x18] sm:$0xf] %v4503
      %4505 = vst.msk [vmem:[%s4483 + $0x1c] sm:$0xf] %vm4107, %v4212
      %v4506 = vld [vmem:[%s4483 + $0x20] sm:$0x1]
      %v4507 = vsel %vm4491, %v4213, %v4506
      %4508 = vst [vmem:[%s4483 + $0x20] sm:$0x1] %v4507
      %v4509 = vld [vmem:[%s4483 + $0x24] sm:$0xf]
      %v4510 = vsel %vm4485, %v4220, %v4509
      %4511 = vst [vmem:[%s4483 + $0x24] sm:$0xf] %v4510
      %4512 = vst.msk [vmem:[%s4483 + $0x28] sm:$0xf] %vm4107, %v4229
      %v4513 = vld [vmem:[%s4483 + $0x2c] sm:$0x1]
      %v4514 = vsel %vm4491, %v4230, %v4513
      %4515 = vst [vmem:[%s4483 + $0x2c] sm:$0x1] %v4514
      %v4516 = vld [vmem:[%s4483 + $0x30] sm:$0xf]
      %v4517 = vsel %vm4485, %v4237, %v4516
      %4518 = vst [vmem:[%s4483 + $0x30] sm:$0xf] %v4517
      %4519 = vst.msk [vmem:[%s4483 + $0x34] sm:$0xf] %vm4107, %v4246
      %v4520 = vld [vmem:[%s4483 + $0x38] sm:$0x1]
      %v4521 = vsel %vm4491, %v4247, %v4520
      %4522 = vst [vmem:[%s4483 + $0x38] sm:$0x1] %v4521
      %v4523 = vld [vmem:[%s4483 + $0x3c] sm:$0xf]
      %v4524 = vsel %vm4485, %v4254, %v4523
      %4525 = vst [vmem:[%s4483 + $0x3c] sm:$0xf] %v4524
      %4526 = vst.msk [vmem:[%s4483 + $0x40] sm:$0xf] %vm4107, %v4263
      %v4527 = vld [vmem:[%s4483 + $0x44] sm:$0x1]
      %v4528 = vsel %vm4491, %v4264, %v4527
      %4529 = vst [vmem:[%s4483 + $0x44] sm:$0x1] %v4528
      %v4530 = vld [vmem:[%s4483 + $0x48] sm:$0xf]
      %v4531 = vsel %vm4485, %v4271, %v4530
      %4532 = vst [vmem:[%s4483 + $0x48] sm:$0xf] %v4531
      %4533 = vst.msk [vmem:[%s4483 + $0x4c] sm:$0xf] %vm4107, %v4280
      %v4534 = vld [vmem:[%s4483 + $0x50] sm:$0x1]
      %v4535 = vsel %vm4491, %v4281, %v4534
      %4536 = vst [vmem:[%s4483 + $0x50] sm:$0x1] %v4535
      %v4537 = vld [vmem:[%s4483 + $0x54] sm:$0xf]
      %v4538 = vsel %vm4485, %v4288, %v4537
      %4539 = vst [vmem:[%s4483 + $0x54] sm:$0xf] %v4538
      %4540 = vst.msk [vmem:[%s4483 + $0x58] sm:$0xf] %vm4107, %v4297
      %v4541 = vld [vmem:[%s4483 + $0x5c] sm:$0x1]
      %v4542 = vsel %vm4491, %v4298, %v4541
      %4543 = vst [vmem:[%s4483 + $0x5c] sm:$0x1] %v4542
      %v4544 = vld [vmem:[%s4483 + $0x60] sm:$0xf]
      %v4545 = vsel %vm4485, %v4305, %v4544
      %4546 = vst [vmem:[%s4483 + $0x60] sm:$0xf] %v4545
      %4547 = vst.msk [vmem:[%s4483 + $0x64] sm:$0xf] %vm4107, %v4314
      %v4548 = vld [vmem:[%s4483 + $0x68] sm:$0x1]
      %v4549 = vsel %vm4491, %v4315, %v4548
      %4550 = vst [vmem:[%s4483 + $0x68] sm:$0x1] %v4549
      %v4551 = vld [vmem:[%s4483 + $0x6c] sm:$0xf]
      %v4552 = vsel %vm4485, %v4322, %v4551
      %4553 = vst [vmem:[%s4483 + $0x6c] sm:$0xf] %v4552
      %4554 = vst.msk [vmem:[%s4483 + $0x70] sm:$0xf] %vm4107, %v4331
      %v4555 = vld [vmem:[%s4483 + $0x74] sm:$0x1]
      %v4556 = vsel %vm4491, %v4332, %v4555
      %4557 = vst [vmem:[%s4483 + $0x74] sm:$0x1] %v4556
      %v4558 = vld [vmem:[%s4483 + $0x78] sm:$0xf]
      %v4559 = vsel %vm4485, %v4339, %v4558
      %4560 = vst [vmem:[%s4483 + $0x78] sm:$0xf] %v4559
      %4561 = vst.msk [vmem:[%s4483 + $0x7c] sm:$0xf] %vm4107, %v4348
      %v4562 = vld [vmem:[%s4483 + $0x80] sm:$0x1]
      %v4563 = vsel %vm4491, %v4349, %v4562
      %4564 = vst [vmem:[%s4483 + $0x80] sm:$0x1] %v4563
      %v4565 = vld [vmem:[%s4483 + $0x84] sm:$0xf]
      %v4566 = vsel %vm4485, %v4356, %v4565
      %4567 = vst [vmem:[%s4483 + $0x84] sm:$0xf] %v4566
      %4568 = vst.msk [vmem:[%s4483 + $0x88] sm:$0xf] %vm4107, %v4365
      %v4569 = vld [vmem:[%s4483 + $0x8c] sm:$0x1]
      %v4570 = vsel %vm4491, %v4366, %v4569
      %4571 = vst [vmem:[%s4483 + $0x8c] sm:$0x1] %v4570
      %v4572 = vld [vmem:[%s4483 + $0x90] sm:$0xf]
      %v4573 = vsel %vm4485, %v4373, %v4572
      %4574 = vst [vmem:[%s4483 + $0x90] sm:$0xf] %v4573
      %4575 = vst.msk [vmem:[%s4483 + $0x94] sm:$0xf] %vm4107, %v4382
      %v4576 = vld [vmem:[%s4483 + $0x98] sm:$0x1]
      %v4577 = vsel %vm4491, %v4383, %v4576
      %4578 = vst [vmem:[%s4483 + $0x98] sm:$0x1] %v4577
      %v4579 = vld [vmem:[%s4483 + $0x9c] sm:$0xf]
      %v4580 = vsel %vm4485, %v4390, %v4579
      %4581 = vst [vmem:[%s4483 + $0x9c] sm:$0xf] %v4580
      %4582 = vst.msk [vmem:[%s4483 + $0xa0] sm:$0xf] %vm4107, %v4399
      %v4583 = vld [vmem:[%s4483 + $0xa4] sm:$0x1]
      %v4584 = vsel %vm4491, %v4400, %v4583
      %4585 = vst [vmem:[%s4483 + $0xa4] sm:$0x1] %v4584
      %v4586 = vld [vmem:[%s4483 + $0xa8] sm:$0xf]
      %v4587 = vsel %vm4485, %v4407, %v4586
      %4588 = vst [vmem:[%s4483 + $0xa8] sm:$0xf] %v4587
      %4589 = vst.msk [vmem:[%s4483 + $0xac] sm:$0xf] %vm4107, %v4416
      %v4590 = vld [vmem:[%s4483 + $0xb0] sm:$0x1]
      %v4591 = vsel %vm4491, %v4417, %v4590
      %4592 = vst [vmem:[%s4483 + $0xb0] sm:$0x1] %v4591
      %v4593 = vld [vmem:[%s4483 + $0xb4] sm:$0xf]
      %v4594 = vsel %vm4485, %v4424, %v4593
      %4595 = vst [vmem:[%s4483 + $0xb4] sm:$0xf] %v4594
      %4596 = vst.msk [vmem:[%s4483 + $0xb8] sm:$0xf] %vm4107, %v4433
      %v4597 = vld [vmem:[%s4483 + $0xbc] sm:$0x1]
      %v4598 = vsel %vm4491, %v4434, %v4597
      %4599 = vst [vmem:[%s4483 + $0xbc] sm:$0x1] %v4598
      %v4600 = vld [vmem:[#allocation3] sm:$0xf]
      %v4601 = vld [vmem:[#allocation3 + $0x4] sm:$0xf]
      %v4602 = vld [vmem:[#allocation3 + $0xc] sm:$0xf]
      %v4603 = vld [vmem:[#allocation3 + $0x10] sm:$0xf]
      %v4604 = vld [vmem:[#allocation3 + $0x18] sm:$0xf]
      %v4605 = vld [vmem:[#allocation3 + $0x1c] sm:$0xf]
      %v4606 = vld [vmem:[#allocation3 + $0x24] sm:$0xf]
      %v4607 = vld [vmem:[#allocation3 + $0x28] sm:$0xf]
      %v4608 = vld [vmem:[#allocation3 + $0x30] sm:$0xf]
      %v4609 = vld [vmem:[#allocation3 + $0x34] sm:$0xf]
      %v4610 = vld [vmem:[#allocation3 + $0x3c] sm:$0xf]
      %v4611 = vld [vmem:[#allocation3 + $0x40] sm:$0xf]
      %v4612 = vld [vmem:[#allocation3 + $0x48] sm:$0xf]
      %v4613 = vld [vmem:[#allocation3 + $0x4c] sm:$0xf]
      %v4614 = vld [vmem:[#allocation3 + $0x54] sm:$0xf]
      %v4615 = vld [vmem:[#allocation3 + $0x58] sm:$0xf]
      %v4616 = vld [vmem:[#allocation3 + $0x60] sm:$0xf]
      %v4617 = vld [vmem:[#allocation3 + $0x64] sm:$0xf]
      %v4618 = vld [vmem:[#allocation3 + $0x6c] sm:$0xf]
      %v4619 = vld [vmem:[#allocation3 + $0x70] sm:$0xf]
      %v4620 = vld [vmem:[#allocation3 + $0x78] sm:$0xf]
      %v4621 = vld [vmem:[#allocation3 + $0x7c] sm:$0xf]
      %v4622 = vld [vmem:[#allocation3 + $0x84] sm:$0xf]
      %v4623 = vld [vmem:[#allocation3 + $0x88] sm:$0xf]
      %v4624 = vld [vmem:[#allocation3 + $0x90] sm:$0xf]
      %v4625 = vld [vmem:[#allocation3 + $0x94] sm:$0xf]
      %v4626 = vld [vmem:[#allocation3 + $0x9c] sm:$0xf]
      %v4627 = vld [vmem:[#allocation3 + $0xa0] sm:$0xf]
      %v4628 = vld [vmem:[#allocation3 + $0xa8] sm:$0xf]
      %v4629 = vld [vmem:[#allocation3 + $0xac] sm:$0xf]
      %v4630 = vld [vmem:[#allocation3 + $0xb4] sm:$0xf]
      %v4631 = vld [vmem:[#allocation3 + $0xb8] sm:$0xf]
      %v4632 = vld [vmem:[#allocation3 + $0x8] sm:$0x1]
      %v4633 = vld [vmem:[#allocation3 + $0x14] sm:$0x1]
      %v4634 = vld [vmem:[#allocation3 + $0x20] sm:$0x1]
      %v4635 = vld [vmem:[#allocation3 + $0x2c] sm:$0x1]
      %v4636 = vld [vmem:[#allocation3 + $0x38] sm:$0x1]
      %v4637 = vld [vmem:[#allocation3 + $0x44] sm:$0x1]
      %v4638 = vld [vmem:[#allocation3 + $0x50] sm:$0x1]
      %v4639 = vld [vmem:[#allocation3 + $0x5c] sm:$0x1]
      %v4640 = vld [vmem:[#allocation3 + $0x68] sm:$0x1]
      %v4641 = vld [vmem:[#allocation3 + $0x74] sm:$0x1]
      %v4642 = vld [vmem:[#allocation3 + $0x80] sm:$0x1]
      %v4643 = vld [vmem:[#allocation3 + $0x8c] sm:$0x1]
      %v4644 = vld [vmem:[#allocation3 + $0x98] sm:$0x1]
      %v4645 = vld [vmem:[#allocation3 + $0xa4] sm:$0x1]
      %v4646 = vld [vmem:[#allocation3 + $0xb0] sm:$0x1]
      %v4647 = vld [vmem:[#allocation3 + $0xbc] sm:$0x1]
      %v4649 = vshrl.u32 %v4600, 16
      %v4651 = vrot.slane %v4649, 4
      %v4652 = vshll.u32 %v4600, 16
      %v4654 = vrot.slane %v4652, 5
      %v4655 = vor.u32 %v4651, %v4654
      %v4656 = vrot.slane %v4655, 4
      %v4658 = vshll.u32 %v4601, 16
      %v4660 = vrot.slane %v4658, 5
      %v4661 = vsel %vm1096, %v4656, %v4660
      %v4662 = vshrl.u32 %v4601, 16
      %v4664 = vrot.slane %v4662, 4
      %v4665 = vor.u32 %v4664, %v4660
      %v4666 = vrot.slane %v4665, 4
      %v4668 = vshll.u32 %v4632, 16
      %v4670 = vrot.slane %v4668, 5
      %v4671 = vsel %vm1096, %v4666, %v4670
      %v4673 = vshrl.u32 %v4602, 16
      %v4675 = vrot.slane %v4673, 4
      %v4676 = vshll.u32 %v4602, 16
      %v4678 = vrot.slane %v4676, 5
      %v4679 = vor.u32 %v4675, %v4678
      %v4680 = vrot.slane %v4679, 4
      %v4682 = vshll.u32 %v4603, 16
      %v4684 = vrot.slane %v4682, 5
      %v4685 = vsel %vm1096, %v4680, %v4684
      %v4686 = vshrl.u32 %v4603, 16
      %v4688 = vrot.slane %v4686, 4
      %v4689 = vor.u32 %v4688, %v4684
      %v4690 = vrot.slane %v4689, 4
      %v4692 = vshll.u32 %v4633, 16
      %v4694 = vrot.slane %v4692, 5
      %v4695 = vsel %vm1096, %v4690, %v4694
      %v4697 = vshrl.u32 %v4604, 16
      %v4699 = vrot.slane %v4697, 4
      %v4700 = vshll.u32 %v4604, 16
      %v4702 = vrot.slane %v4700, 5
      %v4703 = vor.u32 %v4699, %v4702
      %v4704 = vrot.slane %v4703, 4
      %v4706 = vshll.u32 %v4605, 16
      %v4708 = vrot.slane %v4706, 5
      %v4709 = vsel %vm1096, %v4704, %v4708
      %v4710 = vshrl.u32 %v4605, 16
      %v4712 = vrot.slane %v4710, 4
      %v4713 = vor.u32 %v4712, %v4708
      %v4714 = vrot.slane %v4713, 4
      %v4716 = vshll.u32 %v4634, 16
      %v4718 = vrot.slane %v4716, 5
      %v4719 = vsel %vm1096, %v4714, %v4718
      %v4721 = vshrl.u32 %v4606, 16
      %v4723 = vrot.slane %v4721, 4
      %v4724 = vshll.u32 %v4606, 16
      %v4726 = vrot.slane %v4724, 5
      %v4727 = vor.u32 %v4723, %v4726
      %v4728 = vrot.slane %v4727, 4
      %v4730 = vshll.u32 %v4607, 16
      %v4732 = vrot.slane %v4730, 5
      %v4733 = vsel %vm1096, %v4728, %v4732
      %v4734 = vshrl.u32 %v4607, 16
      %v4736 = vrot.slane %v4734, 4
      %v4737 = vor.u32 %v4736, %v4732
      %v4738 = vrot.slane %v4737, 4
      %v4740 = vshll.u32 %v4635, 16
      %v4742 = vrot.slane %v4740, 5
      %v4743 = vsel %vm1096, %v4738, %v4742
      %v4745 = vshrl.u32 %v4608, 16
      %v4747 = vrot.slane %v4745, 4
      %v4748 = vshll.u32 %v4608, 16
      %v4750 = vrot.slane %v4748, 5
      %v4751 = vor.u32 %v4747, %v4750
      %v4752 = vrot.slane %v4751, 4
      %v4754 = vshll.u32 %v4609, 16
      %v4756 = vrot.slane %v4754, 5
      %v4757 = vsel %vm1096, %v4752, %v4756
      %v4758 = vshrl.u32 %v4609, 16
      %v4760 = vrot.slane %v4758, 4
      %v4761 = vor.u32 %v4760, %v4756
      %v4762 = vrot.slane %v4761, 4
      %v4764 = vshll.u32 %v4636, 16
      %v4766 = vrot.slane %v4764, 5
      %v4767 = vsel %vm1096, %v4762, %v4766
      %v4769 = vshrl.u32 %v4610, 16
      %v4771 = vrot.slane %v4769, 4
      %v4772 = vshll.u32 %v4610, 16
      %v4774 = vrot.slane %v4772, 5
      %v4775 = vor.u32 %v4771, %v4774
      %v4776 = vrot.slane %v4775, 4
      %v4778 = vshll.u32 %v4611, 16
      %v4780 = vrot.slane %v4778, 5
      %v4781 = vsel %vm1096, %v4776, %v4780
      %v4782 = vshrl.u32 %v4611, 16
      %v4784 = vrot.slane %v4782, 4
      %v4785 = vor.u32 %v4784, %v4780
      %v4786 = vrot.slane %v4785, 4
      %v4788 = vshll.u32 %v4637, 16
      %v4790 = vrot.slane %v4788, 5
      %v4791 = vsel %vm1096, %v4786, %v4790
      %v4793 = vshrl.u32 %v4612, 16
      %v4795 = vrot.slane %v4793, 4
      %v4796 = vshll.u32 %v4612, 16
      %v4798 = vrot.slane %v4796, 5
      %v4799 = vor.u32 %v4795, %v4798
      %v4800 = vrot.slane %v4799, 4
      %v4802 = vshll.u32 %v4613, 16
      %v4804 = vrot.slane %v4802, 5
      %v4805 = vsel %vm1096, %v4800, %v4804
      %v4806 = vshrl.u32 %v4613, 16
      %v4808 = vrot.slane %v4806, 4
      %v4809 = vor.u32 %v4808, %v4804
      %v4810 = vrot.slane %v4809, 4
      %v4812 = vshll.u32 %v4638, 16
      %v4814 = vrot.slane %v4812, 5
      %v4815 = vsel %vm1096, %v4810, %v4814
      %v4817 = vshrl.u32 %v4614, 16
      %v4819 = vrot.slane %v4817, 4
      %v4820 = vshll.u32 %v4614, 16
      %v4822 = vrot.slane %v4820, 5
      %v4823 = vor.u32 %v4819, %v4822
      %v4824 = vrot.slane %v4823, 4
      %v4826 = vshll.u32 %v4615, 16
      %v4828 = vrot.slane %v4826, 5
      %v4829 = vsel %vm1096, %v4824, %v4828
      %v4830 = vshrl.u32 %v4615, 16
      %v4832 = vrot.slane %v4830, 4
      %v4833 = vor.u32 %v4832, %v4828
      %v4834 = vrot.slane %v4833, 4
      %v4836 = vshll.u32 %v4639, 16
      %v4838 = vrot.slane %v4836, 5
      %v4839 = vsel %vm1096, %v4834, %v4838
      %v4841 = vshrl.u32 %v4616, 16
      %v4843 = vrot.slane %v4841, 4
      %v4844 = vshll.u32 %v4616, 16
      %v4846 = vrot.slane %v4844, 5
      %v4847 = vor.u32 %v4843, %v4846
      %v4848 = vrot.slane %v4847, 4
      %v4850 = vshll.u32 %v4617, 16
      %v4852 = vrot.slane %v4850, 5
      %v4853 = vsel %vm1096, %v4848, %v4852
      %v4854 = vshrl.u32 %v4617, 16
      %v4856 = vrot.slane %v4854, 4
      %v4857 = vor.u32 %v4856, %v4852
      %v4858 = vrot.slane %v4857, 4
      %v4860 = vshll.u32 %v4640, 16
      %v4862 = vrot.slane %v4860, 5
      %v4863 = vsel %vm1096, %v4858, %v4862
      %v4865 = vshrl.u32 %v4618, 16
      %v4867 = vrot.slane %v4865, 4
      %v4868 = vshll.u32 %v4618, 16
      %v4870 = vrot.slane %v4868, 5
      %v4871 = vor.u32 %v4867, %v4870
      %v4872 = vrot.slane %v4871, 4
      %v4874 = vshll.u32 %v4619, 16
      %v4876 = vrot.slane %v4874, 5
      %v4877 = vsel %vm1096, %v4872, %v4876
      %v4878 = vshrl.u32 %v4619, 16
      %v4880 = vrot.slane %v4878, 4
      %v4881 = vor.u32 %v4880, %v4876
      %v4882 = vrot.slane %v4881, 4
      %v4884 = vshll.u32 %v4641, 16
      %v4886 = vrot.slane %v4884, 5
      %v4887 = vsel %vm1096, %v4882, %v4886
      %v4889 = vshrl.u32 %v4620, 16
      %v4891 = vrot.slane %v4889, 4
      %v4892 = vshll.u32 %v4620, 16
      %v4894 = vrot.slane %v4892, 5
      %v4895 = vor.u32 %v4891, %v4894
      %v4896 = vrot.slane %v4895, 4
      %v4898 = vshll.u32 %v4621, 16
      %v4900 = vrot.slane %v4898, 5
      %v4901 = vsel %vm1096, %v4896, %v4900
      %v4902 = vshrl.u32 %v4621, 16
      %v4904 = vrot.slane %v4902, 4
      %v4905 = vor.u32 %v4904, %v4900
      %v4906 = vrot.slane %v4905, 4
      %v4908 = vshll.u32 %v4642, 16
      %v4910 = vrot.slane %v4908, 5
      %v4911 = vsel %vm1096, %v4906, %v4910
      %v4913 = vshrl.u32 %v4622, 16
      %v4915 = vrot.slane %v4913, 4
      %v4916 = vshll.u32 %v4622, 16
      %v4918 = vrot.slane %v4916, 5
      %v4919 = vor.u32 %v4915, %v4918
      %v4920 = vrot.slane %v4919, 4
      %v4922 = vshll.u32 %v4623, 16
      %v4924 = vrot.slane %v4922, 5
      %v4925 = vsel %vm1096, %v4920, %v4924
      %v4926 = vshrl.u32 %v4623, 16
      %v4928 = vrot.slane %v4926, 4
      %v4929 = vor.u32 %v4928, %v4924
      %v4930 = vrot.slane %v4929, 4
      %v4932 = vshll.u32 %v4643, 16
      %v4934 = vrot.slane %v4932, 5
      %v4935 = vsel %vm1096, %v4930, %v4934
      %v4937 = vshrl.u32 %v4624, 16
      %v4939 = vrot.slane %v4937, 4
      %v4940 = vshll.u32 %v4624, 16
      %v4942 = vrot.slane %v4940, 5
      %v4943 = vor.u32 %v4939, %v4942
      %v4944 = vrot.slane %v4943, 4
      %v4946 = vshll.u32 %v4625, 16
      %v4948 = vrot.slane %v4946, 5
      %v4949 = vsel %vm1096, %v4944, %v4948
      %v4950 = vshrl.u32 %v4625, 16
      %v4952 = vrot.slane %v4950, 4
      %v4953 = vor.u32 %v4952, %v4948
      %v4954 = vrot.slane %v4953, 4
      %v4956 = vshll.u32 %v4644, 16
      %v4958 = vrot.slane %v4956, 5
      %v4959 = vsel %vm1096, %v4954, %v4958
      %v4961 = vshrl.u32 %v4626, 16
      %v4963 = vrot.slane %v4961, 4
      %v4964 = vshll.u32 %v4626, 16
      %v4966 = vrot.slane %v4964, 5
      %v4967 = vor.u32 %v4963, %v4966
      %v4968 = vrot.slane %v4967, 4
      %v4970 = vshll.u32 %v4627, 16
      %v4972 = vrot.slane %v4970, 5
      %v4973 = vsel %vm1096, %v4968, %v4972
      %v4974 = vshrl.u32 %v4627, 16
      %v4976 = vrot.slane %v4974, 4
      %v4977 = vor.u32 %v4976, %v4972
      %v4978 = vrot.slane %v4977, 4
      %v4980 = vshll.u32 %v4645, 16
      %v4982 = vrot.slane %v4980, 5
      %v4983 = vsel %vm1096, %v4978, %v4982
      %v4985 = vshrl.u32 %v4628, 16
      %v4987 = vrot.slane %v4985, 4
      %v4988 = vshll.u32 %v4628, 16
      %v4990 = vrot.slane %v4988, 5
      %v4991 = vor.u32 %v4987, %v4990
      %v4992 = vrot.slane %v4991, 4
      %v4994 = vshll.u32 %v4629, 16
      %v4996 = vrot.slane %v4994, 5
      %v4997 = vsel %vm1096, %v4992, %v4996
      %v4998 = vshrl.u32 %v4629, 16
      %v5000 = vrot.slane %v4998, 4
      %v5001 = vor.u32 %v5000, %v4996
      %v5002 = vrot.slane %v5001, 4
      %v5004 = vshll.u32 %v4646, 16
      %v5006 = vrot.slane %v5004, 5
      %v5007 = vsel %vm1096, %v5002, %v5006
      %v5009 = vshrl.u32 %v4630, 16
      %v5011 = vrot.slane %v5009, 4
      %v5012 = vshll.u32 %v4630, 16
      %v5014 = vrot.slane %v5012, 5
      %v5015 = vor.u32 %v5011, %v5014
      %v5016 = vrot.slane %v5015, 4
      %v5018 = vshll.u32 %v4631, 16
      %v5020 = vrot.slane %v5018, 5
      %v5021 = vsel %vm1096, %v5016, %v5020
      %v5022 = vshrl.u32 %v4631, 16
      %v5024 = vrot.slane %v5022, 4
      %v5025 = vor.u32 %v5024, %v5020
      %v5026 = vrot.slane %v5025, 4
      %v5028 = vshll.u32 %v4647, 16
      %v5030 = vrot.slane %v5028, 5
      %v5031 = vsel %vm1096, %v5026, %v5030
      %v5032 = vld [vmem:[#allocation3] sm:$0xe]
      %v5033 = vld [vmem:[#allocation3 + $0xc] sm:$0xe]
      %v5034 = vld [vmem:[#allocation3 + $0x18] sm:$0xe]
      %v5035 = vld [vmem:[#allocation3 + $0x24] sm:$0xe]
      %v5036 = vld [vmem:[#allocation3 + $0x30] sm:$0xe]
      %v5037 = vld [vmem:[#allocation3 + $0x3c] sm:$0xe]
      %v5038 = vld [vmem:[#allocation3 + $0x48] sm:$0xe]
      %v5039 = vld [vmem:[#allocation3 + $0x54] sm:$0xe]
      %v5040 = vld [vmem:[#allocation3 + $0x60] sm:$0xe]
      %v5041 = vld [vmem:[#allocation3 + $0x6c] sm:$0xe]
      %v5042 = vld [vmem:[#allocation3 + $0x78] sm:$0xe]
      %v5043 = vld [vmem:[#allocation3 + $0x84] sm:$0xe]
      %v5044 = vld [vmem:[#allocation3 + $0x90] sm:$0xe]
      %v5045 = vld [vmem:[#allocation3 + $0x9c] sm:$0xe]
      %v5046 = vld [vmem:[#allocation3 + $0xa8] sm:$0xe]
      %v5047 = vld [vmem:[#allocation3 + $0xb4] sm:$0xe]
      %v5096 = vrot.slane %v5032, 5
      %v5097 = vrot.slane %v5096, 4
      %v5098 = vrot.slane %v4601, 5
      %v5099 = vsel %vm1547, %v5097, %v5098
      %v5100 = vrot.slane %v5098, 4
      %v5101 = vrot.slane %v4632, 5
      %v5102 = vsel %vm1547, %v5100, %v5101
      %v5103 = vrot.slane %v5033, 5
      %v5104 = vrot.slane %v5103, 4
      %v5105 = vrot.slane %v4603, 5
      %v5106 = vsel %vm1547, %v5104, %v5105
      %v5107 = vrot.slane %v5105, 4
      %v5108 = vrot.slane %v4633, 5
      %v5109 = vsel %vm1547, %v5107, %v5108
      %v5110 = vrot.slane %v5034, 5
      %v5111 = vrot.slane %v5110, 4
      %v5112 = vrot.slane %v4605, 5
      %v5113 = vsel %vm1547, %v5111, %v5112
      %v5114 = vrot.slane %v5112, 4
      %v5115 = vrot.slane %v4634, 5
      %v5116 = vsel %vm1547, %v5114, %v5115
      %v5117 = vrot.slane %v5035, 5
      %v5118 = vrot.slane %v5117, 4
      %v5119 = vrot.slane %v4607, 5
      %v5120 = vsel %vm1547, %v5118, %v5119
      %v5121 = vrot.slane %v5119, 4
      %v5122 = vrot.slane %v4635, 5
      %v5123 = vsel %vm1547, %v5121, %v5122
      %v5124 = vrot.slane %v5036, 5
      %v5125 = vrot.slane %v5124, 4
      %v5126 = vrot.slane %v4609, 5
      %v5127 = vsel %vm1547, %v5125, %v5126
      %v5128 = vrot.slane %v5126, 4
      %v5129 = vrot.slane %v4636, 5
      %v5130 = vsel %vm1547, %v5128, %v5129
      %v5131 = vrot.slane %v5037, 5
      %v5132 = vrot.slane %v5131, 4
      %v5133 = vrot.slane %v4611, 5
      %v5134 = vsel %vm1547, %v5132, %v5133
      %v5135 = vrot.slane %v5133, 4
      %v5136 = vrot.slane %v4637, 5
      %v5137 = vsel %vm1547, %v5135, %v5136
      %v5138 = vrot.slane %v5038, 5
      %v5139 = vrot.slane %v5138, 4
      %v5140 = vrot.slane %v4613, 5
      %v5141 = vsel %vm1547, %v5139, %v5140
      %v5142 = vrot.slane %v5140, 4
      %v5143 = vrot.slane %v4638, 5
      %v5144 = vsel %vm1547, %v5142, %v5143
      %v5145 = vrot.slane %v5039, 5
      %v5146 = vrot.slane %v5145, 4
      %v5147 = vrot.slane %v4615, 5
      %v5148 = vsel %vm1547, %v5146, %v5147
      %v5149 = vrot.slane %v5147, 4
      %v5150 = vrot.slane %v4639, 5
      %v5151 = vsel %vm1547, %v5149, %v5150
      %v5152 = vrot.slane %v5040, 5
      %v5153 = vrot.slane %v5152, 4
      %v5154 = vrot.slane %v4617, 5
      %v5155 = vsel %vm1547, %v5153, %v5154
      %v5156 = vrot.slane %v5154, 4
      %v5157 = vrot.slane %v4640, 5
      %v5158 = vsel %vm1547, %v5156, %v5157
      %v5159 = vrot.slane %v5041, 5
      %v5160 = vrot.slane %v5159, 4
      %v5161 = vrot.slane %v4619, 5
      %v5162 = vsel %vm1547, %v5160, %v5161
      %v5163 = vrot.slane %v5161, 4
      %v5164 = vrot.slane %v4641, 5
      %v5165 = vsel %vm1547, %v5163, %v5164
      %v5166 = vrot.slane %v5042, 5
      %v5167 = vrot.slane %v5166, 4
      %v5168 = vrot.slane %v4621, 5
      %v5169 = vsel %vm1547, %v5167, %v5168
      %v5170 = vrot.slane %v5168, 4
      %v5171 = vrot.slane %v4642, 5
      %v5172 = vsel %vm1547, %v5170, %v5171
      %v5173 = vrot.slane %v5043, 5
      %v5174 = vrot.slane %v5173, 4
      %v5175 = vrot.slane %v4623, 5
      %v5176 = vsel %vm1547, %v5174, %v5175
      %v5177 = vrot.slane %v5175, 4
      %v5178 = vrot.slane %v4643, 5
      %v5179 = vsel %vm1547, %v5177, %v5178
      %v5180 = vrot.slane %v5044, 5
      %v5181 = vrot.slane %v5180, 4
      %v5182 = vrot.slane %v4625, 5
      %v5183 = vsel %vm1547, %v5181, %v5182
      %v5184 = vrot.slane %v5182, 4
      %v5185 = vrot.slane %v4644, 5
      %v5186 = vsel %vm1547, %v5184, %v5185
      %v5187 = vrot.slane %v5045, 5
      %v5188 = vrot.slane %v5187, 4
      %v5189 = vrot.slane %v4627, 5
      %v5190 = vsel %vm1547, %v5188, %v5189
      %v5191 = vrot.slane %v5189, 4
      %v5192 = vrot.slane %v4645, 5
      %v5193 = vsel %vm1547, %v5191, %v5192
      %v5194 = vrot.slane %v5046, 5
      %v5195 = vrot.slane %v5194, 4
      %v5196 = vrot.slane %v4629, 5
      %v5197 = vsel %vm1547, %v5195, %v5196
      %v5198 = vrot.slane %v5196, 4
      %v5199 = vrot.slane %v4646, 5
      %v5200 = vsel %vm1547, %v5198, %v5199
      %v5201 = vrot.slane %v5047, 5
      %v5202 = vrot.slane %v5201, 4
      %v5203 = vrot.slane %v4631, 5
      %v5204 = vsel %vm1547, %v5202, %v5203
      %v5205 = vrot.slane %v5203, 4
      %v5206 = vrot.slane %v4647, 5
      %v5207 = vsel %vm1547, %v5205, %v5206
      %v5208 = vld [vmem:[%s4483] sm:$0xf]
      %v5209 = vld [vmem:[%s4483 + $0x4] sm:$0xf]
      %v5210 = vld [vmem:[%s4483 + $0xc] sm:$0xf]
      %v5211 = vld [vmem:[%s4483 + $0x10] sm:$0xf]
      %v5212 = vld [vmem:[%s4483 + $0x18] sm:$0xf]
      %v5213 = vld [vmem:[%s4483 + $0x1c] sm:$0xf]
      %v5214 = vld [vmem:[%s4483 + $0x24] sm:$0xf]
      %v5215 = vld [vmem:[%s4483 + $0x28] sm:$0xf]
      %v5216 = vld [vmem:[%s4483 + $0x30] sm:$0xf]
      %v5217 = vld [vmem:[%s4483 + $0x34] sm:$0xf]
      %v5218 = vld [vmem:[%s4483 + $0x3c] sm:$0xf]
      %v5219 = vld [vmem:[%s4483 + $0x40] sm:$0xf]
      %v5220 = vld [vmem:[%s4483 + $0x48] sm:$0xf]
      %v5221 = vld [vmem:[%s4483 + $0x4c] sm:$0xf]
      %v5222 = vld [vmem:[%s4483 + $0x54] sm:$0xf]
      %v5223 = vld [vmem:[%s4483 + $0x58] sm:$0xf]
      %v5224 = vld [vmem:[%s4483 + $0x60] sm:$0xf]
      %v5225 = vld [vmem:[%s4483 + $0x64] sm:$0xf]
      %v5226 = vld [vmem:[%s4483 + $0x6c] sm:$0xf]
      %v5227 = vld [vmem:[%s4483 + $0x70] sm:$0xf]
      %v5228 = vld [vmem:[%s4483 + $0x78] sm:$0xf]
      %v5229 = vld [vmem:[%s4483 + $0x7c] sm:$0xf]
      %v5230 = vld [vmem:[%s4483 + $0x84] sm:$0xf]
      %v5231 = vld [vmem:[%s4483 + $0x88] sm:$0xf]
      %v5232 = vld [vmem:[%s4483 + $0x90] sm:$0xf]
      %v5233 = vld [vmem:[%s4483 + $0x94] sm:$0xf]
      %v5234 = vld [vmem:[%s4483 + $0x9c] sm:$0xf]
      %v5235 = vld [vmem:[%s4483 + $0xa0] sm:$0xf]
      %v5236 = vld [vmem:[%s4483 + $0xa8] sm:$0xf]
      %v5237 = vld [vmem:[%s4483 + $0xac] sm:$0xf]
      %v5238 = vld [vmem:[%s4483 + $0xb4] sm:$0xf]
      %v5239 = vld [vmem:[%s4483 + $0xb8] sm:$0xf]
      %v5240 = vld [vmem:[%s4483 + $0x8] sm:$0x1]
      %v5241 = vld [vmem:[%s4483 + $0x14] sm:$0x1]
      %v5242 = vld [vmem:[%s4483 + $0x20] sm:$0x1]
      %v5243 = vld [vmem:[%s4483 + $0x2c] sm:$0x1]
      %v5244 = vld [vmem:[%s4483 + $0x38] sm:$0x1]
      %v5245 = vld [vmem:[%s4483 + $0x44] sm:$0x1]
      %v5246 = vld [vmem:[%s4483 + $0x50] sm:$0x1]
      %v5247 = vld [vmem:[%s4483 + $0x5c] sm:$0x1]
      %v5248 = vld [vmem:[%s4483 + $0x68] sm:$0x1]
      %v5249 = vld [vmem:[%s4483 + $0x74] sm:$0x1]
      %v5250 = vld [vmem:[%s4483 + $0x80] sm:$0x1]
      %v5251 = vld [vmem:[%s4483 + $0x8c] sm:$0x1]
      %v5252 = vld [vmem:[%s4483 + $0x98] sm:$0x1]
      %v5253 = vld [vmem:[%s4483 + $0xa4] sm:$0x1]
      %v5254 = vld [vmem:[%s4483 + $0xb0] sm:$0x1]
      %v5255 = vld [vmem:[%s4483 + $0xbc] sm:$0x1]
      %v5257 = vshrl.u32 %v5208, 16
      %v5259 = vrot.slane %v5257, 4
      %v5260 = vshll.u32 %v5208, 16
      %v5262 = vrot.slane %v5260, 5
      %v5263 = vor.u32 %v5259, %v5262
      %v5264 = vrot.slane %v5263, 4
      %v5266 = vshll.u32 %v5209, 16
      %v5268 = vrot.slane %v5266, 5
      %v5269 = vsel %vm1096, %v5264, %v5268
      %v5270 = vshrl.u32 %v5209, 16
      %v5272 = vrot.slane %v5270, 4
      %v5273 = vor.u32 %v5272, %v5268
      %v5274 = vrot.slane %v5273, 4
      %v5276 = vshll.u32 %v5240, 16
      %v5278 = vrot.slane %v5276, 5
      %v5279 = vsel %vm1096, %v5274, %v5278
      %v5281 = vshrl.u32 %v5210, 16
      %v5283 = vrot.slane %v5281, 4
      %v5284 = vshll.u32 %v5210, 16
      %v5286 = vrot.slane %v5284, 5
      %v5287 = vor.u32 %v5283, %v5286
      %v5288 = vrot.slane %v5287, 4
      %v5290 = vshll.u32 %v5211, 16
      %v5292 = vrot.slane %v5290, 5
      %v5293 = vsel %vm1096, %v5288, %v5292
      %v5294 = vshrl.u32 %v5211, 16
      %v5296 = vrot.slane %v5294, 4
      %v5297 = vor.u32 %v5296, %v5292
      %v5298 = vrot.slane %v5297, 4
      %v5300 = vshll.u32 %v5241, 16
      %v5302 = vrot.slane %v5300, 5
      %v5303 = vsel %vm1096, %v5298, %v5302
      %v5305 = vshrl.u32 %v5212, 16
      %v5307 = vrot.slane %v5305, 4
      %v5308 = vshll.u32 %v5212, 16
      %v5310 = vrot.slane %v5308, 5
      %v5311 = vor.u32 %v5307, %v5310
      %v5312 = vrot.slane %v5311, 4
      %v5314 = vshll.u32 %v5213, 16
      %v5316 = vrot.slane %v5314, 5
      %v5317 = vsel %vm1096, %v5312, %v5316
      %v5318 = vshrl.u32 %v5213, 16
      %v5320 = vrot.slane %v5318, 4
      %v5321 = vor.u32 %v5320, %v5316
      %v5322 = vrot.slane %v5321, 4
      %v5324 = vshll.u32 %v5242, 16
      %v5326 = vrot.slane %v5324, 5
      %v5327 = vsel %vm1096, %v5322, %v5326
      %v5329 = vshrl.u32 %v5214, 16
      %v5331 = vrot.slane %v5329, 4
      %v5332 = vshll.u32 %v5214, 16
      %v5334 = vrot.slane %v5332, 5
      %v5335 = vor.u32 %v5331, %v5334
      %v5336 = vrot.slane %v5335, 4
      %v5338 = vshll.u32 %v5215, 16
      %v5340 = vrot.slane %v5338, 5
      %v5341 = vsel %vm1096, %v5336, %v5340
      %v5342 = vshrl.u32 %v5215, 16
      %v5344 = vrot.slane %v5342, 4
      %v5345 = vor.u32 %v5344, %v5340
      %v5346 = vrot.slane %v5345, 4
      %v5348 = vshll.u32 %v5243, 16
      %v5350 = vrot.slane %v5348, 5
      %v5351 = vsel %vm1096, %v5346, %v5350
      %v5353 = vshrl.u32 %v5216, 16
      %v5355 = vrot.slane %v5353, 4
      %v5356 = vshll.u32 %v5216, 16
      %v5358 = vrot.slane %v5356, 5
      %v5359 = vor.u32 %v5355, %v5358
      %v5360 = vrot.slane %v5359, 4
      %v5362 = vshll.u32 %v5217, 16
      %v5364 = vrot.slane %v5362, 5
      %v5365 = vsel %vm1096, %v5360, %v5364
      %v5366 = vshrl.u32 %v5217, 16
      %v5368 = vrot.slane %v5366, 4
      %v5369 = vor.u32 %v5368, %v5364
      %v5370 = vrot.slane %v5369, 4
      %v5372 = vshll.u32 %v5244, 16
      %v5374 = vrot.slane %v5372, 5
      %v5375 = vsel %vm1096, %v5370, %v5374
      %v5377 = vshrl.u32 %v5218, 16
      %v5379 = vrot.slane %v5377, 4
      %v5380 = vshll.u32 %v5218, 16
      %v5382 = vrot.slane %v5380, 5
      %v5383 = vor.u32 %v5379, %v5382
      %v5384 = vrot.slane %v5383, 4
      %v5386 = vshll.u32 %v5219, 16
      %v5388 = vrot.slane %v5386, 5
      %v5389 = vsel %vm1096, %v5384, %v5388
      %v5390 = vshrl.u32 %v5219, 16
      %v5392 = vrot.slane %v5390, 4
      %v5393 = vor.u32 %v5392, %v5388
      %v5394 = vrot.slane %v5393, 4
      %v5396 = vshll.u32 %v5245, 16
      %v5398 = vrot.slane %v5396, 5
      %v5399 = vsel %vm1096, %v5394, %v5398
      %v5401 = vshrl.u32 %v5220, 16
      %v5403 = vrot.slane %v5401, 4
      %v5404 = vshll.u32 %v5220, 16
      %v5406 = vrot.slane %v5404, 5
      %v5407 = vor.u32 %v5403, %v5406
      %v5408 = vrot.slane %v5407, 4
      %v5410 = vshll.u32 %v5221, 16
      %v5412 = vrot.slane %v5410, 5
      %v5413 = vsel %vm1096, %v5408, %v5412
      %v5414 = vshrl.u32 %v5221, 16
      %v5416 = vrot.slane %v5414, 4
      %v5417 = vor.u32 %v5416, %v5412
      %v5418 = vrot.slane %v5417, 4
      %v5420 = vshll.u32 %v5246, 16
      %v5422 = vrot.slane %v5420, 5
      %v5423 = vsel %vm1096, %v5418, %v5422
      %v5425 = vshrl.u32 %v5222, 16
      %v5427 = vrot.slane %v5425, 4
      %v5428 = vshll.u32 %v5222, 16
      %v5430 = vrot.slane %v5428, 5
      %v5431 = vor.u32 %v5427, %v5430
      %v5432 = vrot.slane %v5431, 4
      %v5434 = vshll.u32 %v5223, 16
      %v5436 = vrot.slane %v5434, 5
      %v5437 = vsel %vm1096, %v5432, %v5436
      %v5438 = vshrl.u32 %v5223, 16
      %v5440 = vrot.slane %v5438, 4
      %v5441 = vor.u32 %v5440, %v5436
      %v5442 = vrot.slane %v5441, 4
      %v5444 = vshll.u32 %v5247, 16
      %v5446 = vrot.slane %v5444, 5
      %v5447 = vsel %vm1096, %v5442, %v5446
      %v5449 = vshrl.u32 %v5224, 16
      %v5451 = vrot.slane %v5449, 4
      %v5452 = vshll.u32 %v5224, 16
      %v5454 = vrot.slane %v5452, 5
      %v5455 = vor.u32 %v5451, %v5454
      %v5456 = vrot.slane %v5455, 4
      %v5458 = vshll.u32 %v5225, 16
      %v5460 = vrot.slane %v5458, 5
      %v5461 = vsel %vm1096, %v5456, %v5460
      %v5462 = vshrl.u32 %v5225, 16
      %v5464 = vrot.slane %v5462, 4
      %v5465 = vor.u32 %v5464, %v5460
      %v5466 = vrot.slane %v5465, 4
      %v5468 = vshll.u32 %v5248, 16
      %v5470 = vrot.slane %v5468, 5
      %v5471 = vsel %vm1096, %v5466, %v5470
      %v5473 = vshrl.u32 %v5226, 16
      %v5475 = vrot.slane %v5473, 4
      %v5476 = vshll.u32 %v5226, 16
      %v5478 = vrot.slane %v5476, 5
      %v5479 = vor.u32 %v5475, %v5478
      %v5480 = vrot.slane %v5479, 4
      %v5482 = vshll.u32 %v5227, 16
      %v5484 = vrot.slane %v5482, 5
      %v5485 = vsel %vm1096, %v5480, %v5484
      %v5486 = vshrl.u32 %v5227, 16
      %v5488 = vrot.slane %v5486, 4
      %v5489 = vor.u32 %v5488, %v5484
      %v5490 = vrot.slane %v5489, 4
      %v5492 = vshll.u32 %v5249, 16
      %v5494 = vrot.slane %v5492, 5
      %v5495 = vsel %vm1096, %v5490, %v5494
      %v5497 = vshrl.u32 %v5228, 16
      %v5499 = vrot.slane %v5497, 4
      %v5500 = vshll.u32 %v5228, 16
      %v5502 = vrot.slane %v5500, 5
      %v5503 = vor.u32 %v5499, %v5502
      %v5504 = vrot.slane %v5503, 4
      %v5506 = vshll.u32 %v5229, 16
      %v5508 = vrot.slane %v5506, 5
      %v5509 = vsel %vm1096, %v5504, %v5508
      %v5510 = vshrl.u32 %v5229, 16
      %v5512 = vrot.slane %v5510, 4
      %v5513 = vor.u32 %v5512, %v5508
      %v5514 = vrot.slane %v5513, 4
      %v5516 = vshll.u32 %v5250, 16
      %v5518 = vrot.slane %v5516, 5
      %v5519 = vsel %vm1096, %v5514, %v5518
      %v5521 = vshrl.u32 %v5230, 16
      %v5523 = vrot.slane %v5521, 4
      %v5524 = vshll.u32 %v5230, 16
      %v5526 = vrot.slane %v5524, 5
      %v5527 = vor.u32 %v5523, %v5526
      %v5528 = vrot.slane %v5527, 4
      %v5530 = vshll.u32 %v5231, 16
      %v5532 = vrot.slane %v5530, 5
      %v5533 = vsel %vm1096, %v5528, %v5532
      %v5534 = vshrl.u32 %v5231, 16
      %v5536 = vrot.slane %v5534, 4
      %v5537 = vor.u32 %v5536, %v5532
      %v5538 = vrot.slane %v5537, 4
      %v5540 = vshll.u32 %v5251, 16
      %v5542 = vrot.slane %v5540, 5
      %v5543 = vsel %vm1096, %v5538, %v5542
      %v5545 = vshrl.u32 %v5232, 16
      %v5547 = vrot.slane %v5545, 4
      %v5548 = vshll.u32 %v5232, 16
      %v5550 = vrot.slane %v5548, 5
      %v5551 = vor.u32 %v5547, %v5550
      %v5552 = vrot.slane %v5551, 4
      %v5554 = vshll.u32 %v5233, 16
      %v5556 = vrot.slane %v5554, 5
      %v5557 = vsel %vm1096, %v5552, %v5556
      %v5558 = vshrl.u32 %v5233, 16
      %v5560 = vrot.slane %v5558, 4
      %v5561 = vor.u32 %v5560, %v5556
      %v5562 = vrot.slane %v5561, 4
      %v5564 = vshll.u32 %v5252, 16
      %v5566 = vrot.slane %v5564, 5
      %v5567 = vsel %vm1096, %v5562, %v5566
      %v5569 = vshrl.u32 %v5234, 16
      %v5571 = vrot.slane %v5569, 4
      %v5572 = vshll.u32 %v5234, 16
      %v5574 = vrot.slane %v5572, 5
      %v5575 = vor.u32 %v5571, %v5574
      %v5576 = vrot.slane %v5575, 4
      %v5578 = vshll.u32 %v5235, 16
      %v5580 = vrot.slane %v5578, 5
      %v5581 = vsel %vm1096, %v5576, %v5580
      %v5582 = vshrl.u32 %v5235, 16
      %v5584 = vrot.slane %v5582, 4
      %v5585 = vor.u32 %v5584, %v5580
      %v5586 = vrot.slane %v5585, 4
      %v5588 = vshll.u32 %v5253, 16
      %v5590 = vrot.slane %v5588, 5
      %v5591 = vsel %vm1096, %v5586, %v5590
      %v5593 = vshrl.u32 %v5236, 16
      %v5595 = vrot.slane %v5593, 4
      %v5596 = vshll.u32 %v5236, 16
      %v5598 = vrot.slane %v5596, 5
      %v5599 = vor.u32 %v5595, %v5598
      %v5600 = vrot.slane %v5599, 4
      %v5602 = vshll.u32 %v5237, 16
      %v5604 = vrot.slane %v5602, 5
      %v5605 = vsel %vm1096, %v5600, %v5604
      %v5606 = vshrl.u32 %v5237, 16
      %v5608 = vrot.slane %v5606, 4
      %v5609 = vor.u32 %v5608, %v5604
      %v5610 = vrot.slane %v5609, 4
      %v5612 = vshll.u32 %v5254, 16
      %v5614 = vrot.slane %v5612, 5
      %v5615 = vsel %vm1096, %v5610, %v5614
      %v5617 = vshrl.u32 %v5238, 16
      %v5619 = vrot.slane %v5617, 4
      %v5620 = vshll.u32 %v5238, 16
      %v5622 = vrot.slane %v5620, 5
      %v5623 = vor.u32 %v5619, %v5622
      %v5624 = vrot.slane %v5623, 4
      %v5626 = vshll.u32 %v5239, 16
      %v5628 = vrot.slane %v5626, 5
      %v5629 = vsel %vm1096, %v5624, %v5628
      %v5630 = vshrl.u32 %v5239, 16
      %v5632 = vrot.slane %v5630, 4
      %v5633 = vor.u32 %v5632, %v5628
      %v5634 = vrot.slane %v5633, 4
      %v5636 = vshll.u32 %v5255, 16
      %v5638 = vrot.slane %v5636, 5
      %v5639 = vsel %vm1096, %v5634, %v5638
      %v5640 = vld [vmem:[%s4483] sm:$0xe]
      %v5641 = vld [vmem:[%s4483 + $0xc] sm:$0xe]
      %v5642 = vld [vmem:[%s4483 + $0x18] sm:$0xe]
      %v5643 = vld [vmem:[%s4483 + $0x24] sm:$0xe]
      %v5644 = vld [vmem:[%s4483 + $0x30] sm:$0xe]
      %v5645 = vld [vmem:[%s4483 + $0x3c] sm:$0xe]
      %v5646 = vld [vmem:[%s4483 + $0x48] sm:$0xe]
      %v5647 = vld [vmem:[%s4483 + $0x54] sm:$0xe]
      %v5648 = vld [vmem:[%s4483 + $0x60] sm:$0xe]
      %v5649 = vld [vmem:[%s4483 + $0x6c] sm:$0xe]
      %v5650 = vld [vmem:[%s4483 + $0x78] sm:$0xe]
      %v5651 = vld [vmem:[%s4483 + $0x84] sm:$0xe]
      %v5652 = vld [vmem:[%s4483 + $0x90] sm:$0xe]
      %v5653 = vld [vmem:[%s4483 + $0x9c] sm:$0xe]
      %v5654 = vld [vmem:[%s4483 + $0xa8] sm:$0xe]
      %v5655 = vld [vmem:[%s4483 + $0xb4] sm:$0xe]
      %v5704 = vrot.slane %v5640, 5
      %v5705 = vrot.slane %v5704, 4
      %v5706 = vrot.slane %v5209, 5
      %v5707 = vsel %vm1547, %v5705, %v5706
      %v5708 = vrot.slane %v5706, 4
      %v5709 = vrot.slane %v5240, 5
      %v5710 = vsel %vm1547, %v5708, %v5709
      %v5711 = vrot.slane %v5641, 5
      %v5712 = vrot.slane %v5711, 4
      %v5713 = vrot.slane %v5211, 5
      %v5714 = vsel %vm1547, %v5712, %v5713
      %v5715 = vrot.slane %v5713, 4
      %v5716 = vrot.slane %v5241, 5
      %v5717 = vsel %vm1547, %v5715, %v5716
      %v5718 = vrot.slane %v5642, 5
      %v5719 = vrot.slane %v5718, 4
      %v5720 = vrot.slane %v5213, 5
      %v5721 = vsel %vm1547, %v5719, %v5720
      %v5722 = vrot.slane %v5720, 4
      %v5723 = vrot.slane %v5242, 5
      %v5724 = vsel %vm1547, %v5722, %v5723
      %v5725 = vrot.slane %v5643, 5
      %v5726 = vrot.slane %v5725, 4
      %v5727 = vrot.slane %v5215, 5
      %v5728 = vsel %vm1547, %v5726, %v5727
      %v5729 = vrot.slane %v5727, 4
      %v5730 = vrot.slane %v5243, 5
      %v5731 = vsel %vm1547, %v5729, %v5730
      %v5732 = vrot.slane %v5644, 5
      %v5733 = vrot.slane %v5732, 4
      %v5734 = vrot.slane %v5217, 5
      %v5735 = vsel %vm1547, %v5733, %v5734
      %v5736 = vrot.slane %v5734, 4
      %v5737 = vrot.slane %v5244, 5
      %v5738 = vsel %vm1547, %v5736, %v5737
      %v5739 = vrot.slane %v5645, 5
      %v5740 = vrot.slane %v5739, 4
      %v5741 = vrot.slane %v5219, 5
      %v5742 = vsel %vm1547, %v5740, %v5741
      %v5743 = vrot.slane %v5741, 4
      %v5744 = vrot.slane %v5245, 5
      %v5745 = vsel %vm1547, %v5743, %v5744
      %v5746 = vrot.slane %v5646, 5
      %v5747 = vrot.slane %v5746, 4
      %v5748 = vrot.slane %v5221, 5
      %v5749 = vsel %vm1547, %v5747, %v5748
      %v5750 = vrot.slane %v5748, 4
      %v5751 = vrot.slane %v5246, 5
      %v5752 = vsel %vm1547, %v5750, %v5751
      %v5753 = vrot.slane %v5647, 5
      %v5754 = vrot.slane %v5753, 4
      %v5755 = vrot.slane %v5223, 5
      %v5756 = vsel %vm1547, %v5754, %v5755
      %v5757 = vrot.slane %v5755, 4
      %v5758 = vrot.slane %v5247, 5
      %v5759 = vsel %vm1547, %v5757, %v5758
      %v5760 = vrot.slane %v5648, 5
      %v5761 = vrot.slane %v5760, 4
      %v5762 = vrot.slane %v5225, 5
      %v5763 = vsel %vm1547, %v5761, %v5762
      %v5764 = vrot.slane %v5762, 4
      %v5765 = vrot.slane %v5248, 5
      %v5766 = vsel %vm1547, %v5764, %v5765
      %v5767 = vrot.slane %v5649, 5
      %v5768 = vrot.slane %v5767, 4
      %v5769 = vrot.slane %v5227, 5
      %v5770 = vsel %vm1547, %v5768, %v5769
      %v5771 = vrot.slane %v5769, 4
      %v5772 = vrot.slane %v5249, 5
      %v5773 = vsel %vm1547, %v5771, %v5772
      %v5774 = vrot.slane %v5650, 5
      %v5775 = vrot.slane %v5774, 4
      %v5776 = vrot.slane %v5229, 5
      %v5777 = vsel %vm1547, %v5775, %v5776
      %v5778 = vrot.slane %v5776, 4
      %v5779 = vrot.slane %v5250, 5
      %v5780 = vsel %vm1547, %v5778, %v5779
      %v5781 = vrot.slane %v5651, 5
      %v5782 = vrot.slane %v5781, 4
      %v5783 = vrot.slane %v5231, 5
      %v5784 = vsel %vm1547, %v5782, %v5783
      %v5785 = vrot.slane %v5783, 4
      %v5786 = vrot.slane %v5251, 5
      %v5787 = vsel %vm1547, %v5785, %v5786
      %v5788 = vrot.slane %v5652, 5
      %v5789 = vrot.slane %v5788, 4
      %v5790 = vrot.slane %v5233, 5
      %v5791 = vsel %vm1547, %v5789, %v5790
      %v5792 = vrot.slane %v5790, 4
      %v5793 = vrot.slane %v5252, 5
      %v5794 = vsel %vm1547, %v5792, %v5793
      %v5795 = vrot.slane %v5653, 5
      %v5796 = vrot.slane %v5795, 4
      %v5797 = vrot.slane %v5235, 5
      %v5798 = vsel %vm1547, %v5796, %v5797
      %v5799 = vrot.slane %v5797, 4
      %v5800 = vrot.slane %v5253, 5
      %v5801 = vsel %vm1547, %v5799, %v5800
      %v5802 = vrot.slane %v5654, 5
      %v5803 = vrot.slane %v5802, 4
      %v5804 = vrot.slane %v5237, 5
      %v5805 = vsel %vm1547, %v5803, %v5804
      %v5806 = vrot.slane %v5804, 4
      %v5807 = vrot.slane %v5254, 5
      %v5808 = vsel %vm1547, %v5806, %v5807
      %v5809 = vrot.slane %v5655, 5
      %v5810 = vrot.slane %v5809, 4
      %v5811 = vrot.slane %v5239, 5
      %v5812 = vsel %vm1547, %v5810, %v5811
      %v5813 = vrot.slane %v5811, 4
      %v5814 = vrot.slane %v5255, 5
      %v5815 = vsel %vm1547, %v5813, %v5814
      %s5816 = scalar_lea.vmem [#allocation3], 24
      %v5817 = vld [vmem:[%s5816] sm:$0xf]
      %v5818 = vld [vmem:[%s5816 + $0x4] sm:$0xf]
      %v5819 = vld [vmem:[%s5816 + $0xc] sm:$0xf]
      %v5820 = vld [vmem:[%s5816 + $0x10] sm:$0xf]
      %v5821 = vld [vmem:[%s5816 + $0x18] sm:$0xf]
      %v5822 = vld [vmem:[%s5816 + $0x1c] sm:$0xf]
      %v5823 = vld [vmem:[%s5816 + $0x24] sm:$0xf]
      %v5824 = vld [vmem:[%s5816 + $0x28] sm:$0xf]
      %v5825 = vld [vmem:[%s5816 + $0x30] sm:$0xf]
      %v5826 = vld [vmem:[%s5816 + $0x34] sm:$0xf]
      %v5827 = vld [vmem:[%s5816 + $0x3c] sm:$0xf]
      %v5828 = vld [vmem:[%s5816 + $0x40] sm:$0xf]
      %v5829 = vld [vmem:[%s5816 + $0x48] sm:$0xf]
      %v5830 = vld [vmem:[%s5816 + $0x4c] sm:$0xf]
      %v5831 = vld [vmem:[%s5816 + $0x54] sm:$0xf]
      %v5832 = vld [vmem:[%s5816 + $0x58] sm:$0xf]
      %v5833 = vld [vmem:[%s5816 + $0x60] sm:$0xf]
      %v5834 = vld [vmem:[%s5816 + $0x64] sm:$0xf]
      %v5835 = vld [vmem:[%s5816 + $0x6c] sm:$0xf]
      %v5836 = vld [vmem:[%s5816 + $0x70] sm:$0xf]
      %v5837 = vld [vmem:[%s5816 + $0x78] sm:$0xf]
      %v5838 = vld [vmem:[%s5816 + $0x7c] sm:$0xf]
      %v5839 = vld [vmem:[%s5816 + $0x84] sm:$0xf]
      %v5840 = vld [vmem:[%s5816 + $0x88] sm:$0xf]
      %v5841 = vld [vmem:[%s5816 + $0x90] sm:$0xf]
      %v5842 = vld [vmem:[%s5816 + $0x94] sm:$0xf]
      %v5843 = vld [vmem:[%s5816 + $0x9c] sm:$0xf]
      %v5844 = vld [vmem:[%s5816 + $0xa0] sm:$0xf]
      %v5845 = vld [vmem:[%s5816 + $0xa8] sm:$0xf]
      %v5846 = vld [vmem:[%s5816 + $0xac] sm:$0xf]
      %v5847 = vld [vmem:[%s5816 + $0xb4] sm:$0xf]
      %v5848 = vld [vmem:[%s5816 + $0xb8] sm:$0xf]
      %v5849 = vld [vmem:[%s5816 + $0x8] sm:$0x1]
      %v5850 = vld [vmem:[%s5816 + $0x14] sm:$0x1]
      %v5851 = vld [vmem:[%s5816 + $0x20] sm:$0x1]
      %v5852 = vld [vmem:[%s5816 + $0x2c] sm:$0x1]
      %v5853 = vld [vmem:[%s5816 + $0x38] sm:$0x1]
      %v5854 = vld [vmem:[%s5816 + $0x44] sm:$0x1]
      %v5855 = vld [vmem:[%s5816 + $0x50] sm:$0x1]
      %v5856 = vld [vmem:[%s5816 + $0x5c] sm:$0x1]
      %v5857 = vld [vmem:[%s5816 + $0x68] sm:$0x1]
      %v5858 = vld [vmem:[%s5816 + $0x74] sm:$0x1]
      %v5859 = vld [vmem:[%s5816 + $0x80] sm:$0x1]
      %v5860 = vld [vmem:[%s5816 + $0x8c] sm:$0x1]
      %v5861 = vld [vmem:[%s5816 + $0x98] sm:$0x1]
      %v5862 = vld [vmem:[%s5816 + $0xa4] sm:$0x1]
      %v5863 = vld [vmem:[%s5816 + $0xb0] sm:$0x1]
      %v5864 = vld [vmem:[%s5816 + $0xbc] sm:$0x1]
      %v5866 = vshrl.u32 %v5817, 16
      %v5868 = vrot.slane %v5866, 4
      %v5869 = vshll.u32 %v5817, 16
      %v5871 = vrot.slane %v5869, 5
      %v5872 = vor.u32 %v5868, %v5871
      %v5873 = vrot.slane %v5872, 4
      %v5875 = vshll.u32 %v5818, 16
      %v5877 = vrot.slane %v5875, 5
      %v5878 = vsel %vm1096, %v5873, %v5877
      %v5879 = vshrl.u32 %v5818, 16
      %v5881 = vrot.slane %v5879, 4
      %v5882 = vor.u32 %v5881, %v5877
      %v5883 = vrot.slane %v5882, 4
      %v5885 = vshll.u32 %v5849, 16
      %v5887 = vrot.slane %v5885, 5
      %v5888 = vsel %vm1096, %v5883, %v5887
      %v5890 = vshrl.u32 %v5819, 16
      %v5892 = vrot.slane %v5890, 4
      %v5893 = vshll.u32 %v5819, 16
      %v5895 = vrot.slane %v5893, 5
      %v5896 = vor.u32 %v5892, %v5895
      %v5897 = vrot.slane %v5896, 4
      %v5899 = vshll.u32 %v5820, 16
      %v5901 = vrot.slane %v5899, 5
      %v5902 = vsel %vm1096, %v5897, %v5901
      %v5903 = vshrl.u32 %v5820, 16
      %v5905 = vrot.slane %v5903, 4
      %v5906 = vor.u32 %v5905, %v5901
      %v5907 = vrot.slane %v5906, 4
      %v5909 = vshll.u32 %v5850, 16
      %v5911 = vrot.slane %v5909, 5
      %v5912 = vsel %vm1096, %v5907, %v5911
      %v5914 = vshrl.u32 %v5821, 16
      %v5916 = vrot.slane %v5914, 4
      %v5917 = vshll.u32 %v5821, 16
      %v5919 = vrot.slane %v5917, 5
      %v5920 = vor.u32 %v5916, %v5919
      %v5921 = vrot.slane %v5920, 4
      %v5923 = vshll.u32 %v5822, 16
      %v5925 = vrot.slane %v5923, 5
      %v5926 = vsel %vm1096, %v5921, %v5925
      %v5927 = vshrl.u32 %v5822, 16
      %v5929 = vrot.slane %v5927, 4
      %v5930 = vor.u32 %v5929, %v5925
      %v5931 = vrot.slane %v5930, 4
      %v5933 = vshll.u32 %v5851, 16
      %v5935 = vrot.slane %v5933, 5
      %v5936 = vsel %vm1096, %v5931, %v5935
      %v5938 = vshrl.u32 %v5823, 16
      %v5940 = vrot.slane %v5938, 4
      %v5941 = vshll.u32 %v5823, 16
      %v5943 = vrot.slane %v5941, 5
      %v5944 = vor.u32 %v5940, %v5943
      %v5945 = vrot.slane %v5944, 4
      %v5947 = vshll.u32 %v5824, 16
      %v5949 = vrot.slane %v5947, 5
      %v5950 = vsel %vm1096, %v5945, %v5949
      %v5951 = vshrl.u32 %v5824, 16
      %v5953 = vrot.slane %v5951, 4
      %v5954 = vor.u32 %v5953, %v5949
      %v5955 = vrot.slane %v5954, 4
      %v5957 = vshll.u32 %v5852, 16
      %v5959 = vrot.slane %v5957, 5
      %v5960 = vsel %vm1096, %v5955, %v5959
      %v5962 = vshrl.u32 %v5825, 16
      %v5964 = vrot.slane %v5962, 4
      %v5965 = vshll.u32 %v5825, 16
      %v5967 = vrot.slane %v5965, 5
      %v5968 = vor.u32 %v5964, %v5967
      %v5969 = vrot.slane %v5968, 4
      %v5971 = vshll.u32 %v5826, 16
      %v5973 = vrot.slane %v5971, 5
      %v5974 = vsel %vm1096, %v5969, %v5973
      %v5975 = vshrl.u32 %v5826, 16
      %v5977 = vrot.slane %v5975, 4
      %v5978 = vor.u32 %v5977, %v5973
      %v5979 = vrot.slane %v5978, 4
      %v5981 = vshll.u32 %v5853, 16
      %v5983 = vrot.slane %v5981, 5
      %v5984 = vsel %vm1096, %v5979, %v5983
      %v5986 = vshrl.u32 %v5827, 16
      %v5988 = vrot.slane %v5986, 4
      %v5989 = vshll.u32 %v5827, 16
      %v5991 = vrot.slane %v5989, 5
      %v5992 = vor.u32 %v5988, %v5991
      %v5993 = vrot.slane %v5992, 4
      %v5995 = vshll.u32 %v5828, 16
      %v5997 = vrot.slane %v5995, 5
      %v5998 = vsel %vm1096, %v5993, %v5997
      %v5999 = vshrl.u32 %v5828, 16
      %v6001 = vrot.slane %v5999, 4
      %v6002 = vor.u32 %v6001, %v5997
      %v6003 = vrot.slane %v6002, 4
      %v6005 = vshll.u32 %v5854, 16
      %v6007 = vrot.slane %v6005, 5
      %v6008 = vsel %vm1096, %v6003, %v6007
      %v6010 = vshrl.u32 %v5829, 16
      %v6012 = vrot.slane %v6010, 4
      %v6013 = vshll.u32 %v5829, 16
      %v6015 = vrot.slane %v6013, 5
      %v6016 = vor.u32 %v6012, %v6015
      %v6017 = vrot.slane %v6016, 4
      %v6019 = vshll.u32 %v5830, 16
      %v6021 = vrot.slane %v6019, 5
      %v6022 = vsel %vm1096, %v6017, %v6021
      %v6023 = vshrl.u32 %v5830, 16
      %v6025 = vrot.slane %v6023, 4
      %v6026 = vor.u32 %v6025, %v6021
      %v6027 = vrot.slane %v6026, 4
      %v6029 = vshll.u32 %v5855, 16
      %v6031 = vrot.slane %v6029, 5
      %v6032 = vsel %vm1096, %v6027, %v6031
      %v6034 = vshrl.u32 %v5831, 16
      %v6036 = vrot.slane %v6034, 4
      %v6037 = vshll.u32 %v5831, 16
      %v6039 = vrot.slane %v6037, 5
      %v6040 = vor.u32 %v6036, %v6039
      %v6041 = vrot.slane %v6040, 4
      %v6043 = vshll.u32 %v5832, 16
      %v6045 = vrot.slane %v6043, 5
      %v6046 = vsel %vm1096, %v6041, %v6045
      %v6047 = vshrl.u32 %v5832, 16
      %v6049 = vrot.slane %v6047, 4
      %v6050 = vor.u32 %v6049, %v6045
      %v6051 = vrot.slane %v6050, 4
      %v6053 = vshll.u32 %v5856, 16
      %v6055 = vrot.slane %v6053, 5
      %v6056 = vsel %vm1096, %v6051, %v6055
      %v6058 = vshrl.u32 %v5833, 16
      %v6060 = vrot.slane %v6058, 4
      %v6061 = vshll.u32 %v5833, 16
      %v6063 = vrot.slane %v6061, 5
      %v6064 = vor.u32 %v6060, %v6063
      %v6065 = vrot.slane %v6064, 4
      %v6067 = vshll.u32 %v5834, 16
      %v6069 = vrot.slane %v6067, 5
      %v6070 = vsel %vm1096, %v6065, %v6069
      %v6071 = vshrl.u32 %v5834, 16
      %v6073 = vrot.slane %v6071, 4
      %v6074 = vor.u32 %v6073, %v6069
      %v6075 = vrot.slane %v6074, 4
      %v6077 = vshll.u32 %v5857, 16
      %v6079 = vrot.slane %v6077, 5
      %v6080 = vsel %vm1096, %v6075, %v6079
      %v6082 = vshrl.u32 %v5835, 16
      %v6084 = vrot.slane %v6082, 4
      %v6085 = vshll.u32 %v5835, 16
      %v6087 = vrot.slane %v6085, 5
      %v6088 = vor.u32 %v6084, %v6087
      %v6089 = vrot.slane %v6088, 4
      %v6091 = vshll.u32 %v5836, 16
      %v6093 = vrot.slane %v6091, 5
      %v6094 = vsel %vm1096, %v6089, %v6093
      %v6095 = vshrl.u32 %v5836, 16
      %v6097 = vrot.slane %v6095, 4
      %v6098 = vor.u32 %v6097, %v6093
      %v6099 = vrot.slane %v6098, 4
      %v6101 = vshll.u32 %v5858, 16
      %v6103 = vrot.slane %v6101, 5
      %v6104 = vsel %vm1096, %v6099, %v6103
      %v6106 = vshrl.u32 %v5837, 16
      %v6108 = vrot.slane %v6106, 4
      %v6109 = vshll.u32 %v5837, 16
      %v6111 = vrot.slane %v6109, 5
      %v6112 = vor.u32 %v6108, %v6111
      %v6113 = vrot.slane %v6112, 4
      %v6115 = vshll.u32 %v5838, 16
      %v6117 = vrot.slane %v6115, 5
      %v6118 = vsel %vm1096, %v6113, %v6117
      %v6119 = vshrl.u32 %v5838, 16
      %v6121 = vrot.slane %v6119, 4
      %v6122 = vor.u32 %v6121, %v6117
      %v6123 = vrot.slane %v6122, 4
      %v6125 = vshll.u32 %v5859, 16
      %v6127 = vrot.slane %v6125, 5
      %v6128 = vsel %vm1096, %v6123, %v6127
      %v6130 = vshrl.u32 %v5839, 16
      %v6132 = vrot.slane %v6130, 4
      %v6133 = vshll.u32 %v5839, 16
      %v6135 = vrot.slane %v6133, 5
      %v6136 = vor.u32 %v6132, %v6135
      %v6137 = vrot.slane %v6136, 4
      %v6139 = vshll.u32 %v5840, 16
      %v6141 = vrot.slane %v6139, 5
      %v6142 = vsel %vm1096, %v6137, %v6141
      %v6143 = vshrl.u32 %v5840, 16
      %v6145 = vrot.slane %v6143, 4
      %v6146 = vor.u32 %v6145, %v6141
      %v6147 = vrot.slane %v6146, 4
      %v6149 = vshll.u32 %v5860, 16
      %v6151 = vrot.slane %v6149, 5
      %v6152 = vsel %vm1096, %v6147, %v6151
      %v6154 = vshrl.u32 %v5841, 16
      %v6156 = vrot.slane %v6154, 4
      %v6157 = vshll.u32 %v5841, 16
      %v6159 = vrot.slane %v6157, 5
      %v6160 = vor.u32 %v6156, %v6159
      %v6161 = vrot.slane %v6160, 4
      %v6163 = vshll.u32 %v5842, 16
      %v6165 = vrot.slane %v6163, 5
      %v6166 = vsel %vm1096, %v6161, %v6165
      %v6167 = vshrl.u32 %v5842, 16
      %v6169 = vrot.slane %v6167, 4
      %v6170 = vor.u32 %v6169, %v6165
      %v6171 = vrot.slane %v6170, 4
      %v6173 = vshll.u32 %v5861, 16
      %v6175 = vrot.slane %v6173, 5
      %v6176 = vsel %vm1096, %v6171, %v6175
      %v6178 = vshrl.u32 %v5843, 16
      %v6180 = vrot.slane %v6178, 4
      %v6181 = vshll.u32 %v5843, 16
      %v6183 = vrot.slane %v6181, 5
      %v6184 = vor.u32 %v6180, %v6183
      %v6185 = vrot.slane %v6184, 4
      %v6187 = vshll.u32 %v5844, 16
      %v6189 = vrot.slane %v6187, 5
      %v6190 = vsel %vm1096, %v6185, %v6189
      %v6191 = vshrl.u32 %v5844, 16
      %v6193 = vrot.slane %v6191, 4
      %v6194 = vor.u32 %v6193, %v6189
      %v6195 = vrot.slane %v6194, 4
      %v6197 = vshll.u32 %v5862, 16
      %v6199 = vrot.slane %v6197, 5
      %v6200 = vsel %vm1096, %v6195, %v6199
      %v6202 = vshrl.u32 %v5845, 16
      %v6204 = vrot.slane %v6202, 4
      %v6205 = vshll.u32 %v5845, 16
      %v6207 = vrot.slane %v6205, 5
      %v6208 = vor.u32 %v6204, %v6207
      %v6209 = vrot.slane %v6208, 4
      %v6211 = vshll.u32 %v5846, 16
      %v6213 = vrot.slane %v6211, 5
      %v6214 = vsel %vm1096, %v6209, %v6213
      %v6215 = vshrl.u32 %v5846, 16
      %v6217 = vrot.slane %v6215, 4
      %v6218 = vor.u32 %v6217, %v6213
      %v6219 = vrot.slane %v6218, 4
      %v6221 = vshll.u32 %v5863, 16
      %v6223 = vrot.slane %v6221, 5
      %v6224 = vsel %vm1096, %v6219, %v6223
      %v6226 = vshrl.u32 %v5847, 16
      %v6228 = vrot.slane %v6226, 4
      %v6229 = vshll.u32 %v5847, 16
      %v6231 = vrot.slane %v6229, 5
      %v6232 = vor.u32 %v6228, %v6231
      %v6233 = vrot.slane %v6232, 4
      %v6235 = vshll.u32 %v5848, 16
      %v6237 = vrot.slane %v6235, 5
      %v6238 = vsel %vm1096, %v6233, %v6237
      %v6239 = vshrl.u32 %v5848, 16
      %v6241 = vrot.slane %v6239, 4
      %v6242 = vor.u32 %v6241, %v6237
      %v6243 = vrot.slane %v6242, 4
      %v6245 = vshll.u32 %v5864, 16
      %v6247 = vrot.slane %v6245, 5
      %v6248 = vsel %vm1096, %v6243, %v6247
      %v6249 = vld [vmem:[%s5816] sm:$0xe]
      %v6250 = vld [vmem:[%s5816 + $0xc] sm:$0xe]
      %v6251 = vld [vmem:[%s5816 + $0x18] sm:$0xe]
      %v6252 = vld [vmem:[%s5816 + $0x24] sm:$0xe]
      %v6253 = vld [vmem:[%s5816 + $0x30] sm:$0xe]
      %v6254 = vld [vmem:[%s5816 + $0x3c] sm:$0xe]
      %v6255 = vld [vmem:[%s5816 + $0x48] sm:$0xe]
      %v6256 = vld [vmem:[%s5816 + $0x54] sm:$0xe]
      %v6257 = vld [vmem:[%s5816 + $0x60] sm:$0xe]
      %v6258 = vld [vmem:[%s5816 + $0x6c] sm:$0xe]
      %v6259 = vld [vmem:[%s5816 + $0x78] sm:$0xe]
      %v6260 = vld [vmem:[%s5816 + $0x84] sm:$0xe]
      %v6261 = vld [vmem:[%s5816 + $0x90] sm:$0xe]
      %v6262 = vld [vmem:[%s5816 + $0x9c] sm:$0xe]
      %v6263 = vld [vmem:[%s5816 + $0xa8] sm:$0xe]
      %v6264 = vld [vmem:[%s5816 + $0xb4] sm:$0xe]
      %v6313 = vrot.slane %v6249, 5
      %v6314 = vrot.slane %v6313, 4
      %v6315 = vrot.slane %v5818, 5
      %v6316 = vsel %vm1547, %v6314, %v6315
      %v6317 = vrot.slane %v6315, 4
      %v6318 = vrot.slane %v5849, 5
      %v6319 = vsel %vm1547, %v6317, %v6318
      %v6320 = vrot.slane %v6250, 5
      %v6321 = vrot.slane %v6320, 4
      %v6322 = vrot.slane %v5820, 5
      %v6323 = vsel %vm1547, %v6321, %v6322
      %v6324 = vrot.slane %v6322, 4
      %v6325 = vrot.slane %v5850, 5
      %v6326 = vsel %vm1547, %v6324, %v6325
      %v6327 = vrot.slane %v6251, 5
      %v6328 = vrot.slane %v6327, 4
      %v6329 = vrot.slane %v5822, 5
      %v6330 = vsel %vm1547, %v6328, %v6329
      %v6331 = vrot.slane %v6329, 4
      %v6332 = vrot.slane %v5851, 5
      %v6333 = vsel %vm1547, %v6331, %v6332
      %v6334 = vrot.slane %v6252, 5
      %v6335 = vrot.slane %v6334, 4
      %v6336 = vrot.slane %v5824, 5
      %v6337 = vsel %vm1547, %v6335, %v6336
      %v6338 = vrot.slane %v6336, 4
      %v6339 = vrot.slane %v5852, 5
      %v6340 = vsel %vm1547, %v6338, %v6339
      %v6341 = vrot.slane %v6253, 5
      %v6342 = vrot.slane %v6341, 4
      %v6343 = vrot.slane %v5826, 5
      %v6344 = vsel %vm1547, %v6342, %v6343
      %v6345 = vrot.slane %v6343, 4
      %v6346 = vrot.slane %v5853, 5
      %v6347 = vsel %vm1547, %v6345, %v6346
      %v6348 = vrot.slane %v6254, 5
      %v6349 = vrot.slane %v6348, 4
      %v6350 = vrot.slane %v5828, 5
      %v6351 = vsel %vm1547, %v6349, %v6350
      %v6352 = vrot.slane %v6350, 4
      %v6353 = vrot.slane %v5854, 5
      %v6354 = vsel %vm1547, %v6352, %v6353
      %v6355 = vrot.slane %v6255, 5
      %v6356 = vrot.slane %v6355, 4
      %v6357 = vrot.slane %v5830, 5
      %v6358 = vsel %vm1547, %v6356, %v6357
      %v6359 = vrot.slane %v6357, 4
      %v6360 = vrot.slane %v5855, 5
      %v6361 = vsel %vm1547, %v6359, %v6360
      %v6362 = vrot.slane %v6256, 5
      %v6363 = vrot.slane %v6362, 4
      %v6364 = vrot.slane %v5832, 5
      %v6365 = vsel %vm1547, %v6363, %v6364
      %v6366 = vrot.slane %v6364, 4
      %v6367 = vrot.slane %v5856, 5
      %v6368 = vsel %vm1547, %v6366, %v6367
      %v6369 = vrot.slane %v6257, 5
      %v6370 = vrot.slane %v6369, 4
      %v6371 = vrot.slane %v5834, 5
      %v6372 = vsel %vm1547, %v6370, %v6371
      %v6373 = vrot.slane %v6371, 4
      %v6374 = vrot.slane %v5857, 5
      %v6375 = vsel %vm1547, %v6373, %v6374
      %v6376 = vrot.slane %v6258, 5
      %v6377 = vrot.slane %v6376, 4
      %v6378 = vrot.slane %v5836, 5
      %v6379 = vsel %vm1547, %v6377, %v6378
      %v6380 = vrot.slane %v6378, 4
      %v6381 = vrot.slane %v5858, 5
      %v6382 = vsel %vm1547, %v6380, %v6381
      %v6383 = vrot.slane %v6259, 5
      %v6384 = vrot.slane %v6383, 4
      %v6385 = vrot.slane %v5838, 5
      %v6386 = vsel %vm1547, %v6384, %v6385
      %v6387 = vrot.slane %v6385, 4
      %v6388 = vrot.slane %v5859, 5
      %v6389 = vsel %vm1547, %v6387, %v6388
      %v6390 = vrot.slane %v6260, 5
      %v6391 = vrot.slane %v6390, 4
      %v6392 = vrot.slane %v5840, 5
      %v6393 = vsel %vm1547, %v6391, %v6392
      %v6394 = vrot.slane %v6392, 4
      %v6395 = vrot.slane %v5860, 5
      %v6396 = vsel %vm1547, %v6394, %v6395
      %v6397 = vrot.slane %v6261, 5
      %v6398 = vrot.slane %v6397, 4
      %v6399 = vrot.slane %v5842, 5
      %v6400 = vsel %vm1547, %v6398, %v6399
      %v6401 = vrot.slane %v6399, 4
      %v6402 = vrot.slane %v5861, 5
      %v6403 = vsel %vm1547, %v6401, %v6402
      %v6404 = vrot.slane %v6262, 5
      %v6405 = vrot.slane %v6404, 4
      %v6406 = vrot.slane %v5844, 5
      %v6407 = vsel %vm1547, %v6405, %v6406
      %v6408 = vrot.slane %v6406, 4
      %v6409 = vrot.slane %v5862, 5
      %v6410 = vsel %vm1547, %v6408, %v6409
      %v6411 = vrot.slane %v6263, 5
      %v6412 = vrot.slane %v6411, 4
      %v6413 = vrot.slane %v5846, 5
      %v6414 = vsel %vm1547, %v6412, %v6413
      %v6415 = vrot.slane %v6413, 4
      %v6416 = vrot.slane %v5863, 5
      %v6417 = vsel %vm1547, %v6415, %v6416
      %v6418 = vrot.slane %v6264, 5
      %v6419 = vrot.slane %v6418, 4
      %v6420 = vrot.slane %v5848, 5
      %v6421 = vsel %vm1547, %v6419, %v6420
      %v6422 = vrot.slane %v6420, 4
      %v6423 = vrot.slane %v5864, 5
      %v6424 = vsel %vm1547, %v6422, %v6423
      %v6441 = vunpack.c.l.b16 %v4600
      %v6442 = vunpack.c.l.b16 %v4601
      %v6443 = vunpack.c.l.b16 %v4602
      %v6444 = vunpack.c.l.b16 %v4603
      %v6445 = vunpack.c.l.b16 %v4604
      %v6446 = vunpack.c.l.b16 %v4605
      %v6447 = vunpack.c.l.b16 %v4606
      %v6448 = vunpack.c.l.b16 %v4607
      %v6449 = vunpack.c.l.b16 %v4608
      %v6450 = vunpack.c.l.b16 %v4609
      %v6451 = vunpack.c.l.b16 %v4610
      %v6452 = vunpack.c.l.b16 %v4611
      %v6453 = vunpack.c.l.b16 %v4612
      %v6454 = vunpack.c.l.b16 %v4613
      %v6455 = vunpack.c.l.b16 %v4614
      %v6456 = vunpack.c.l.b16 %v4615
      %v6457 = vunpack.c.l.b16 %v4616
      %v6458 = vunpack.c.l.b16 %v4617
      %v6459 = vunpack.c.l.b16 %v4618
      %v6460 = vunpack.c.l.b16 %v4619
      %v6461 = vunpack.c.l.b16 %v4620
      %v6462 = vunpack.c.l.b16 %v4621
      %v6463 = vunpack.c.l.b16 %v4622
      %v6464 = vunpack.c.l.b16 %v4623
      %v6465 = vunpack.c.l.b16 %v4624
      %v6466 = vunpack.c.l.b16 %v4625
      %v6467 = vunpack.c.l.b16 %v4626
      %v6468 = vunpack.c.l.b16 %v4627
      %v6469 = vunpack.c.l.b16 %v4628
      %v6470 = vunpack.c.l.b16 %v4629
      %v6471 = vunpack.c.l.b16 %v4630
      %v6472 = vunpack.c.l.b16 %v4631
      %v6473 = vpack.c.b16 %v6442, %v6441
      %v6474 = vpack.c.b16 %v6444, %v6443
      %v6475 = vpack.c.b16 %v6446, %v6445
      %v6476 = vpack.c.b16 %v6448, %v6447
      %v6477 = vpack.c.b16 %v6450, %v6449
      %v6478 = vpack.c.b16 %v6452, %v6451
      %v6479 = vpack.c.b16 %v6454, %v6453
      %v6480 = vpack.c.b16 %v6456, %v6455
      %v6481 = vpack.c.b16 %v6458, %v6457
      %v6482 = vpack.c.b16 %v6460, %v6459
      %v6483 = vpack.c.b16 %v6462, %v6461
      %v6484 = vpack.c.b16 %v6464, %v6463
      %v6485 = vpack.c.b16 %v6466, %v6465
      %v6486 = vpack.c.b16 %v6468, %v6467
      %v6487 = vpack.c.b16 %v6470, %v6469
      %v6488 = vpack.c.b16 %v6472, %v6471
      %v6489 = vunpack.c.l.b16 %v4661
      %v6490 = vunpack.c.l.b16 %v4671
      %v6491 = vunpack.c.l.b16 %v4685
      %v6492 = vunpack.c.l.b16 %v4695
      %v6493 = vunpack.c.l.b16 %v4709
      %v6494 = vunpack.c.l.b16 %v4719
      %v6495 = vunpack.c.l.b16 %v4733
      %v6496 = vunpack.c.l.b16 %v4743
      %v6497 = vunpack.c.l.b16 %v4757
      %v6498 = vunpack.c.l.b16 %v4767
      %v6499 = vunpack.c.l.b16 %v4781
      %v6500 = vunpack.c.l.b16 %v4791
      %v6501 = vunpack.c.l.b16 %v4805
      %v6502 = vunpack.c.l.b16 %v4815
      %v6503 = vunpack.c.l.b16 %v4829
      %v6504 = vunpack.c.l.b16 %v4839
      %v6505 = vunpack.c.l.b16 %v4853
      %v6506 = vunpack.c.l.b16 %v4863
      %v6507 = vunpack.c.l.b16 %v4877
      %v6508 = vunpack.c.l.b16 %v4887
      %v6509 = vunpack.c.l.b16 %v4901
      %v6510 = vunpack.c.l.b16 %v4911
      %v6511 = vunpack.c.l.b16 %v4925
      %v6512 = vunpack.c.l.b16 %v4935
      %v6513 = vunpack.c.l.b16 %v4949
      %v6514 = vunpack.c.l.b16 %v4959
      %v6515 = vunpack.c.l.b16 %v4973
      %v6516 = vunpack.c.l.b16 %v4983
      %v6517 = vunpack.c.l.b16 %v4997
      %v6518 = vunpack.c.l.b16 %v5007
      %v6519 = vunpack.c.l.b16 %v5021
      %v6520 = vunpack.c.l.b16 %v5031
      %v6521 = vpack.c.b16 %v6490, %v6489
      %v6522 = vpack.c.b16 %v6492, %v6491
      %v6523 = vpack.c.b16 %v6494, %v6493
      %v6524 = vpack.c.b16 %v6496, %v6495
      %v6525 = vpack.c.b16 %v6498, %v6497
      %v6526 = vpack.c.b16 %v6500, %v6499
      %v6527 = vpack.c.b16 %v6502, %v6501
      %v6528 = vpack.c.b16 %v6504, %v6503
      %v6529 = vpack.c.b16 %v6506, %v6505
      %v6530 = vpack.c.b16 %v6508, %v6507
      %v6531 = vpack.c.b16 %v6510, %v6509
      %v6532 = vpack.c.b16 %v6512, %v6511
      %v6533 = vpack.c.b16 %v6514, %v6513
      %v6534 = vpack.c.b16 %v6516, %v6515
      %v6535 = vpack.c.b16 %v6518, %v6517
      %v6536 = vpack.c.b16 %v6520, %v6519
      %6537 = vrot.lane.b32.xlu0 %v6521, 8
      %v6538 = vpop.permute.xlu0 %6537
      %6539 = vrot.lane.b32.xlu0 %v6522, 8
      %v6540 = vpop.permute.xlu0 %6539
      %6541 = vrot.lane.b32.xlu0 %v6523, 8
      %v6542 = vpop.permute.xlu0 %6541
      %6543 = vrot.lane.b32.xlu0 %v6524, 8
      %v6544 = vpop.permute.xlu0 %6543
      %6545 = vrot.lane.b32.xlu0 %v6525, 8
      %v6546 = vpop.permute.xlu0 %6545
      %6547 = vrot.lane.b32.xlu0 %v6526, 8
      %v6548 = vpop.permute.xlu0 %6547
      %6549 = vrot.lane.b32.xlu0 %v6527, 8
      %v6550 = vpop.permute.xlu0 %6549
      %6551 = vrot.lane.b32.xlu0 %v6528, 8
      %v6552 = vpop.permute.xlu0 %6551
      %6553 = vrot.lane.b32.xlu0 %v6529, 8
      %v6554 = vpop.permute.xlu0 %6553
      %6555 = vrot.lane.b32.xlu0 %v6530, 8
      %v6556 = vpop.permute.xlu0 %6555
      %6557 = vrot.lane.b32.xlu0 %v6531, 8
      %v6558 = vpop.permute.xlu0 %6557
      %6559 = vrot.lane.b32.xlu0 %v6532, 8
      %v6560 = vpop.permute.xlu0 %6559
      %6561 = vrot.lane.b32.xlu0 %v6533, 8
      %v6562 = vpop.permute.xlu0 %6561
      %6563 = vrot.lane.b32.xlu0 %v6534, 8
      %v6564 = vpop.permute.xlu0 %6563
      %6565 = vrot.lane.b32.xlu0 %v6535, 8
      %v6566 = vpop.permute.xlu0 %6565
      %6567 = vrot.lane.b32.xlu0 %v6536, 8
      %v6568 = vpop.permute.xlu0 %6567
      %v6569 = vunpack.c.l.b16 %v5099
      %v6570 = vunpack.c.l.b16 %v5102
      %v6571 = vunpack.c.l.b16 %v5106
      %v6572 = vunpack.c.l.b16 %v5109
      %v6573 = vunpack.c.l.b16 %v5113
      %v6574 = vunpack.c.l.b16 %v5116
      %v6575 = vunpack.c.l.b16 %v5120
      %v6576 = vunpack.c.l.b16 %v5123
      %v6577 = vunpack.c.l.b16 %v5127
      %v6578 = vunpack.c.l.b16 %v5130
      %v6579 = vunpack.c.l.b16 %v5134
      %v6580 = vunpack.c.l.b16 %v5137
      %v6581 = vunpack.c.l.b16 %v5141
      %v6582 = vunpack.c.l.b16 %v5144
      %v6583 = vunpack.c.l.b16 %v5148
      %v6584 = vunpack.c.l.b16 %v5151
      %v6585 = vunpack.c.l.b16 %v5155
      %v6586 = vunpack.c.l.b16 %v5158
      %v6587 = vunpack.c.l.b16 %v5162
      %v6588 = vunpack.c.l.b16 %v5165
      %v6589 = vunpack.c.l.b16 %v5169
      %v6590 = vunpack.c.l.b16 %v5172
      %v6591 = vunpack.c.l.b16 %v5176
      %v6592 = vunpack.c.l.b16 %v5179
      %v6593 = vunpack.c.l.b16 %v5183
      %v6594 = vunpack.c.l.b16 %v5186
      %v6595 = vunpack.c.l.b16 %v5190
      %v6596 = vunpack.c.l.b16 %v5193
      %v6597 = vunpack.c.l.b16 %v5197
      %v6598 = vunpack.c.l.b16 %v5200
      %v6599 = vunpack.c.l.b16 %v5204
      %v6600 = vunpack.c.l.b16 %v5207
      %v6601 = vpack.c.b16 %v6570, %v6569
      %v6602 = vpack.c.b16 %v6572, %v6571
      %v6603 = vpack.c.b16 %v6574, %v6573
      %v6604 = vpack.c.b16 %v6576, %v6575
      %v6605 = vpack.c.b16 %v6578, %v6577
      %v6606 = vpack.c.b16 %v6580, %v6579
      %v6607 = vpack.c.b16 %v6582, %v6581
      %v6608 = vpack.c.b16 %v6584, %v6583
      %v6609 = vpack.c.b16 %v6586, %v6585
      %v6610 = vpack.c.b16 %v6588, %v6587
      %v6611 = vpack.c.b16 %v6590, %v6589
      %v6612 = vpack.c.b16 %v6592, %v6591
      %v6613 = vpack.c.b16 %v6594, %v6593
      %v6614 = vpack.c.b16 %v6596, %v6595
      %v6615 = vpack.c.b16 %v6598, %v6597
      %v6616 = vpack.c.b16 %v6600, %v6599
      %6617 = vrot.lane.b32.xlu0 %v6601, 16
      %v6618 = vpop.permute.xlu0 %6617
      %6619 = vrot.lane.b32.xlu0 %v6602, 16
      %v6620 = vpop.permute.xlu0 %6619
      %6621 = vrot.lane.b32.xlu0 %v6603, 16
      %v6622 = vpop.permute.xlu0 %6621
      %6623 = vrot.lane.b32.xlu0 %v6604, 16
      %v6624 = vpop.permute.xlu0 %6623
      %6625 = vrot.lane.b32.xlu0 %v6605, 16
      %v6626 = vpop.permute.xlu0 %6625
      %6627 = vrot.lane.b32.xlu0 %v6606, 16
      %v6628 = vpop.permute.xlu0 %6627
      %6629 = vrot.lane.b32.xlu0 %v6607, 16
      %v6630 = vpop.permute.xlu0 %6629
      %6631 = vrot.lane.b32.xlu0 %v6608, 16
      %v6632 = vpop.permute.xlu0 %6631
      %6633 = vrot.lane.b32.xlu0 %v6609, 16
      %v6634 = vpop.permute.xlu0 %6633
      %6635 = vrot.lane.b32.xlu0 %v6610, 16
      %v6636 = vpop.permute.xlu0 %6635
      %6637 = vrot.lane.b32.xlu0 %v6611, 16
      %v6638 = vpop.permute.xlu0 %6637
      %6639 = vrot.lane.b32.xlu0 %v6612, 16
      %v6640 = vpop.permute.xlu0 %6639
      %6641 = vrot.lane.b32.xlu0 %v6613, 16
      %v6642 = vpop.permute.xlu0 %6641
      %6643 = vrot.lane.b32.xlu0 %v6614, 16
      %v6644 = vpop.permute.xlu0 %6643
      %6645 = vrot.lane.b32.xlu0 %v6615, 16
      %v6646 = vpop.permute.xlu0 %6645
      %6647 = vrot.lane.b32.xlu0 %v6616, 16
      %v6648 = vpop.permute.xlu0 %6647
      %v6665 = vunpack.c.l.b16 %v5208
      %v6666 = vunpack.c.l.b16 %v5209
      %v6667 = vunpack.c.l.b16 %v5210
      %v6668 = vunpack.c.l.b16 %v5211
      %v6669 = vunpack.c.l.b16 %v5212
      %v6670 = vunpack.c.l.b16 %v5213
      %v6671 = vunpack.c.l.b16 %v5214
      %v6672 = vunpack.c.l.b16 %v5215
      %v6673 = vunpack.c.l.b16 %v5216
      %v6674 = vunpack.c.l.b16 %v5217
      %v6675 = vunpack.c.l.b16 %v5218
      %v6676 = vunpack.c.l.b16 %v5219
      %v6677 = vunpack.c.l.b16 %v5220
      %v6678 = vunpack.c.l.b16 %v5221
      %v6679 = vunpack.c.l.b16 %v5222
      %v6680 = vunpack.c.l.b16 %v5223
      %v6681 = vunpack.c.l.b16 %v5224
      %v6682 = vunpack.c.l.b16 %v5225
      %v6683 = vunpack.c.l.b16 %v5226
      %v6684 = vunpack.c.l.b16 %v5227
      %v6685 = vunpack.c.l.b16 %v5228
      %v6686 = vunpack.c.l.b16 %v5229
      %v6687 = vunpack.c.l.b16 %v5230
      %v6688 = vunpack.c.l.b16 %v5231
      %v6689 = vunpack.c.l.b16 %v5232
      %v6690 = vunpack.c.l.b16 %v5233
      %v6691 = vunpack.c.l.b16 %v5234
      %v6692 = vunpack.c.l.b16 %v5235
      %v6693 = vunpack.c.l.b16 %v5236
      %v6694 = vunpack.c.l.b16 %v5237
      %v6695 = vunpack.c.l.b16 %v5238
      %v6696 = vunpack.c.l.b16 %v5239
      %v6697 = vpack.c.b16 %v6666, %v6665
      %v6698 = vpack.c.b16 %v6668, %v6667
      %v6699 = vpack.c.b16 %v6670, %v6669
      %v6700 = vpack.c.b16 %v6672, %v6671
      %v6701 = vpack.c.b16 %v6674, %v6673
      %v6702 = vpack.c.b16 %v6676, %v6675
      %v6703 = vpack.c.b16 %v6678, %v6677
      %v6704 = vpack.c.b16 %v6680, %v6679
      %v6705 = vpack.c.b16 %v6682, %v6681
      %v6706 = vpack.c.b16 %v6684, %v6683
      %v6707 = vpack.c.b16 %v6686, %v6685
      %v6708 = vpack.c.b16 %v6688, %v6687
      %v6709 = vpack.c.b16 %v6690, %v6689
      %v6710 = vpack.c.b16 %v6692, %v6691
      %v6711 = vpack.c.b16 %v6694, %v6693
      %v6712 = vpack.c.b16 %v6696, %v6695
      %6713 = vrot.lane.b32.xlu0 %v6697, 24
      %v6714 = vpop.permute.xlu0 %6713
      %6715 = vrot.lane.b32.xlu0 %v6698, 24
      %v6716 = vpop.permute.xlu0 %6715
      %6717 = vrot.lane.b32.xlu0 %v6699, 24
      %v6718 = vpop.permute.xlu0 %6717
      %6719 = vrot.lane.b32.xlu0 %v6700, 24
      %v6720 = vpop.permute.xlu0 %6719
      %6721 = vrot.lane.b32.xlu0 %v6701, 24
      %v6722 = vpop.permute.xlu0 %6721
      %6723 = vrot.lane.b32.xlu0 %v6702, 24
      %v6724 = vpop.permute.xlu0 %6723
      %6725 = vrot.lane.b32.xlu0 %v6703, 24
      %v6726 = vpop.permute.xlu0 %6725
      %6727 = vrot.lane.b32.xlu0 %v6704, 24
      %v6728 = vpop.permute.xlu0 %6727
      %6729 = vrot.lane.b32.xlu0 %v6705, 24
      %v6730 = vpop.permute.xlu0 %6729
      %6731 = vrot.lane.b32.xlu0 %v6706, 24
      %v6732 = vpop.permute.xlu0 %6731
      %6733 = vrot.lane.b32.xlu0 %v6707, 24
      %v6734 = vpop.permute.xlu0 %6733
      %6735 = vrot.lane.b32.xlu0 %v6708, 24
      %v6736 = vpop.permute.xlu0 %6735
      %6737 = vrot.lane.b32.xlu0 %v6709, 24
      %v6738 = vpop.permute.xlu0 %6737
      %6739 = vrot.lane.b32.xlu0 %v6710, 24
      %v6740 = vpop.permute.xlu0 %6739
      %6741 = vrot.lane.b32.xlu0 %v6711, 24
      %v6742 = vpop.permute.xlu0 %6741
      %6743 = vrot.lane.b32.xlu0 %v6712, 24
      %v6744 = vpop.permute.xlu0 %6743
      %v6745 = vunpack.c.l.b16 %v5269
      %v6746 = vunpack.c.l.b16 %v5279
      %v6747 = vunpack.c.l.b16 %v5293
      %v6748 = vunpack.c.l.b16 %v5303
      %v6749 = vunpack.c.l.b16 %v5317
      %v6750 = vunpack.c.l.b16 %v5327
      %v6751 = vunpack.c.l.b16 %v5341
      %v6752 = vunpack.c.l.b16 %v5351
      %v6753 = vunpack.c.l.b16 %v5365
      %v6754 = vunpack.c.l.b16 %v5375
      %v6755 = vunpack.c.l.b16 %v5389
      %v6756 = vunpack.c.l.b16 %v5399
      %v6757 = vunpack.c.l.b16 %v5413
      %v6758 = vunpack.c.l.b16 %v5423
      %v6759 = vunpack.c.l.b16 %v5437
      %v6760 = vunpack.c.l.b16 %v5447
      %v6761 = vunpack.c.l.b16 %v5461
      %v6762 = vunpack.c.l.b16 %v5471
      %v6763 = vunpack.c.l.b16 %v5485
      %v6764 = vunpack.c.l.b16 %v5495
      %v6765 = vunpack.c.l.b16 %v5509
      %v6766 = vunpack.c.l.b16 %v5519
      %v6767 = vunpack.c.l.b16 %v5533
      %v6768 = vunpack.c.l.b16 %v5543
      %v6769 = vunpack.c.l.b16 %v5557
      %v6770 = vunpack.c.l.b16 %v5567
      %v6771 = vunpack.c.l.b16 %v5581
      %v6772 = vunpack.c.l.b16 %v5591
      %v6773 = vunpack.c.l.b16 %v5605
      %v6774 = vunpack.c.l.b16 %v5615
      %v6775 = vunpack.c.l.b16 %v5629
      %v6776 = vunpack.c.l.b16 %v5639
      %v6777 = vpack.c.b16 %v6746, %v6745
      %v6778 = vpack.c.b16 %v6748, %v6747
      %v6779 = vpack.c.b16 %v6750, %v6749
      %v6780 = vpack.c.b16 %v6752, %v6751
      %v6781 = vpack.c.b16 %v6754, %v6753
      %v6782 = vpack.c.b16 %v6756, %v6755
      %v6783 = vpack.c.b16 %v6758, %v6757
      %v6784 = vpack.c.b16 %v6760, %v6759
      %v6785 = vpack.c.b16 %v6762, %v6761
      %v6786 = vpack.c.b16 %v6764, %v6763
      %v6787 = vpack.c.b16 %v6766, %v6765
      %v6788 = vpack.c.b16 %v6768, %v6767
      %v6789 = vpack.c.b16 %v6770, %v6769
      %v6790 = vpack.c.b16 %v6772, %v6771
      %v6791 = vpack.c.b16 %v6774, %v6773
      %v6792 = vpack.c.b16 %v6776, %v6775
      %6793 = vrot.lane.b32.xlu0 %v6777, 32
      %v6794 = vpop.permute.xlu0 %6793
      %6795 = vrot.lane.b32.xlu0 %v6778, 32
      %v6796 = vpop.permute.xlu0 %6795
      %6797 = vrot.lane.b32.xlu0 %v6779, 32
      %v6798 = vpop.permute.xlu0 %6797
      %6799 = vrot.lane.b32.xlu0 %v6780, 32
      %v6800 = vpop.permute.xlu0 %6799
      %6801 = vrot.lane.b32.xlu0 %v6781, 32
      %v6802 = vpop.permute.xlu0 %6801
      %6803 = vrot.lane.b32.xlu0 %v6782, 32
      %v6804 = vpop.permute.xlu0 %6803
      %6805 = vrot.lane.b32.xlu0 %v6783, 32
      %v6806 = vpop.permute.xlu0 %6805
      %6807 = vrot.lane.b32.xlu0 %v6784, 32
      %v6808 = vpop.permute.xlu0 %6807
      %6809 = vrot.lane.b32.xlu0 %v6785, 32
      %v6810 = vpop.permute.xlu0 %6809
      %6811 = vrot.lane.b32.xlu0 %v6786, 32
      %v6812 = vpop.permute.xlu0 %6811
      %6813 = vrot.lane.b32.xlu0 %v6787, 32
      %v6814 = vpop.permute.xlu0 %6813
      %6815 = vrot.lane.b32.xlu0 %v6788, 32
      %v6816 = vpop.permute.xlu0 %6815
      %6817 = vrot.lane.b32.xlu0 %v6789, 32
      %v6818 = vpop.permute.xlu0 %6817
      %6819 = vrot.lane.b32.xlu0 %v6790, 32
      %v6820 = vpop.permute.xlu0 %6819
      %6821 = vrot.lane.b32.xlu0 %v6791, 32
      %v6822 = vpop.permute.xlu0 %6821
      %6823 = vrot.lane.b32.xlu0 %v6792, 32
      %v6824 = vpop.permute.xlu0 %6823
      %v6825 = vunpack.c.l.b16 %v5707
      %v6826 = vunpack.c.l.b16 %v5710
      %v6827 = vunpack.c.l.b16 %v5714
      %v6828 = vunpack.c.l.b16 %v5717
      %v6829 = vunpack.c.l.b16 %v5721
      %v6830 = vunpack.c.l.b16 %v5724
      %v6831 = vunpack.c.l.b16 %v5728
      %v6832 = vunpack.c.l.b16 %v5731
      %v6833 = vunpack.c.l.b16 %v5735
      %v6834 = vunpack.c.l.b16 %v5738
      %v6835 = vunpack.c.l.b16 %v5742
      %v6836 = vunpack.c.l.b16 %v5745
      %v6837 = vunpack.c.l.b16 %v5749
      %v6838 = vunpack.c.l.b16 %v5752
      %v6839 = vunpack.c.l.b16 %v5756
      %v6840 = vunpack.c.l.b16 %v5759
      %v6841 = vunpack.c.l.b16 %v5763
      %v6842 = vunpack.c.l.b16 %v5766
      %v6843 = vunpack.c.l.b16 %v5770
      %v6844 = vunpack.c.l.b16 %v5773
      %v6845 = vunpack.c.l.b16 %v5777
      %v6846 = vunpack.c.l.b16 %v5780
      %v6847 = vunpack.c.l.b16 %v5784
      %v6848 = vunpack.c.l.b16 %v5787
      %v6849 = vunpack.c.l.b16 %v5791
      %v6850 = vunpack.c.l.b16 %v5794
      %v6851 = vunpack.c.l.b16 %v5798
      %v6852 = vunpack.c.l.b16 %v5801
      %v6853 = vunpack.c.l.b16 %v5805
      %v6854 = vunpack.c.l.b16 %v5808
      %v6855 = vunpack.c.l.b16 %v5812
      %v6856 = vunpack.c.l.b16 %v5815
      %v6857 = vpack.c.b16 %v6826, %v6825
      %v6858 = vpack.c.b16 %v6828, %v6827
      %v6859 = vpack.c.b16 %v6830, %v6829
      %v6860 = vpack.c.b16 %v6832, %v6831
      %v6861 = vpack.c.b16 %v6834, %v6833
      %v6862 = vpack.c.b16 %v6836, %v6835
      %v6863 = vpack.c.b16 %v6838, %v6837
      %v6864 = vpack.c.b16 %v6840, %v6839
      %v6865 = vpack.c.b16 %v6842, %v6841
      %v6866 = vpack.c.b16 %v6844, %v6843
      %v6867 = vpack.c.b16 %v6846, %v6845
      %v6868 = vpack.c.b16 %v6848, %v6847
      %v6869 = vpack.c.b16 %v6850, %v6849
      %v6870 = vpack.c.b16 %v6852, %v6851
      %v6871 = vpack.c.b16 %v6854, %v6853
      %v6872 = vpack.c.b16 %v6856, %v6855
      %6873 = vrot.lane.b32.xlu0 %v6857, 40
      %v6874 = vpop.permute.xlu0 %6873
      %6875 = vrot.lane.b32.xlu0 %v6858, 40
      %v6876 = vpop.permute.xlu0 %6875
      %6877 = vrot.lane.b32.xlu0 %v6859, 40
      %v6878 = vpop.permute.xlu0 %6877
      %6879 = vrot.lane.b32.xlu0 %v6860, 40
      %v6880 = vpop.permute.xlu0 %6879
      %6881 = vrot.lane.b32.xlu0 %v6861, 40
      %v6882 = vpop.permute.xlu0 %6881
      %6883 = vrot.lane.b32.xlu0 %v6862, 40
      %v6884 = vpop.permute.xlu0 %6883
      %6885 = vrot.lane.b32.xlu0 %v6863, 40
      %v6886 = vpop.permute.xlu0 %6885
      %6887 = vrot.lane.b32.xlu0 %v6864, 40
      %v6888 = vpop.permute.xlu0 %6887
      %6889 = vrot.lane.b32.xlu0 %v6865, 40
      %v6890 = vpop.permute.xlu0 %6889
      %6891 = vrot.lane.b32.xlu0 %v6866, 40
      %v6892 = vpop.permute.xlu0 %6891
      %6893 = vrot.lane.b32.xlu0 %v6867, 40
      %v6894 = vpop.permute.xlu0 %6893
      %6895 = vrot.lane.b32.xlu0 %v6868, 40
      %v6896 = vpop.permute.xlu0 %6895
      %6897 = vrot.lane.b32.xlu0 %v6869, 40
      %v6898 = vpop.permute.xlu0 %6897
      %6899 = vrot.lane.b32.xlu0 %v6870, 40
      %v6900 = vpop.permute.xlu0 %6899
      %6901 = vrot.lane.b32.xlu0 %v6871, 40
      %v6902 = vpop.permute.xlu0 %6901
      %6903 = vrot.lane.b32.xlu0 %v6872, 40
      %v6904 = vpop.permute.xlu0 %6903
      %v6921 = vunpack.c.l.b16 %v5817
      %v6922 = vunpack.c.l.b16 %v5818
      %v6923 = vunpack.c.l.b16 %v5819
      %v6924 = vunpack.c.l.b16 %v5820
      %v6925 = vunpack.c.l.b16 %v5821
      %v6926 = vunpack.c.l.b16 %v5822
      %v6927 = vunpack.c.l.b16 %v5823
      %v6928 = vunpack.c.l.b16 %v5824
      %v6929 = vunpack.c.l.b16 %v5825
      %v6930 = vunpack.c.l.b16 %v5826
      %v6931 = vunpack.c.l.b16 %v5827
      %v6932 = vunpack.c.l.b16 %v5828
      %v6933 = vunpack.c.l.b16 %v5829
      %v6934 = vunpack.c.l.b16 %v5830
      %v6935 = vunpack.c.l.b16 %v5831
      %v6936 = vunpack.c.l.b16 %v5832
      %v6937 = vunpack.c.l.b16 %v5833
      %v6938 = vunpack.c.l.b16 %v5834
      %v6939 = vunpack.c.l.b16 %v5835
      %v6940 = vunpack.c.l.b16 %v5836
      %v6941 = vunpack.c.l.b16 %v5837
      %v6942 = vunpack.c.l.b16 %v5838
      %v6943 = vunpack.c.l.b16 %v5839
      %v6944 = vunpack.c.l.b16 %v5840
      %v6945 = vunpack.c.l.b16 %v5841
      %v6946 = vunpack.c.l.b16 %v5842
      %v6947 = vunpack.c.l.b16 %v5843
      %v6948 = vunpack.c.l.b16 %v5844
      %v6949 = vunpack.c.l.b16 %v5845
      %v6950 = vunpack.c.l.b16 %v5846
      %v6951 = vunpack.c.l.b16 %v5847
      %v6952 = vunpack.c.l.b16 %v5848
      %v6953 = vpack.c.b16 %v6922, %v6921
      %v6954 = vpack.c.b16 %v6924, %v6923
      %v6955 = vpack.c.b16 %v6926, %v6925
      %v6956 = vpack.c.b16 %v6928, %v6927
      %v6957 = vpack.c.b16 %v6930, %v6929
      %v6958 = vpack.c.b16 %v6932, %v6931
      %v6959 = vpack.c.b16 %v6934, %v6933
      %v6960 = vpack.c.b16 %v6936, %v6935
      %v6961 = vpack.c.b16 %v6938, %v6937
      %v6962 = vpack.c.b16 %v6940, %v6939
      %v6963 = vpack.c.b16 %v6942, %v6941
      %v6964 = vpack.c.b16 %v6944, %v6943
      %v6965 = vpack.c.b16 %v6946, %v6945
      %v6966 = vpack.c.b16 %v6948, %v6947
      %v6967 = vpack.c.b16 %v6950, %v6949
      %v6968 = vpack.c.b16 %v6952, %v6951
      %6969 = vrot.lane.b32.xlu0 %v6953, 48
      %v6970 = vpop.permute.xlu0 %6969
      %6971 = vrot.lane.b32.xlu0 %v6954, 48
      %v6972 = vpop.permute.xlu0 %6971
      %6973 = vrot.lane.b32.xlu0 %v6955, 48
      %v6974 = vpop.permute.xlu0 %6973
      %6975 = vrot.lane.b32.xlu0 %v6956, 48
      %v6976 = vpop.permute.xlu0 %6975
      %6977 = vrot.lane.b32.xlu0 %v6957, 48
      %v6978 = vpop.permute.xlu0 %6977
      %6979 = vrot.lane.b32.xlu0 %v6958, 48
      %v6980 = vpop.permute.xlu0 %6979
      %6981 = vrot.lane.b32.xlu0 %v6959, 48
      %v6982 = vpop.permute.xlu0 %6981
      %6983 = vrot.lane.b32.xlu0 %v6960, 48
      %v6984 = vpop.permute.xlu0 %6983
      %6985 = vrot.lane.b32.xlu0 %v6961, 48
      %v6986 = vpop.permute.xlu0 %6985
      %6987 = vrot.lane.b32.xlu0 %v6962, 48
      %v6988 = vpop.permute.xlu0 %6987
      %6989 = vrot.lane.b32.xlu0 %v6963, 48
      %v6990 = vpop.permute.xlu0 %6989
      %6991 = vrot.lane.b32.xlu0 %v6964, 48
      %v6992 = vpop.permute.xlu0 %6991
      %6993 = vrot.lane.b32.xlu0 %v6965, 48
      %v6994 = vpop.permute.xlu0 %6993
      %6995 = vrot.lane.b32.xlu0 %v6966, 48
      %v6996 = vpop.permute.xlu0 %6995
      %6997 = vrot.lane.b32.xlu0 %v6967, 48
      %v6998 = vpop.permute.xlu0 %6997
      %6999 = vrot.lane.b32.xlu0 %v6968, 48
      %v7000 = vpop.permute.xlu0 %6999
      %v7001 = vunpack.c.l.b16 %v5878
      %v7002 = vunpack.c.l.b16 %v5888
      %v7003 = vunpack.c.l.b16 %v5902
      %v7004 = vunpack.c.l.b16 %v5912
      %v7005 = vunpack.c.l.b16 %v5926
      %v7006 = vunpack.c.l.b16 %v5936
      %v7007 = vunpack.c.l.b16 %v5950
      %v7008 = vunpack.c.l.b16 %v5960
      %v7009 = vunpack.c.l.b16 %v5974
      %v7010 = vunpack.c.l.b16 %v5984
      %v7011 = vunpack.c.l.b16 %v5998
      %v7012 = vunpack.c.l.b16 %v6008
      %v7013 = vunpack.c.l.b16 %v6022
      %v7014 = vunpack.c.l.b16 %v6032
      %v7015 = vunpack.c.l.b16 %v6046
      %v7016 = vunpack.c.l.b16 %v6056
      %v7017 = vunpack.c.l.b16 %v6070
      %v7018 = vunpack.c.l.b16 %v6080
      %v7019 = vunpack.c.l.b16 %v6094
      %v7020 = vunpack.c.l.b16 %v6104
      %v7021 = vunpack.c.l.b16 %v6118
      %v7022 = vunpack.c.l.b16 %v6128
      %v7023 = vunpack.c.l.b16 %v6142
      %v7024 = vunpack.c.l.b16 %v6152
      %v7025 = vunpack.c.l.b16 %v6166
      %v7026 = vunpack.c.l.b16 %v6176
      %v7027 = vunpack.c.l.b16 %v6190
      %v7028 = vunpack.c.l.b16 %v6200
      %v7029 = vunpack.c.l.b16 %v6214
      %v7030 = vunpack.c.l.b16 %v6224
      %v7031 = vunpack.c.l.b16 %v6238
      %v7032 = vunpack.c.l.b16 %v6248
      %v7033 = vpack.c.b16 %v7002, %v7001
      %v7034 = vpack.c.b16 %v7004, %v7003
      %v7035 = vpack.c.b16 %v7006, %v7005
      %v7036 = vpack.c.b16 %v7008, %v7007
      %v7037 = vpack.c.b16 %v7010, %v7009
      %v7038 = vpack.c.b16 %v7012, %v7011
      %v7039 = vpack.c.b16 %v7014, %v7013
      %v7040 = vpack.c.b16 %v7016, %v7015
      %v7041 = vpack.c.b16 %v7018, %v7017
      %v7042 = vpack.c.b16 %v7020, %v7019
      %v7043 = vpack.c.b16 %v7022, %v7021
      %v7044 = vpack.c.b16 %v7024, %v7023
      %v7045 = vpack.c.b16 %v7026, %v7025
      %v7046 = vpack.c.b16 %v7028, %v7027
      %v7047 = vpack.c.b16 %v7030, %v7029
      %v7048 = vpack.c.b16 %v7032, %v7031
      %7049 = vrot.lane.b32.xlu0 %v7033, 56
      %v7050 = vpop.permute.xlu0 %7049
      %7051 = vrot.lane.b32.xlu0 %v7034, 56
      %v7052 = vpop.permute.xlu0 %7051
      %7053 = vrot.lane.b32.xlu0 %v7035, 56
      %v7054 = vpop.permute.xlu0 %7053
      %7055 = vrot.lane.b32.xlu0 %v7036, 56
      %v7056 = vpop.permute.xlu0 %7055
      %7057 = vrot.lane.b32.xlu0 %v7037, 56
      %v7058 = vpop.permute.xlu0 %7057
      %7059 = vrot.lane.b32.xlu0 %v7038, 56
      %v7060 = vpop.permute.xlu0 %7059
      %7061 = vrot.lane.b32.xlu0 %v7039, 56
      %v7062 = vpop.permute.xlu0 %7061
      %7063 = vrot.lane.b32.xlu0 %v7040, 56
      %v7064 = vpop.permute.xlu0 %7063
      %7065 = vrot.lane.b32.xlu0 %v7041, 56
      %v7066 = vpop.permute.xlu0 %7065
      %7067 = vrot.lane.b32.xlu0 %v7042, 56
      %v7068 = vpop.permute.xlu0 %7067
      %7069 = vrot.lane.b32.xlu0 %v7043, 56
      %v7070 = vpop.permute.xlu0 %7069
      %7071 = vrot.lane.b32.xlu0 %v7044, 56
      %v7072 = vpop.permute.xlu0 %7071
      %7073 = vrot.lane.b32.xlu0 %v7045, 56
      %v7074 = vpop.permute.xlu0 %7073
      %7075 = vrot.lane.b32.xlu0 %v7046, 56
      %v7076 = vpop.permute.xlu0 %7075
      %7077 = vrot.lane.b32.xlu0 %v7047, 56
      %v7078 = vpop.permute.xlu0 %7077
      %7079 = vrot.lane.b32.xlu0 %v7048, 56
      %v7080 = vpop.permute.xlu0 %7079
      %v7081 = vunpack.c.l.b16 %v6316
      %v7082 = vunpack.c.l.b16 %v6319
      %v7083 = vunpack.c.l.b16 %v6323
      %v7084 = vunpack.c.l.b16 %v6326
      %v7085 = vunpack.c.l.b16 %v6330
      %v7086 = vunpack.c.l.b16 %v6333
      %v7087 = vunpack.c.l.b16 %v6337
      %v7088 = vunpack.c.l.b16 %v6340
      %v7089 = vunpack.c.l.b16 %v6344
      %v7090 = vunpack.c.l.b16 %v6347
      %v7091 = vunpack.c.l.b16 %v6351
      %v7092 = vunpack.c.l.b16 %v6354
      %v7093 = vunpack.c.l.b16 %v6358
      %v7094 = vunpack.c.l.b16 %v6361
      %v7095 = vunpack.c.l.b16 %v6365
      %v7096 = vunpack.c.l.b16 %v6368
      %v7097 = vunpack.c.l.b16 %v6372
      %v7098 = vunpack.c.l.b16 %v6375
      %v7099 = vunpack.c.l.b16 %v6379
      %v7100 = vunpack.c.l.b16 %v6382
      %v7101 = vunpack.c.l.b16 %v6386
      %v7102 = vunpack.c.l.b16 %v6389
      %v7103 = vunpack.c.l.b16 %v6393
      %v7104 = vunpack.c.l.b16 %v6396
      %v7105 = vunpack.c.l.b16 %v6400
      %v7106 = vunpack.c.l.b16 %v6403
      %v7107 = vunpack.c.l.b16 %v6407
      %v7108 = vunpack.c.l.b16 %v6410
      %v7109 = vunpack.c.l.b16 %v6414
      %v7110 = vunpack.c.l.b16 %v6417
      %v7111 = vunpack.c.l.b16 %v6421
      %v7112 = vunpack.c.l.b16 %v6424
      %v7113 = vpack.c.b16 %v7082, %v7081
      %v7114 = vpack.c.b16 %v7084, %v7083
      %v7115 = vpack.c.b16 %v7086, %v7085
      %v7116 = vpack.c.b16 %v7088, %v7087
      %v7117 = vpack.c.b16 %v7090, %v7089
      %v7118 = vpack.c.b16 %v7092, %v7091
      %v7119 = vpack.c.b16 %v7094, %v7093
      %v7120 = vpack.c.b16 %v7096, %v7095
      %v7121 = vpack.c.b16 %v7098, %v7097
      %v7122 = vpack.c.b16 %v7100, %v7099
      %v7123 = vpack.c.b16 %v7102, %v7101
      %v7124 = vpack.c.b16 %v7104, %v7103
      %v7125 = vpack.c.b16 %v7106, %v7105
      %v7126 = vpack.c.b16 %v7108, %v7107
      %v7127 = vpack.c.b16 %v7110, %v7109
      %v7128 = vpack.c.b16 %v7112, %v7111
      %7129 = vrot.lane.b32.xlu0 %v7113, 64
      %v7130 = vpop.permute.xlu0 %7129
      %7131 = vrot.lane.b32.xlu0 %v7114, 64
      %v7132 = vpop.permute.xlu0 %7131
      %7133 = vrot.lane.b32.xlu0 %v7115, 64
      %v7134 = vpop.permute.xlu0 %7133
      %7135 = vrot.lane.b32.xlu0 %v7116, 64
      %v7136 = vpop.permute.xlu0 %7135
      %7137 = vrot.lane.b32.xlu0 %v7117, 64
      %v7138 = vpop.permute.xlu0 %7137
      %7139 = vrot.lane.b32.xlu0 %v7118, 64
      %v7140 = vpop.permute.xlu0 %7139
      %7141 = vrot.lane.b32.xlu0 %v7119, 64
      %v7142 = vpop.permute.xlu0 %7141
      %7143 = vrot.lane.b32.xlu0 %v7120, 64
      %v7144 = vpop.permute.xlu0 %7143
      %7145 = vrot.lane.b32.xlu0 %v7121, 64
      %v7146 = vpop.permute.xlu0 %7145
      %7147 = vrot.lane.b32.xlu0 %v7122, 64
      %v7148 = vpop.permute.xlu0 %7147
      %7149 = vrot.lane.b32.xlu0 %v7123, 64
      %v7150 = vpop.permute.xlu0 %7149
      %7151 = vrot.lane.b32.xlu0 %v7124, 64
      %v7152 = vpop.permute.xlu0 %7151
      %7153 = vrot.lane.b32.xlu0 %v7125, 64
      %v7154 = vpop.permute.xlu0 %7153
      %7155 = vrot.lane.b32.xlu0 %v7126, 64
      %v7156 = vpop.permute.xlu0 %7155
      %7157 = vrot.lane.b32.xlu0 %v7127, 64
      %v7158 = vpop.permute.xlu0 %7157
      %7159 = vrot.lane.b32.xlu0 %v7128, 64
      %v7160 = vpop.permute.xlu0 %7159
      %v7163 = vsel %vm3662, %v6473, %v6538
      %v7166 = vsel %vm3662, %v6474, %v6540
      %v7169 = vsel %vm3662, %v6475, %v6542
      %v7172 = vsel %vm3662, %v6476, %v6544
      %v7175 = vsel %vm3662, %v6477, %v6546
      %v7178 = vsel %vm3662, %v6478, %v6548
      %v7181 = vsel %vm3662, %v6479, %v6550
      %v7184 = vsel %vm3662, %v6480, %v6552
      %v7187 = vsel %vm3662, %v6481, %v6554
      %v7190 = vsel %vm3662, %v6482, %v6556
      %v7193 = vsel %vm3662, %v6483, %v6558
      %v7196 = vsel %vm3662, %v6484, %v6560
      %v7199 = vsel %vm3662, %v6485, %v6562
      %v7202 = vsel %vm3662, %v6486, %v6564
      %v7205 = vsel %vm3662, %v6487, %v6566
      %v7208 = vsel %vm3662, %v6488, %v6568
      %v7210 = vsel %vm3728, %v7163, %v6618
      %v7212 = vsel %vm3728, %v7166, %v6620
      %v7214 = vsel %vm3728, %v7169, %v6622
      %v7216 = vsel %vm3728, %v7172, %v6624
      %v7218 = vsel %vm3728, %v7175, %v6626
      %v7220 = vsel %vm3728, %v7178, %v6628
      %v7222 = vsel %vm3728, %v7181, %v6630
      %v7224 = vsel %vm3728, %v7184, %v6632
      %v7226 = vsel %vm3728, %v7187, %v6634
      %v7228 = vsel %vm3728, %v7190, %v6636
      %v7230 = vsel %vm3728, %v7193, %v6638
      %v7232 = vsel %vm3728, %v7196, %v6640
      %v7234 = vsel %vm3728, %v7199, %v6642
      %v7236 = vsel %vm3728, %v7202, %v6644
      %v7238 = vsel %vm3728, %v7205, %v6646
      %v7240 = vsel %vm3728, %v7208, %v6648
      %v7242 = vsel %vm3794, %v7210, %v6714
      %v7244 = vsel %vm3794, %v7212, %v6716
      %v7246 = vsel %vm3794, %v7214, %v6718
      %v7248 = vsel %vm3794, %v7216, %v6720
      %v7250 = vsel %vm3794, %v7218, %v6722
      %v7252 = vsel %vm3794, %v7220, %v6724
      %v7254 = vsel %vm3794, %v7222, %v6726
      %v7256 = vsel %vm3794, %v7224, %v6728
      %v7258 = vsel %vm3794, %v7226, %v6730
      %v7260 = vsel %vm3794, %v7228, %v6732
      %v7262 = vsel %vm3794, %v7230, %v6734
      %v7264 = vsel %vm3794, %v7232, %v6736
      %v7266 = vsel %vm3794, %v7234, %v6738
      %v7268 = vsel %vm3794, %v7236, %v6740
      %v7270 = vsel %vm3794, %v7238, %v6742
      %v7272 = vsel %vm3794, %v7240, %v6744
      %v7274 = vsel %vm3860, %v7242, %v6794
      %v7276 = vsel %vm3860, %v7244, %v6796
      %v7278 = vsel %vm3860, %v7246, %v6798
      %v7280 = vsel %vm3860, %v7248, %v6800
      %v7282 = vsel %vm3860, %v7250, %v6802
      %v7284 = vsel %vm3860, %v7252, %v6804
      %v7286 = vsel %vm3860, %v7254, %v6806
      %v7288 = vsel %vm3860, %v7256, %v6808
      %v7290 = vsel %vm3860, %v7258, %v6810
      %v7292 = vsel %vm3860, %v7260, %v6812
      %v7294 = vsel %vm3860, %v7262, %v6814
      %v7296 = vsel %vm3860, %v7264, %v6816
      %v7298 = vsel %vm3860, %v7266, %v6818
      %v7300 = vsel %vm3860, %v7268, %v6820
      %v7302 = vsel %vm3860, %v7270, %v6822
      %v7304 = vsel %vm3860, %v7272, %v6824
      %vm7305 = vcmask 326656
      %v7307 = vsel %vm7305, %v7274, %v6874
      %v7309 = vsel %vm7305, %v7276, %v6876
      %v7311 = vsel %vm7305, %v7278, %v6878
      %v7313 = vsel %vm7305, %v7280, %v6880
      %v7315 = vsel %vm7305, %v7282, %v6882
      %v7317 = vsel %vm7305, %v7284, %v6884
      %v7319 = vsel %vm7305, %v7286, %v6886
      %v7321 = vsel %vm7305, %v7288, %v6888
      %v7323 = vsel %vm7305, %v7290, %v6890
      %v7325 = vsel %vm7305, %v7292, %v6892
      %v7327 = vsel %vm7305, %v7294, %v6894
      %v7329 = vsel %vm7305, %v7296, %v6896
      %v7331 = vsel %vm7305, %v7298, %v6898
      %v7333 = vsel %vm7305, %v7300, %v6900
      %v7335 = vsel %vm7305, %v7302, %v6902
      %v7337 = vsel %vm7305, %v7304, %v6904
      %vm7338 = vcmask 392192
      %v7340 = vsel %vm7338, %v7307, %v6970
      %v7342 = vsel %vm7338, %v7309, %v6972
      %v7344 = vsel %vm7338, %v7311, %v6974
      %v7346 = vsel %vm7338, %v7313, %v6976
      %v7348 = vsel %vm7338, %v7315, %v6978
      %v7350 = vsel %vm7338, %v7317, %v6980
      %v7352 = vsel %vm7338, %v7319, %v6982
      %v7354 = vsel %vm7338, %v7321, %v6984
      %v7356 = vsel %vm7338, %v7323, %v6986
      %v7358 = vsel %vm7338, %v7325, %v6988
      %v7360 = vsel %vm7338, %v7327, %v6990
      %v7362 = vsel %vm7338, %v7329, %v6992
      %v7364 = vsel %vm7338, %v7331, %v6994
      %v7366 = vsel %vm7338, %v7333, %v6996
      %v7368 = vsel %vm7338, %v7335, %v6998
      %v7370 = vsel %vm7338, %v7337, %v7000
      %vm7371 = vcmask 457728
      %v7373 = vsel %vm7371, %v7340, %v7050
      %v7375 = vsel %vm7371, %v7342, %v7052
      %v7377 = vsel %vm7371, %v7344, %v7054
      %v7379 = vsel %vm7371, %v7346, %v7056
      %v7381 = vsel %vm7371, %v7348, %v7058
      %v7383 = vsel %vm7371, %v7350, %v7060
      %v7385 = vsel %vm7371, %v7352, %v7062
      %v7387 = vsel %vm7371, %v7354, %v7064
      %v7389 = vsel %vm7371, %v7356, %v7066
      %v7391 = vsel %vm7371, %v7358, %v7068
      %v7393 = vsel %vm7371, %v7360, %v7070
      %v7395 = vsel %vm7371, %v7362, %v7072
      %v7397 = vsel %vm7371, %v7364, %v7074
      %v7399 = vsel %vm7371, %v7366, %v7076
      %v7401 = vsel %vm7371, %v7368, %v7078
      %v7403 = vsel %vm7371, %v7370, %v7080
      %vm7404 = vcmask 523264
      %v7406 = vsel %vm7404, %v7373, %v7130
      %v7408 = vsel %vm7404, %v7375, %v7132
      %v7410 = vsel %vm7404, %v7377, %v7134
      %v7412 = vsel %vm7404, %v7379, %v7136
      %v7414 = vsel %vm7404, %v7381, %v7138
      %v7416 = vsel %vm7404, %v7383, %v7140
      %v7418 = vsel %vm7404, %v7385, %v7142
      %v7420 = vsel %vm7404, %v7387, %v7144
      %v7422 = vsel %vm7404, %v7389, %v7146
      %v7424 = vsel %vm7404, %v7391, %v7148
      %v7426 = vsel %vm7404, %v7393, %v7150
      %v7428 = vsel %vm7404, %v7395, %v7152
      %v7430 = vsel %vm7404, %v7397, %v7154
      %v7432 = vsel %vm7404, %v7399, %v7156
      %v7434 = vsel %vm7404, %v7401, %v7158
      %v7436 = vsel %vm7404, %v7403, %v7160
      %v7437 = vld [vmem:[%s5] sm:$0xf]
      %v7438 = vld [vmem:[%s5 + $0x4] sm:$0xf]
      %v7439 = vld [vmem:[%s5 + $0x8] sm:$0xf]
      %v7440 = vld [vmem:[%s5 + $0xc] sm:$0xf]
      %v7441 = vld [vmem:[%s5 + $0x10] sm:$0xf]
      %v7442 = vld [vmem:[%s5 + $0x14] sm:$0xf]
      %v7443 = vld [vmem:[%s5 + $0x18] sm:$0xf]
      %v7444 = vld [vmem:[%s5 + $0x1c] sm:$0xf]
      %v7445 = vld [vmem:[%s5 + $0x20] sm:$0xf]
      %v7455 = vunpack.c.l.b16 %v7437
      %v7456 = vunpack.c.l.b16 %v7438
      %v7457 = vunpack.c.l.b16 %v7439
      %v7458 = vunpack.c.l.b16 %v7440
      %v7459 = vunpack.c.l.b16 %v7441
      %v7460 = vunpack.c.l.b16 %v7442
      %v7461 = vunpack.c.l.b16 %v7443
      %v7462 = vunpack.c.l.b16 %v7444
      %v7463 = vunpack.c.l.b16 %v7445
      %v7464 = vpack.c.b16 %v7456, %v7455
      %v7465 = vpack.c.b16 %v7458, %v7457
      %v7466 = vpack.c.b16 %v7460, %v7459
      %v7467 = vpack.c.b16 %v7462, %v7461
      %v7468 = vpack.c.b16 %v7463, %v7463
      %vm7473 = vcmask 588800
      %v7474 = vsel %vm7473, %v7406, 0
      %v7476 = vsel %vm7473, %v7408, 0
      %v7478 = vsel %vm7473, %v7410, 0
      %v7480 = vsel %vm7473, %v7412, 0
      %v7482 = vsel %vm7473, %v7414, 0
      %v7484 = vsel %vm7473, %v7416, 0
      %v7486 = vsel %vm7473, %v7418, 0
      %v7488 = vsel %vm7473, %v7420, 0
      %v7490 = vsel %vm7473, %v7422, 0
      %v7492 = vsel %vm7473, %v7424, 0
      %v7494 = vsel %vm7473, %v7426, 0
      %v7496 = vsel %vm7473, %v7428, 0
      %v7498 = vsel %vm7473, %v7430, 0
      %v7500 = vsel %vm7473, %v7432, 0
      %v7502 = vsel %vm7473, %v7434, 0
      %v7504 = vsel %vm7473, %v7436, 0
      %vm7506 = vcmask 1043456
      %v7508 = vsel %vm7506, %v7468, 0
      %7510 = vmatpush.bf16.msra.mxu0 0
      %7511 = vmatpush.bf16.msra.mxu0 0
      %7512 = vmatpush.bf16.msra.mxu0 0
      %7513 = vmatpush.bf16.msra.mxu0 %v7508
      %7514 = vmatpush.bf16.msra.mxu0 %v7467
      %7515 = vmatpush.bf16.msra.mxu0 %v7466
      %7516 = vmatpush.bf16.msra.mxu0 %v7465
      %7517 = vmatpush.bf16.msra.mxu0 %v7464
      %7518 = vmatmul.bf16.gmra.mxu0 %v7474
      %v7519 = vpop.f32.mrf.mxu0
      %v7520 = vadd.f32 0.0, %v7519
      %v7521 = vpop.f32.mrf.mxu0
      %v7522 = vadd.f32 0.0, %v7521
      %7523 = vmatmul.bf16.gmra.mxu0 %v7476
      %v7524 = vpop.f32.mrf.mxu0
      %v7525 = vadd.f32 0.0, %v7524
      %v7526 = vpop.f32.mrf.mxu0
      %v7527 = vadd.f32 0.0, %v7526
      %7528 = vmatmul.bf16.gmra.mxu0 %v7478
      %v7529 = vpop.f32.mrf.mxu0
      %v7530 = vadd.f32 0.0, %v7529
      %v7531 = vpop.f32.mrf.mxu0
      %v7532 = vadd.f32 0.0, %v7531
      %7533 = vmatmul.bf16.gmra.mxu0 %v7480
      %v7534 = vpop.f32.mrf.mxu0
      %v7535 = vadd.f32 0.0, %v7534
      %v7536 = vpop.f32.mrf.mxu0
      %v7537 = vadd.f32 0.0, %v7536
      %7538 = vmatmul.bf16.gmra.mxu0 %v7482
      %v7539 = vpop.f32.mrf.mxu0
      %v7540 = vadd.f32 0.0, %v7539
      %v7541 = vpop.f32.mrf.mxu0
      %v7542 = vadd.f32 0.0, %v7541
      %7543 = vmatmul.bf16.gmra.mxu0 %v7484
      %v7544 = vpop.f32.mrf.mxu0
      %v7545 = vadd.f32 0.0, %v7544
      %v7546 = vpop.f32.mrf.mxu0
      %v7547 = vadd.f32 0.0, %v7546
      %7548 = vmatmul.bf16.gmra.mxu0 %v7486
      %v7549 = vpop.f32.mrf.mxu0
      %v7550 = vadd.f32 0.0, %v7549
      %v7551 = vpop.f32.mrf.mxu0
      %v7552 = vadd.f32 0.0, %v7551
      %7553 = vmatmul.bf16.gmra.mxu0 %v7488
      %v7554 = vpop.f32.mrf.mxu0
      %v7555 = vadd.f32 0.0, %v7554
      %v7556 = vpop.f32.mrf.mxu0
      %v7557 = vadd.f32 0.0, %v7556
      %7558 = vmatmul.bf16.gmra.mxu0 %v7490
      %v7559 = vpop.f32.mrf.mxu0
      %v7560 = vadd.f32 0.0, %v7559
      %v7561 = vpop.f32.mrf.mxu0
      %v7562 = vadd.f32 0.0, %v7561
      %7563 = vmatmul.bf16.gmra.mxu0 %v7492
      %v7564 = vpop.f32.mrf.mxu0
      %v7565 = vadd.f32 0.0, %v7564
      %v7566 = vpop.f32.mrf.mxu0
      %v7567 = vadd.f32 0.0, %v7566
      %7568 = vmatmul.bf16.gmra.mxu0 %v7494
      %v7569 = vpop.f32.mrf.mxu0
      %v7570 = vadd.f32 0.0, %v7569
      %v7571 = vpop.f32.mrf.mxu0
      %v7572 = vadd.f32 0.0, %v7571
      %7573 = vmatmul.bf16.gmra.mxu0 %v7496
      %v7574 = vpop.f32.mrf.mxu0
      %v7575 = vadd.f32 0.0, %v7574
      %v7576 = vpop.f32.mrf.mxu0
      %v7577 = vadd.f32 0.0, %v7576
      %7578 = vmatmul.bf16.gmra.mxu0 %v7498
      %v7579 = vpop.f32.mrf.mxu0
      %v7580 = vadd.f32 0.0, %v7579
      %v7581 = vpop.f32.mrf.mxu0
      %v7582 = vadd.f32 0.0, %v7581
      %7583 = vmatmul.bf16.gmra.mxu0 %v7500
      %v7584 = vpop.f32.mrf.mxu0
      %v7585 = vadd.f32 0.0, %v7584
      %v7586 = vpop.f32.mrf.mxu0
      %v7587 = vadd.f32 0.0, %v7586
      %7588 = vmatmul.bf16.gmra.mxu0 %v7502
      %v7589 = vpop.f32.mrf.mxu0
      %v7590 = vadd.f32 0.0, %v7589
      %v7591 = vpop.f32.mrf.mxu0
      %v7592 = vadd.f32 0.0, %v7591
      %7593 = vmatmul.bf16.gmra.mxu0 %v7504
      %v7594 = vpop.f32.mrf.mxu0
      %v7595 = vadd.f32 0.0, %v7594
      %v7596 = vpop.f32.mrf.mxu0
      %v7597 = vadd.f32 0.0, %v7596
      %7598 = vdwg.mxu0
      %v7599 = vld [vmem:[%s9] sm:$0xff]
      %v7600 = vld [vmem:[%s9 + $0x8] sm:$0xff]
      %v7601 = vld [vmem:[%s9 + $0x10] sm:$0xff]
      %v7602 = vld [vmem:[%s9 + $0x18] sm:$0xff]
      %v7603 = vld [vmem:[%s9 + $0x20] sm:$0xff]
      %v7604 = vld [vmem:[%s9 + $0x28] sm:$0xff]
      %v7605 = vld [vmem:[%s9 + $0x30] sm:$0xff]
      %v7606 = vld [vmem:[%s9 + $0x38] sm:$0xff]
      %v7607 = vpack.c.bf16 %v7522, %v7520
      %v7608 = vpack.c.bf16 %v7527, %v7525
      %v7609 = vpack.c.bf16 %v7532, %v7530
      %v7610 = vpack.c.bf16 %v7537, %v7535
      %v7611 = vpack.c.bf16 %v7542, %v7540
      %v7612 = vpack.c.bf16 %v7547, %v7545
      %v7613 = vpack.c.bf16 %v7552, %v7550
      %v7614 = vpack.c.bf16 %v7557, %v7555
      %v7615 = vpack.c.bf16 %v7562, %v7560
      %v7616 = vpack.c.bf16 %v7567, %v7565
      %v7617 = vpack.c.bf16 %v7572, %v7570
      %v7618 = vpack.c.bf16 %v7577, %v7575
      %v7619 = vpack.c.bf16 %v7582, %v7580
      %v7620 = vpack.c.bf16 %v7587, %v7585
      %v7621 = vpack.c.bf16 %v7592, %v7590
      %v7622 = vpack.c.bf16 %v7597, %v7595
      %v7623 = vld [vmem:[%s374] sm:$0xf]
      %v7624 = vld [vmem:[%s374 + $0x4] sm:$0xf]
      %v7625 = vld [vmem:[%s374 + $0x8] sm:$0xf]
      %v7626 = vld [vmem:[%s374 + $0xc] sm:$0xf]
      %v7627 = vld [vmem:[%s374 + $0x10] sm:$0xf]
      %v7628 = vld [vmem:[%s374 + $0x14] sm:$0xf]
      %v7629 = vld [vmem:[%s374 + $0x18] sm:$0xf]
      %v7630 = vld [vmem:[%s374 + $0x1c] sm:$0xf]
      %v7631 = vld [vmem:[%s7] sm:$0x3]
      %v7640 = vunpack.c.l.b16 %v7623
      %v7641 = vunpack.c.l.b16 %v7624
      %v7642 = vunpack.c.l.b16 %v7625
      %v7643 = vunpack.c.l.b16 %v7626
      %v7644 = vunpack.c.l.b16 %v7627
      %v7645 = vunpack.c.l.b16 %v7628
      %v7646 = vunpack.c.l.b16 %v7629
      %v7647 = vunpack.c.l.b16 %v7630
      %v7648 = vpack.c.b16 %v7641, %v7640
      %v7649 = vpack.c.b16 %v7643, %v7642
      %v7650 = vpack.c.b16 %v7645, %v7644
      %v7651 = vpack.c.b16 %v7647, %v7646
      %v7653 = vsel %vm3613, %v7648, 0
      %v7656 = vsel %vm3613, %v7649, 0
      %v7659 = vsel %vm3613, %v7650, 0
      %v7662 = vsel %vm3613, %v7651, 0
      %v7665 = vsel %vm3950, %v7631, 0
      %7667 = vmatpush.bf16.msra.mxu0 0
      %7668 = vmatpush.bf16.msra.mxu0 0
      %7669 = vmatpush.bf16.msra.mxu0 0
      %7670 = vmatpush.bf16.msra.mxu0 0
      %7671 = vmatpush.bf16.msra.mxu0 0
      %7672 = vmatpush.bf16.msra.mxu0 0
      %7673 = vmatpush.bf16.msra.mxu0 0
      %7674 = vmatpush.bf16.msra.mxu0 %v7665
      %7675 = vmatmul.bf16.gmra.mxu0 %v7653
      %v7676 = vpop.f32.mrf.mxu0
      %v7677 = vadd.f32 0.0, %v7676
      %v7678 = vpop.f32.mrf.mxu0
      %v7679 = vadd.f32 0.0, %v7678
      %7680 = vmatmul.bf16.gmra.mxu0 %v7656
      %v7681 = vpop.f32.mrf.mxu0
      %v7682 = vadd.f32 0.0, %v7681
      %v7683 = vpop.f32.mrf.mxu0
      %v7684 = vadd.f32 0.0, %v7683
      %7685 = vmatmul.bf16.gmra.mxu0 %v7659
      %v7686 = vpop.f32.mrf.mxu0
      %v7687 = vadd.f32 0.0, %v7686
      %v7688 = vpop.f32.mrf.mxu0
      %v7689 = vadd.f32 0.0, %v7688
      %7690 = vmatmul.bf16.gmra.mxu0 %v7662
      %v7691 = vpop.f32.mrf.mxu0
      %v7692 = vadd.f32 0.0, %v7691
      %v7693 = vpop.f32.mrf.mxu0
      %v7694 = vadd.f32 0.0, %v7693
      %7695 = vdwg.mxu0
      %v7704 = vunpack.c.l.b16 %v7599
      %v7705 = vunpack.c.h.b16 %v7599
      %v7706 = vunpack.c.l.b16 %v7600
      %v7707 = vunpack.c.h.b16 %v7600
      %v7708 = vunpack.c.l.b16 %v7601
      %v7709 = vunpack.c.h.b16 %v7601
      %v7710 = vunpack.c.l.b16 %v7602
      %v7711 = vunpack.c.h.b16 %v7602
      %v7712 = vunpack.c.l.b16 %v7603
      %v7713 = vunpack.c.h.b16 %v7603
      %v7714 = vunpack.c.l.b16 %v7604
      %v7715 = vunpack.c.h.b16 %v7604
      %v7716 = vunpack.c.l.b16 %v7605
      %v7717 = vunpack.c.h.b16 %v7605
      %v7718 = vunpack.c.l.b16 %v7606
      %v7719 = vunpack.c.h.b16 %v7606
      %v7720 = vpack.c.b16 %v7706, %v7704
      %v7721 = vpack.c.b16 %v7707, %v7705
      %v7722 = vpack.c.b16 %v7710, %v7708
      %v7723 = vpack.c.b16 %v7711, %v7709
      %v7724 = vpack.c.b16 %v7714, %v7712
      %v7725 = vpack.c.b16 %v7715, %v7713
      %v7726 = vpack.c.b16 %v7718, %v7716
      %v7727 = vpack.c.b16 %v7719, %v7717
      %7736 = vmatpush.bf16.msra.mxu0 %v7614
      %7737 = vmatpush.bf16.msra.mxu0 %v7613
      %7738 = vmatpush.bf16.msra.mxu0 %v7612
      %7739 = vmatpush.bf16.msra.mxu0 %v7611
      %7740 = vmatpush.bf16.msra.mxu0 %v7610
      %7741 = vmatpush.bf16.msra.mxu0 %v7609
      %7742 = vmatpush.bf16.msra.mxu0 %v7608
      %7743 = vmatpush.bf16.msra.mxu0 %v7607
      %7744 = vmatmul.bf16.gmra.mxu0 %v7720
      %v7745 = vpop.f32.mrf.mxu0
      %v7746 = vadd.f32 %v7677, %v7745
      %v7747 = vpop.f32.mrf.mxu0
      %v7748 = vadd.f32 %v7679, %v7747
      %7749 = vmatmul.bf16.gmra.mxu0 %v7722
      %v7750 = vpop.f32.mrf.mxu0
      %v7751 = vadd.f32 %v7682, %v7750
      %v7752 = vpop.f32.mrf.mxu0
      %v7753 = vadd.f32 %v7684, %v7752
      %7754 = vmatmul.bf16.gmra.mxu0 %v7724
      %v7755 = vpop.f32.mrf.mxu0
      %v7756 = vadd.f32 %v7687, %v7755
      %v7757 = vpop.f32.mrf.mxu0
      %v7758 = vadd.f32 %v7689, %v7757
      %7759 = vmatmul.bf16.gmra.mxu0 %v7726
      %v7760 = vpop.f32.mrf.mxu0
      %v7761 = vadd.f32 %v7692, %v7760
      %v7762 = vpop.f32.mrf.mxu0
      %v7763 = vadd.f32 %v7694, %v7762
      %7764 = vdwg.mxu0
      %7765 = vmatpush.bf16.msra.mxu0 %v7622
      %7766 = vmatpush.bf16.msra.mxu0 %v7621
      %7767 = vmatpush.bf16.msra.mxu0 %v7620
      %7768 = vmatpush.bf16.msra.mxu0 %v7619
      %7769 = vmatpush.bf16.msra.mxu0 %v7618
      %7770 = vmatpush.bf16.msra.mxu0 %v7617
      %7771 = vmatpush.bf16.msra.mxu0 %v7616
      %7772 = vmatpush.bf16.msra.mxu0 %v7615
      %7773 = vmatmul.bf16.gmra.mxu0 %v7721
      %v7774 = vpop.f32.mrf.mxu0
      %v7775 = vadd.f32 %v7746, %v7774
      %v7776 = vpop.f32.mrf.mxu0
      %v7777 = vadd.f32 %v7748, %v7776
      %7778 = vmatmul.bf16.gmra.mxu0 %v7723
      %v7779 = vpop.f32.mrf.mxu0
      %v7780 = vadd.f32 %v7751, %v7779
      %v7781 = vpop.f32.mrf.mxu0
      %v7782 = vadd.f32 %v7753, %v7781
      %7783 = vmatmul.bf16.gmra.mxu0 %v7725
      %v7784 = vpop.f32.mrf.mxu0
      %v7785 = vadd.f32 %v7756, %v7784
      %v7786 = vpop.f32.mrf.mxu0
      %v7787 = vadd.f32 %v7758, %v7786
      %7788 = vmatmul.bf16.gmra.mxu0 %v7727
      %v7789 = vpop.f32.mrf.mxu0
      %v7790 = vadd.f32 %v7761, %v7789
      %v7791 = vpop.f32.mrf.mxu0
      %v7792 = vadd.f32 %v7763, %v7791
      %7793 = vdwg.mxu0
      %v7794 = vld [vmem:[%s6] sm:$0x1]
      %v7796 = vperm.slane %v7794, 0
      %v7798 = vadd.f32 %v7775, %v7796
      %v7799 = vadd.f32 %v7777, %v7796
      %v7800 = vadd.f32 %v7780, %v7796
      %v7801 = vadd.f32 %v7782, %v7796
      %v7802 = vadd.f32 %v7785, %v7796
      %v7803 = vadd.f32 %v7787, %v7796
      %v7804 = vadd.f32 %v7790, %v7796
      %v7805 = vadd.f32 %v7792, %v7796
      %7806 = vst.msk [vmem:[%s379] sm:$0xff] %vm3662, %v7798
      %7807 = vst.msk [vmem:[%s379 + $0x8] sm:$0xff] %vm3662, %v7799
      %7808 = vst.msk [vmem:[%s379 + $0x10] sm:$0xff] %vm3662, %v7800
      %7809 = vst.msk [vmem:[%s379 + $0x18] sm:$0xff] %vm3662, %v7801
      %7810 = vst.msk [vmem:[%s379 + $0x20] sm:$0xff] %vm3662, %v7802
      %7811 = vst.msk [vmem:[%s379 + $0x28] sm:$0xff] %vm3662, %v7803
      %7812 = vst.msk [vmem:[%s379 + $0x30] sm:$0xff] %vm3662, %v7804
      %7813 = vst.msk [vmem:[%s379 + $0x38] sm:$0xff] %vm3662, %v7805
      %p7814 = scmp.lt.s32.totalorder %s21, 1
      %s7815 = scalar_select %p7814, %s21, 1
      %s7816 = smul.addr %s7815, 8
      %s7817 = smul.addr %s7816, 8
      %s7818 = scalar_lea.vmem %s10, %s7817
      // Predicated region
      $region61: #{tpu_custom_call.1} parent=59 // pred_check
        %p7819 = pneg %p259
      $region62: #{tpu_custom_call.1} parent=59 // pred_check_branch
        %7821 = sbr.rel (%p7819) target = $region64
      $region63: #{tpu_custom_call.1} parent=59 // pred_region
        _
      $region64: #{tpu_custom_call.1} parent=59 // pred_fallthru
        _
    $region60: #{tpu_custom_call.1} parent=5 // pred_fallthru
      _
    %p7822 = scmp.le.s32.totalorder 2, %s16
    // Predicated region
    $region65: #{tpu_custom_call.1} parent=5 // pred_check
      %p7823 = pneg %p7822
    $region66: #{tpu_custom_call.1} parent=5 // pred_check_branch
      %7825 = sbr.rel (%p7823) target = $region68
    $region67: #{tpu_custom_call.1} parent=5 // pred_region
      %s7826 = ssub.s32 %s16, 2
      // Predicated region
      $region69: #{tpu_custom_call.1} parent=67 // pred_check
        %p7827 = pneg %p265
      $region70: #{tpu_custom_call.1} parent=67 // pred_check_branch
        %7829 = sbr.rel (%p7827) target = $region72
      $region71: #{tpu_custom_call.1} parent=67 // pred_region
        %p7830 = scmp.lt.s32.totalorder %s22, 1
        %s7831 = scalar_select %p7830, %s22, 1
        %s7832 = smul.addr %s7831, 8
        %s7833 = smul.addr %s7832, 8
        %s7834 = scalar_lea.vmem %s10, %s7833
      $region72: #{tpu_custom_call.1} parent=67 // pred_fallthru
        _
    $region68: #{tpu_custom_call.1} parent=5 // pred_fallthru
      _
  $region6: #{tpu_custom_call.1} parent=0 // loop_footer
    %s20 = sadd.s32 1, %s16
  $region7: #{tpu_custom_call.1} parent=0 // loop_footer_branch
    %15 = sbr.rel target = $region3
  $region8: #{tpu_custom_call.1} parent=0 // loop_exit
    _

</llo_original>
